<compile_context>
chip_gen: v6e
topology: v6e:2x2x1
jax: 0.10.0
libtpu: 0.0.40
codegen_flags: <defaults>
</compile_context>

<pallas_src>
import functools

import jax
import jax.numpy as jnp
from jax.experimental import pallas as pl
from jax.experimental.pallas import tpu as pltpu


def _round_up(x, m):
    return (x + m - 1) // m * m


# ----------------------------------------------------------------------------
# Kernel 1: fused backbone-stand-in conv3x3 + bias + ReLU + global average pool.
# One grid step per image.  The conv is 9 shifted (TH*W, Cin) @ (Cin, Fp) MXU
# dots straight off the padded NHWC VMEM tile; the GAP sum is accumulated in the
# epilogue so the full feature map is never written to HBM.
# TODO(synk): the real backbone comes from `model_dict[backbone]` (torchvision
# resnet/densenet); it is replaced here by this single deterministic conv layer.
# ----------------------------------------------------------------------------
def conv_relu_gap_kernel(xp_ref, w_ref, b_ref, pooled_ref, *, H, W, TH):
    # xp_ref:     (1, H+2, W+2, Cin)  bf16  one zero-padded NHWC image
    # w_ref:      (9, Cin, Fp)        bf16  per-tap weights, lane-dense Fp
    # b_ref:      (1, Fp)             f32
    # pooled_ref: (1, 1, Fp)          f32   GAP(ReLU(conv(x) + b)) for this image
    Cin = xp_ref.shape[-1]
    Fp = w_ref.shape[-1]
    pooled_sum = jnp.zeros((1, Fp), jnp.float32)
    # Row-chunked accumulation keeps the (TH*W, Fp) f32 intermediate bounded in
    # VMEM regardless of spatial size (important on v7x's 64 MiB VMEM).
    for r0 in range(0, H, TH):
        acc = jnp.zeros((TH * W, Fp), jnp.float32)
        for t in range(9):                              # static unroll over the 3x3 taps
            di, dj = t // 3, t % 3
            tap = xp_ref[0, r0 + di:r0 + di + TH, dj:dj + W, :]
            acc += jnp.dot(tap.reshape(TH * W, Cin), w_ref[t],
                           preferred_element_type=jnp.float32)
        y = jnp.maximum(acc + b_ref[...], 0.0)          # bias + ReLU in f32
        pooled_sum = pooled_sum + jnp.sum(y, axis=0, keepdims=True)
    pooled_ref[...] = (pooled_sum * (1.0 / (H * W))).reshape(1, 1, Fp)


def conv_relu_gap(xp, w_taps, b_conv, *, H, W):
    """xp: (N, H+2, W+2, Cin) bf16; w_taps: (9, Cin, Fp) bf16; b_conv: (1, Fp) f32.
    Returns pooled features (N, 1, Fp) f32."""
    N, Hp2, Wp2, Cin = xp.shape
    Fp = w_taps.shape[-1]
    TH = 8 if H % 8 == 0 else H                         # in-kernel row-chunk size

    cost = pl.CostEstimate(
        flops=2 * N * H * W * 9 * Cin * Fp,
        transcendentals=0,
        bytes_accessed=xp.size * 2 + w_taps.size * 2 + (N + 1) * Fp * 4,
    )
    return pl.pallas_call(
        functools.partial(conv_relu_gap_kernel, H=H, W=W, TH=TH),
        out_shape=jax.ShapeDtypeStruct((N, 1, Fp), jnp.float32),
        grid=(N,),
        in_specs=[
            pl.BlockSpec((1, Hp2, Wp2, Cin), lambda n: (n, 0, 0, 0)),
            pl.BlockSpec((9, Cin, Fp), lambda n: (0, 0, 0)),
            pl.BlockSpec((1, Fp), lambda n: (0, 0)),
        ],
        out_specs=pl.BlockSpec((1, 1, Fp), lambda n: (n, 0, 0)),
        compiler_params=pltpu.CompilerParams(
            dimension_semantics=("parallel",),          # pipelined; megacore-sharded on v7x
            vmem_limit_bytes=32 * 1024 * 1024,
        ),
        cost_estimate=cost,
    )(xp, w_taps, b_conv)


# ----------------------------------------------------------------------------
# Kernel 2: Linear(num_features -> num_classes) on the pooled features.
# Tiled over the batch axis with the (Fp, Cp) weight resident; no sigmoid
# (matches CNN.forward).
# ----------------------------------------------------------------------------
def fc_kernel(p_ref, w_ref, b_ref, o_ref):
    o_ref[...] = (jnp.dot(p_ref[...], w_ref[...], preferred_element_type=jnp.float32)
                  + b_ref[...]).astype(o_ref.dtype)


def fc(pooled, w_fc, b_fc):
    """pooled: (N, Fp) f32; w_fc: (Fp, Cp) f32; b_fc: (1, Cp) f32 -> (N, Cp) f32."""
    N, Fp = pooled.shape
    Cp = w_fc.shape[-1]
    TN = min(N, 128) if N % 8 == 0 else N               # full batch for small/odd N
    cost = pl.CostEstimate(
        flops=2 * N * Fp * Cp,
        transcendentals=0,
        bytes_accessed=(N * Fp + Fp * Cp + Cp + N * Cp) * 4,
    )
    return pl.pallas_call(
        fc_kernel,
        out_shape=jax.ShapeDtypeStruct((N, Cp), jnp.float32),
        grid=(pl.cdiv(N, TN),),
        in_specs=[
            pl.BlockSpec((TN, Fp), lambda i: (i, 0)),
            pl.BlockSpec((Fp, Cp), lambda i: (0, 0)),
            pl.BlockSpec((1, Cp), lambda i: (0, 0)),
        ],
        out_specs=pl.BlockSpec((TN, Cp), lambda i: (i, 0)),
        compiler_params=pltpu.CompilerParams(
            dimension_semantics=("parallel",),
            vmem_limit_bytes=32 * 1024 * 1024,
        ),
        cost_estimate=cost,
    )(pooled, w_fc, b_fc)


# ----------------------------------------------------------------------------
# CNN.forward equivalent (returns logits, no sigmoid — same as the PyTorch code)
# ----------------------------------------------------------------------------
def cnn_forward(x, params):
    """x: (N, Cin, H, W) NCHW; returns (N, num_classes) logits."""
    N, Cin, H, W = x.shape
    F = params["conv_w"].shape[0]
    C = params["fc_w"].shape[0]
    Fp = _round_up(F, 128)          # lane-dense feature dim
    Cp = _round_up(C, 128)          # lane-dense class dim

    # Single NCHW -> NHWC relayout + spatial zero pad; bf16 MXU operands
    # (accumulation stays f32 inside the kernel).
    xp = jnp.pad(jnp.transpose(x, (0, 2, 3, 1)),
                 ((0, 0), (1, 1), (1, 1), (0, 0))).astype(jnp.bfloat16)

    # (F, Cin, 3, 3) -> (9, Cin, Fp): w_taps[di*3+dj, c, f] = conv_w[f, c, di, dj]
    w_taps = jnp.transpose(params["conv_w"], (2, 3, 1, 0)).reshape(9, Cin, F)
    w_taps = jnp.pad(w_taps, ((0, 0), (0, 0), (0, Fp - F))).astype(jnp.bfloat16)
    b_conv = jnp.pad(params["conv_b"], (0, Fp - F)).reshape(1, Fp).astype(jnp.float32)

    pooled = conv_relu_gap(xp, w_taps, b_conv, H=H, W=W)        # (N, 1, Fp)

    # PyTorch Linear stores (out, in): y = x @ W.T + b.  Zero padding keeps the
    # extra feature / class lanes exactly zero.
    w_fc = jnp.pad(params["fc_w"].T.astype(jnp.float32),
                   ((0, Fp - F), (0, Cp - C)))                  # (Fp, Cp)
    b_fc = jnp.pad(params["fc_b"].astype(jnp.float32), (0, Cp - C)).reshape(1, Cp)

    logits = fc(pooled.reshape(N, Fp), w_fc, b_fc)              # (N, Cp)
    return logits[:, :C]


if __name__ == "__main__":
    # small shapes consistent with the module
    N, Cin, H, W = 2, 4, 16, 16
    num_features = 32
    num_classes = 40

    key = jax.random.PRNGKey(0)
    k_x, k_cw, k_cb, k_fw, k_fb = jax.random.split(key, 5)

    x = jax.random.normal(k_x, (N, Cin, H, W), dtype=jnp.float32)
    params = {
        "conv_w": 0.1 * jax.random.normal(k_cw, (num_features, Cin, 3, 3), jnp.float32),
        "conv_b": 0.1 * jax.random.normal(k_cb, (num_features,), jnp.float32),
        "fc_w":   0.1 * jax.random.normal(k_fw, (num_classes, num_features), jnp.float32),
        "fc_b":   0.1 * jax.random.normal(k_fb, (num_classes,), jnp.float32),
    }

    out = jax.jit(cnn_forward)(x, params)
    jax.block_until_ready(out)
    assert out.shape == (N, num_classes), out.shape
    print("KERNEL_OK")
</pallas_src>

<mosaic_0001>
module attributes {stable_mosaic.version = 11 : i64} {
  func.func @conv_relu_gap_kernel(%arg0: i32, %arg1: memref<1x18x18x4xbf16, #tpu.memory_space<vmem>>, %arg2: memref<9x4x128xbf16, #tpu.memory_space<vmem>>, %arg3: memref<1x128xf32, #tpu.memory_space<vmem>>, %arg4: memref<1x1x128xf32, #tpu.memory_space<vmem>>) attributes {dimension_semantics = [#tpu.dimension_semantics<parallel>], iteration_bounds = array<i64: 2>, scalar_prefetch = 0 : i64, scratch_operands = 0 : i64, tpu.core_type = #tpu.core_type<tc>, window_params = [{transform_indices = @transform_0, window_bounds = array<i64: 1, 18, 18, 4>}, {pipeline_mode = #tpu.pipeline_mode<synchronous>, transform_indices = @transform_1, window_bounds = array<i64: 9, 4, 128>}, {pipeline_mode = #tpu.pipeline_mode<synchronous>, transform_indices = @transform_2, window_bounds = array<i64: 1, 128>}, {transform_indices = @transform_3, window_bounds = array<i64: 1, 1, 128>}]} {
    %cst = arith.constant 0.000000e+00 : f32
    %0 = vector.broadcast %cst : f32 to vector<1x128xf32>
    %cst_0 = arith.constant 0.000000e+00 : f32
    %1 = vector.broadcast %cst_0 : f32 to vector<128x128xf32>
    %c0 = arith.constant 0 : index
    %c0_1 = arith.constant 0 : index
    %c0_2 = arith.constant 0 : index
    %c0_3 = arith.constant 0 : index
    %2 = vector.load %arg1[%c0, %c0_1, %c0_2, %c0_3] : memref<1x18x18x4xbf16, #tpu.memory_space<vmem>>, vector<1x8x16x4xbf16>
    %3 = vector.shape_cast %2 : vector<1x8x16x4xbf16> to vector<8x16x4xbf16>
    %4 = vector.shape_cast %3 : vector<8x16x4xbf16> to vector<128x4xbf16>
    %c0_4 = arith.constant 0 : index
    %c0_5 = arith.constant 0 : index
    %c0_6 = arith.constant 0 : index
    %5 = vector.load %arg2[%c0_4, %c0_5, %c0_6] : memref<9x4x128xbf16, #tpu.memory_space<vmem>>, vector<1x4x128xbf16>
    %6 = vector.shape_cast %5 : vector<1x4x128xbf16> to vector<4x128xbf16>
    %cst_7 = arith.constant dense<0.000000e+00> : vector<128x128xf32>
    %7 = tpu.matmul %4, %6, %cst_7 {dimension_numbers = #tpu.dot_dimension_numbers<[1], [0], [0], [1], [0, 0, 1, 1], [], []>} : vector<128x4xbf16>, vector<4x128xbf16>, vector<128x128xf32> -> vector<128x128xf32>
    %8 = arith.addf %1, %7 : vector<128x128xf32>
    %c0_8 = arith.constant 0 : index
    %c0_9 = arith.constant 0 : index
    %c1 = arith.constant 1 : index
    %c0_10 = arith.constant 0 : index
    %9 = vector.load %arg1[%c0_8, %c0_9, %c1, %c0_10] : memref<1x18x18x4xbf16, #tpu.memory_space<vmem>>, vector<1x8x16x4xbf16>
    %10 = vector.shape_cast %9 : vector<1x8x16x4xbf16> to vector<8x16x4xbf16>
    %11 = vector.shape_cast %10 : vector<8x16x4xbf16> to vector<128x4xbf16>
    %c1_11 = arith.constant 1 : index
    %c0_12 = arith.constant 0 : index
    %c0_13 = arith.constant 0 : index
    %12 = vector.load %arg2[%c1_11, %c0_12, %c0_13] : memref<9x4x128xbf16, #tpu.memory_space<vmem>>, vector<1x4x128xbf16>
    %13 = vector.shape_cast %12 : vector<1x4x128xbf16> to vector<4x128xbf16>
    %cst_14 = arith.constant dense<0.000000e+00> : vector<128x128xf32>
    %14 = tpu.matmul %11, %13, %cst_14 {dimension_numbers = #tpu.dot_dimension_numbers<[1], [0], [0], [1], [0, 0, 1, 1], [], []>} : vector<128x4xbf16>, vector<4x128xbf16>, vector<128x128xf32> -> vector<128x128xf32>
    %15 = arith.addf %8, %14 : vector<128x128xf32>
    %c0_15 = arith.constant 0 : index
    %c0_16 = arith.constant 0 : index
    %c2 = arith.constant 2 : index
    %c0_17 = arith.constant 0 : index
    %16 = vector.load %arg1[%c0_15, %c0_16, %c2, %c0_17] : memref<1x18x18x4xbf16, #tpu.memory_space<vmem>>, vector<1x8x16x4xbf16>
    %17 = vector.shape_cast %16 : vector<1x8x16x4xbf16> to vector<8x16x4xbf16>
    %18 = vector.shape_cast %17 : vector<8x16x4xbf16> to vector<128x4xbf16>
    %c2_18 = arith.constant 2 : index
    %c0_19 = arith.constant 0 : index
    %c0_20 = arith.constant 0 : index
    %19 = vector.load %arg2[%c2_18, %c0_19, %c0_20] : memref<9x4x128xbf16, #tpu.memory_space<vmem>>, vector<1x4x128xbf16>
    %20 = vector.shape_cast %19 : vector<1x4x128xbf16> to vector<4x128xbf16>
    %cst_21 = arith.constant dense<0.000000e+00> : vector<128x128xf32>
    %21 = tpu.matmul %18, %20, %cst_21 {dimension_numbers = #tpu.dot_dimension_numbers<[1], [0], [0], [1], [0, 0, 1, 1], [], []>} : vector<128x4xbf16>, vector<4x128xbf16>, vector<128x128xf32> -> vector<128x128xf32>
    %22 = arith.addf %15, %21 : vector<128x128xf32>
    %c0_22 = arith.constant 0 : index
    %c1_23 = arith.constant 1 : index
    %c0_24 = arith.constant 0 : index
    %c0_25 = arith.constant 0 : index
    %23 = vector.load %arg1[%c0_22, %c1_23, %c0_24, %c0_25] : memref<1x18x18x4xbf16, #tpu.memory_space<vmem>>, vector<1x8x16x4xbf16>
    %24 = vector.shape_cast %23 : vector<1x8x16x4xbf16> to vector<8x16x4xbf16>
    %25 = vector.shape_cast %24 : vector<8x16x4xbf16> to vector<128x4xbf16>
    %c3 = arith.constant 3 : index
    %c0_26 = arith.constant 0 : index
    %c0_27 = arith.constant 0 : index
    %26 = vector.load %arg2[%c3, %c0_26, %c0_27] : memref<9x4x128xbf16, #tpu.memory_space<vmem>>, vector<1x4x128xbf16>
    %27 = vector.shape_cast %26 : vector<1x4x128xbf16> to vector<4x128xbf16>
    %cst_28 = arith.constant dense<0.000000e+00> : vector<128x128xf32>
    %28 = tpu.matmul %25, %27, %cst_28 {dimension_numbers = #tpu.dot_dimension_numbers<[1], [0], [0], [1], [0, 0, 1, 1], [], []>} : vector<128x4xbf16>, vector<4x128xbf16>, vector<128x128xf32> -> vector<128x128xf32>
    %29 = arith.addf %22, %28 : vector<128x128xf32>
    %c0_29 = arith.constant 0 : index
    %c1_30 = arith.constant 1 : index
    %c1_31 = arith.constant 1 : index
    %c0_32 = arith.constant 0 : index
    %30 = vector.load %arg1[%c0_29, %c1_30, %c1_31, %c0_32] : memref<1x18x18x4xbf16, #tpu.memory_space<vmem>>, vector<1x8x16x4xbf16>
    %31 = vector.shape_cast %30 : vector<1x8x16x4xbf16> to vector<8x16x4xbf16>
    %32 = vector.shape_cast %31 : vector<8x16x4xbf16> to vector<128x4xbf16>
    %c4 = arith.constant 4 : index
    %c0_33 = arith.constant 0 : index
    %c0_34 = arith.constant 0 : index
    %33 = vector.load %arg2[%c4, %c0_33, %c0_34] : memref<9x4x128xbf16, #tpu.memory_space<vmem>>, vector<1x4x128xbf16>
    %34 = vector.shape_cast %33 : vector<1x4x128xbf16> to vector<4x128xbf16>
    %cst_35 = arith.constant dense<0.000000e+00> : vector<128x128xf32>
    %35 = tpu.matmul %32, %34, %cst_35 {dimension_numbers = #tpu.dot_dimension_numbers<[1], [0], [0], [1], [0, 0, 1, 1], [], []>} : vector<128x4xbf16>, vector<4x128xbf16>, vector<128x128xf32> -> vector<128x128xf32>
    %36 = arith.addf %29, %35 : vector<128x128xf32>
    %c0_36 = arith.constant 0 : index
    %c1_37 = arith.constant 1 : index
    %c2_38 = arith.constant 2 : index
    %c0_39 = arith.constant 0 : index
    %37 = vector.load %arg1[%c0_36, %c1_37, %c2_38, %c0_39] : memref<1x18x18x4xbf16, #tpu.memory_space<vmem>>, vector<1x8x16x4xbf16>
    %38 = vector.shape_cast %37 : vector<1x8x16x4xbf16> to vector<8x16x4xbf16>
    %39 = vector.shape_cast %38 : vector<8x16x4xbf16> to vector<128x4xbf16>
    %c5 = arith.constant 5 : index
    %c0_40 = arith.constant 0 : index
    %c0_41 = arith.constant 0 : index
    %40 = vector.load %arg2[%c5, %c0_40, %c0_41] : memref<9x4x128xbf16, #tpu.memory_space<vmem>>, vector<1x4x128xbf16>
    %41 = vector.shape_cast %40 : vector<1x4x128xbf16> to vector<4x128xbf16>
    %cst_42 = arith.constant dense<0.000000e+00> : vector<128x128xf32>
    %42 = tpu.matmul %39, %41, %cst_42 {dimension_numbers = #tpu.dot_dimension_numbers<[1], [0], [0], [1], [0, 0, 1, 1], [], []>} : vector<128x4xbf16>, vector<4x128xbf16>, vector<128x128xf32> -> vector<128x128xf32>
    %43 = arith.addf %36, %42 : vector<128x128xf32>
    %c0_43 = arith.constant 0 : index
    %c2_44 = arith.constant 2 : index
    %c0_45 = arith.constant 0 : index
    %c0_46 = arith.constant 0 : index
    %44 = vector.load %arg1[%c0_43, %c2_44, %c0_45, %c0_46] : memref<1x18x18x4xbf16, #tpu.memory_space<vmem>>, vector<1x8x16x4xbf16>
    %45 = vector.shape_cast %44 : vector<1x8x16x4xbf16> to vector<8x16x4xbf16>
    %46 = vector.shape_cast %45 : vector<8x16x4xbf16> to vector<128x4xbf16>
    %c6 = arith.constant 6 : index
    %c0_47 = arith.constant 0 : index
    %c0_48 = arith.constant 0 : index
    %47 = vector.load %arg2[%c6, %c0_47, %c0_48] : memref<9x4x128xbf16, #tpu.memory_space<vmem>>, vector<1x4x128xbf16>
    %48 = vector.shape_cast %47 : vector<1x4x128xbf16> to vector<4x128xbf16>
    %cst_49 = arith.constant dense<0.000000e+00> : vector<128x128xf32>
    %49 = tpu.matmul %46, %48, %cst_49 {dimension_numbers = #tpu.dot_dimension_numbers<[1], [0], [0], [1], [0, 0, 1, 1], [], []>} : vector<128x4xbf16>, vector<4x128xbf16>, vector<128x128xf32> -> vector<128x128xf32>
    %50 = arith.addf %43, %49 : vector<128x128xf32>
    %c0_50 = arith.constant 0 : index
    %c2_51 = arith.constant 2 : index
    %c1_52 = arith.constant 1 : index
    %c0_53 = arith.constant 0 : index
    %51 = vector.load %arg1[%c0_50, %c2_51, %c1_52, %c0_53] : memref<1x18x18x4xbf16, #tpu.memory_space<vmem>>, vector<1x8x16x4xbf16>
    %52 = vector.shape_cast %51 : vector<1x8x16x4xbf16> to vector<8x16x4xbf16>
    %53 = vector.shape_cast %52 : vector<8x16x4xbf16> to vector<128x4xbf16>
    %c7 = arith.constant 7 : index
    %c0_54 = arith.constant 0 : index
    %c0_55 = arith.constant 0 : index
    %54 = vector.load %arg2[%c7, %c0_54, %c0_55] : memref<9x4x128xbf16, #tpu.memory_space<vmem>>, vector<1x4x128xbf16>
    %55 = vector.shape_cast %54 : vector<1x4x128xbf16> to vector<4x128xbf16>
    %cst_56 = arith.constant dense<0.000000e+00> : vector<128x128xf32>
    %56 = tpu.matmul %53, %55, %cst_56 {dimension_numbers = #tpu.dot_dimension_numbers<[1], [0], [0], [1], [0, 0, 1, 1], [], []>} : vector<128x4xbf16>, vector<4x128xbf16>, vector<128x128xf32> -> vector<128x128xf32>
    %57 = arith.addf %50, %56 : vector<128x128xf32>
    %c0_57 = arith.constant 0 : index
    %c2_58 = arith.constant 2 : index
    %c2_59 = arith.constant 2 : index
    %c0_60 = arith.constant 0 : index
    %58 = vector.load %arg1[%c0_57, %c2_58, %c2_59, %c0_60] : memref<1x18x18x4xbf16, #tpu.memory_space<vmem>>, vector<1x8x16x4xbf16>
    %59 = vector.shape_cast %58 : vector<1x8x16x4xbf16> to vector<8x16x4xbf16>
    %60 = vector.shape_cast %59 : vector<8x16x4xbf16> to vector<128x4xbf16>
    %c8 = arith.constant 8 : index
    %c0_61 = arith.constant 0 : index
    %c0_62 = arith.constant 0 : index
    %61 = vector.load %arg2[%c8, %c0_61, %c0_62] : memref<9x4x128xbf16, #tpu.memory_space<vmem>>, vector<1x4x128xbf16>
    %62 = vector.shape_cast %61 : vector<1x4x128xbf16> to vector<4x128xbf16>
    %cst_63 = arith.constant dense<0.000000e+00> : vector<128x128xf32>
    %63 = tpu.matmul %60, %62, %cst_63 {dimension_numbers = #tpu.dot_dimension_numbers<[1], [0], [0], [1], [0, 0, 1, 1], [], []>} : vector<128x4xbf16>, vector<4x128xbf16>, vector<128x128xf32> -> vector<128x128xf32>
    %64 = arith.addf %57, %63 : vector<128x128xf32>
    %c0_64 = arith.constant 0 : index
    %c0_65 = arith.constant 0 : index
    %65 = vector.load %arg3[%c0_64, %c0_65] : memref<1x128xf32, #tpu.memory_space<vmem>>, vector<1x128xf32>
    %66 = vector.broadcast %65 : vector<1x128xf32> to vector<128x128xf32>
    %67 = arith.addf %64, %66 : vector<128x128xf32>
    %cst_66 = arith.constant 0.000000e+00 : f32
    %68 = vector.broadcast %cst_66 : f32 to vector<128x128xf32>
    %69 = arith.maximumf %67, %68 : vector<128x128xf32>
    %cst_67 = arith.constant dense<0.000000e+00> : vector<128xf32>
    %70 = vector.multi_reduction <add>, %69, %cst_67 [0] : vector<128x128xf32> to vector<128xf32>
    %71 = vector.shape_cast %70 : vector<128xf32> to vector<1x128xf32>
    %72 = arith.addf %0, %71 : vector<1x128xf32>
    %cst_68 = arith.constant 0.000000e+00 : f32
    %73 = vector.broadcast %cst_68 : f32 to vector<128x128xf32>
    %c0_69 = arith.constant 0 : index
    %c8_70 = arith.constant 8 : index
    %c0_71 = arith.constant 0 : index
    %c0_72 = arith.constant 0 : index
    %74 = vector.load %arg1[%c0_69, %c8_70, %c0_71, %c0_72] : memref<1x18x18x4xbf16, #tpu.memory_space<vmem>>, vector<1x8x16x4xbf16>
    %75 = vector.shape_cast %74 : vector<1x8x16x4xbf16> to vector<8x16x4xbf16>
    %76 = vector.shape_cast %75 : vector<8x16x4xbf16> to vector<128x4xbf16>
    %c0_73 = arith.constant 0 : index
    %c0_74 = arith.constant 0 : index
    %c0_75 = arith.constant 0 : index
    %77 = vector.load %arg2[%c0_73, %c0_74, %c0_75] : memref<9x4x128xbf16, #tpu.memory_space<vmem>>, vector<1x4x128xbf16>
    %78 = vector.shape_cast %77 : vector<1x4x128xbf16> to vector<4x128xbf16>
    %cst_76 = arith.constant dense<0.000000e+00> : vector<128x128xf32>
    %79 = tpu.matmul %76, %78, %cst_76 {dimension_numbers = #tpu.dot_dimension_numbers<[1], [0], [0], [1], [0, 0, 1, 1], [], []>} : vector<128x4xbf16>, vector<4x128xbf16>, vector<128x128xf32> -> vector<128x128xf32>
    %80 = arith.addf %73, %79 : vector<128x128xf32>
    %c0_77 = arith.constant 0 : index
    %c8_78 = arith.constant 8 : index
    %c1_79 = arith.constant 1 : index
    %c0_80 = arith.constant 0 : index
    %81 = vector.load %arg1[%c0_77, %c8_78, %c1_79, %c0_80] : memref<1x18x18x4xbf16, #tpu.memory_space<vmem>>, vector<1x8x16x4xbf16>
    %82 = vector.shape_cast %81 : vector<1x8x16x4xbf16> to vector<8x16x4xbf16>
    %83 = vector.shape_cast %82 : vector<8x16x4xbf16> to vector<128x4xbf16>
    %c1_81 = arith.constant 1 : index
    %c0_82 = arith.constant 0 : index
    %c0_83 = arith.constant 0 : index
    %84 = vector.load %arg2[%c1_81, %c0_82, %c0_83] : memref<9x4x128xbf16, #tpu.memory_space<vmem>>, vector<1x4x128xbf16>
    %85 = vector.shape_cast %84 : vector<1x4x128xbf16> to vector<4x128xbf16>
    %cst_84 = arith.constant dense<0.000000e+00> : vector<128x128xf32>
    %86 = tpu.matmul %83, %85, %cst_84 {dimension_numbers = #tpu.dot_dimension_numbers<[1], [0], [0], [1], [0, 0, 1, 1], [], []>} : vector<128x4xbf16>, vector<4x128xbf16>, vector<128x128xf32> -> vector<128x128xf32>
    %87 = arith.addf %80, %86 : vector<128x128xf32>
    %c0_85 = arith.constant 0 : index
    %c8_86 = arith.constant 8 : index
    %c2_87 = arith.constant 2 : index
    %c0_88 = arith.constant 0 : index
    %88 = vector.load %arg1[%c0_85, %c8_86, %c2_87, %c0_88] : memref<1x18x18x4xbf16, #tpu.memory_space<vmem>>, vector<1x8x16x4xbf16>
    %89 = vector.shape_cast %88 : vector<1x8x16x4xbf16> to vector<8x16x4xbf16>
    %90 = vector.shape_cast %89 : vector<8x16x4xbf16> to vector<128x4xbf16>
    %c2_89 = arith.constant 2 : index
    %c0_90 = arith.constant 0 : index
    %c0_91 = arith.constant 0 : index
    %91 = vector.load %arg2[%c2_89, %c0_90, %c0_91] : memref<9x4x128xbf16, #tpu.memory_space<vmem>>, vector<1x4x128xbf16>
    %92 = vector.shape_cast %91 : vector<1x4x128xbf16> to vector<4x128xbf16>
    %cst_92 = arith.constant dense<0.000000e+00> : vector<128x128xf32>
    %93 = tpu.matmul %90, %92, %cst_92 {dimension_numbers = #tpu.dot_dimension_numbers<[1], [0], [0], [1], [0, 0, 1, 1], [], []>} : vector<128x4xbf16>, vector<4x128xbf16>, vector<128x128xf32> -> vector<128x128xf32>
    %94 = arith.addf %87, %93 : vector<128x128xf32>
    %c0_93 = arith.constant 0 : index
    %c9 = arith.constant 9 : index
    %c0_94 = arith.constant 0 : index
    %c0_95 = arith.constant 0 : index
    %95 = vector.load %arg1[%c0_93, %c9, %c0_94, %c0_95] : memref<1x18x18x4xbf16, #tpu.memory_space<vmem>>, vector<1x8x16x4xbf16>
    %96 = vector.shape_cast %95 : vector<1x8x16x4xbf16> to vector<8x16x4xbf16>
    %97 = vector.shape_cast %96 : vector<8x16x4xbf16> to vector<128x4xbf16>
    %c3_96 = arith.constant 3 : index
    %c0_97 = arith.constant 0 : index
    %c0_98 = arith.constant 0 : index
    %98 = vector.load %arg2[%c3_96, %c0_97, %c0_98] : memref<9x4x128xbf16, #tpu.memory_space<vmem>>, vector<1x4x128xbf16>
    %99 = vector.shape_cast %98 : vector<1x4x128xbf16> to vector<4x128xbf16>
    %cst_99 = arith.constant dense<0.000000e+00> : vector<128x128xf32>
    %100 = tpu.matmul %97, %99, %cst_99 {dimension_numbers = #tpu.dot_dimension_numbers<[1], [0], [0], [1], [0, 0, 1, 1], [], []>} : vector<128x4xbf16>, vector<4x128xbf16>, vector<128x128xf32> -> vector<128x128xf32>
    %101 = arith.addf %94, %100 : vector<128x128xf32>
    %c0_100 = arith.constant 0 : index
    %c9_101 = arith.constant 9 : index
    %c1_102 = arith.constant 1 : index
    %c0_103 = arith.constant 0 : index
    %102 = vector.load %arg1[%c0_100, %c9_101, %c1_102, %c0_103] : memref<1x18x18x4xbf16, #tpu.memory_space<vmem>>, vector<1x8x16x4xbf16>
    %103 = vector.shape_cast %102 : vector<1x8x16x4xbf16> to vector<8x16x4xbf16>
    %104 = vector.shape_cast %103 : vector<8x16x4xbf16> to vector<128x4xbf16>
    %c4_104 = arith.constant 4 : index
    %c0_105 = arith.constant 0 : index
    %c0_106 = arith.constant 0 : index
    %105 = vector.load %arg2[%c4_104, %c0_105, %c0_106] : memref<9x4x128xbf16, #tpu.memory_space<vmem>>, vector<1x4x128xbf16>
    %106 = vector.shape_cast %105 : vector<1x4x128xbf16> to vector<4x128xbf16>
    %cst_107 = arith.constant dense<0.000000e+00> : vector<128x128xf32>
    %107 = tpu.matmul %104, %106, %cst_107 {dimension_numbers = #tpu.dot_dimension_numbers<[1], [0], [0], [1], [0, 0, 1, 1], [], []>} : vector<128x4xbf16>, vector<4x128xbf16>, vector<128x128xf32> -> vector<128x128xf32>
    %108 = arith.addf %101, %107 : vector<128x128xf32>
    %c0_108 = arith.constant 0 : index
    %c9_109 = arith.constant 9 : index
    %c2_110 = arith.constant 2 : index
    %c0_111 = arith.constant 0 : index
    %109 = vector.load %arg1[%c0_108, %c9_109, %c2_110, %c0_111] : memref<1x18x18x4xbf16, #tpu.memory_space<vmem>>, vector<1x8x16x4xbf16>
    %110 = vector.shape_cast %109 : vector<1x8x16x4xbf16> to vector<8x16x4xbf16>
    %111 = vector.shape_cast %110 : vector<8x16x4xbf16> to vector<128x4xbf16>
    %c5_112 = arith.constant 5 : index
    %c0_113 = arith.constant 0 : index
    %c0_114 = arith.constant 0 : index
    %112 = vector.load %arg2[%c5_112, %c0_113, %c0_114] : memref<9x4x128xbf16, #tpu.memory_space<vmem>>, vector<1x4x128xbf16>
    %113 = vector.shape_cast %112 : vector<1x4x128xbf16> to vector<4x128xbf16>
    %cst_115 = arith.constant dense<0.000000e+00> : vector<128x128xf32>
    %114 = tpu.matmul %111, %113, %cst_115 {dimension_numbers = #tpu.dot_dimension_numbers<[1], [0], [0], [1], [0, 0, 1, 1], [], []>} : vector<128x4xbf16>, vector<4x128xbf16>, vector<128x128xf32> -> vector<128x128xf32>
    %115 = arith.addf %108, %114 : vector<128x128xf32>
    %c0_116 = arith.constant 0 : index
    %c10 = arith.constant 10 : index
    %c0_117 = arith.constant 0 : index
    %c0_118 = arith.constant 0 : index
    %116 = vector.load %arg1[%c0_116, %c10, %c0_117, %c0_118] : memref<1x18x18x4xbf16, #tpu.memory_space<vmem>>, vector<1x8x16x4xbf16>
    %117 = vector.shape_cast %116 : vector<1x8x16x4xbf16> to vector<8x16x4xbf16>
    %118 = vector.shape_cast %117 : vector<8x16x4xbf16> to vector<128x4xbf16>
    %c6_119 = arith.constant 6 : index
    %c0_120 = arith.constant 0 : index
    %c0_121 = arith.constant 0 : index
    %119 = vector.load %arg2[%c6_119, %c0_120, %c0_121] : memref<9x4x128xbf16, #tpu.memory_space<vmem>>, vector<1x4x128xbf16>
    %120 = vector.shape_cast %119 : vector<1x4x128xbf16> to vector<4x128xbf16>
    %cst_122 = arith.constant dense<0.000000e+00> : vector<128x128xf32>
    %121 = tpu.matmul %118, %120, %cst_122 {dimension_numbers = #tpu.dot_dimension_numbers<[1], [0], [0], [1], [0, 0, 1, 1], [], []>} : vector<128x4xbf16>, vector<4x128xbf16>, vector<128x128xf32> -> vector<128x128xf32>
    %122 = arith.addf %115, %121 : vector<128x128xf32>
    %c0_123 = arith.constant 0 : index
    %c10_124 = arith.constant 10 : index
    %c1_125 = arith.constant 1 : index
    %c0_126 = arith.constant 0 : index
    %123 = vector.load %arg1[%c0_123, %c10_124, %c1_125, %c0_126] : memref<1x18x18x4xbf16, #tpu.memory_space<vmem>>, vector<1x8x16x4xbf16>
    %124 = vector.shape_cast %123 : vector<1x8x16x4xbf16> to vector<8x16x4xbf16>
    %125 = vector.shape_cast %124 : vector<8x16x4xbf16> to vector<128x4xbf16>
    %c7_127 = arith.constant 7 : index
    %c0_128 = arith.constant 0 : index
    %c0_129 = arith.constant 0 : index
    %126 = vector.load %arg2[%c7_127, %c0_128, %c0_129] : memref<9x4x128xbf16, #tpu.memory_space<vmem>>, vector<1x4x128xbf16>
    %127 = vector.shape_cast %126 : vector<1x4x128xbf16> to vector<4x128xbf16>
    %cst_130 = arith.constant dense<0.000000e+00> : vector<128x128xf32>
    %128 = tpu.matmul %125, %127, %cst_130 {dimension_numbers = #tpu.dot_dimension_numbers<[1], [0], [0], [1], [0, 0, 1, 1], [], []>} : vector<128x4xbf16>, vector<4x128xbf16>, vector<128x128xf32> -> vector<128x128xf32>
    %129 = arith.addf %122, %128 : vector<128x128xf32>
    %c0_131 = arith.constant 0 : index
    %c10_132 = arith.constant 10 : index
    %c2_133 = arith.constant 2 : index
    %c0_134 = arith.constant 0 : index
    %130 = vector.load %arg1[%c0_131, %c10_132, %c2_133, %c0_134] : memref<1x18x18x4xbf16, #tpu.memory_space<vmem>>, vector<1x8x16x4xbf16>
    %131 = vector.shape_cast %130 : vector<1x8x16x4xbf16> to vector<8x16x4xbf16>
    %132 = vector.shape_cast %131 : vector<8x16x4xbf16> to vector<128x4xbf16>
    %c8_135 = arith.constant 8 : index
    %c0_136 = arith.constant 0 : index
    %c0_137 = arith.constant 0 : index
    %133 = vector.load %arg2[%c8_135, %c0_136, %c0_137] : memref<9x4x128xbf16, #tpu.memory_space<vmem>>, vector<1x4x128xbf16>
    %134 = vector.shape_cast %133 : vector<1x4x128xbf16> to vector<4x128xbf16>
    %cst_138 = arith.constant dense<0.000000e+00> : vector<128x128xf32>
    %135 = tpu.matmul %132, %134, %cst_138 {dimension_numbers = #tpu.dot_dimension_numbers<[1], [0], [0], [1], [0, 0, 1, 1], [], []>} : vector<128x4xbf16>, vector<4x128xbf16>, vector<128x128xf32> -> vector<128x128xf32>
    %136 = arith.addf %129, %135 : vector<128x128xf32>
    %c0_139 = arith.constant 0 : index
    %c0_140 = arith.constant 0 : index
    %137 = vector.load %arg3[%c0_139, %c0_140] : memref<1x128xf32, #tpu.memory_space<vmem>>, vector<1x128xf32>
    %138 = vector.broadcast %137 : vector<1x128xf32> to vector<128x128xf32>
    %139 = arith.addf %136, %138 : vector<128x128xf32>
    %cst_141 = arith.constant 0.000000e+00 : f32
    %140 = vector.broadcast %cst_141 : f32 to vector<128x128xf32>
    %141 = arith.maximumf %139, %140 : vector<128x128xf32>
    %cst_142 = arith.constant dense<0.000000e+00> : vector<128xf32>
    %142 = vector.multi_reduction <add>, %141, %cst_142 [0] : vector<128x128xf32> to vector<128xf32>
    %143 = vector.shape_cast %142 : vector<128xf32> to vector<1x128xf32>
    %144 = arith.addf %72, %143 : vector<1x128xf32>
    %cst_143 = arith.constant 3.906250e-03 : f32
    %145 = vector.broadcast %cst_143 : f32 to vector<1x128xf32>
    %146 = arith.mulf %144, %145 : vector<1x128xf32>
    %147 = vector.shape_cast %146 : vector<1x128xf32> to vector<1x1x128xf32>
    %c0_144 = arith.constant 0 : index
    %c0_145 = arith.constant 0 : index
    %c0_146 = arith.constant 0 : index
    %148 = vector.load %arg4[%c0_144, %c0_145, %c0_146] : memref<1x1x128xf32, #tpu.memory_space<vmem>>, vector<1x1x128xf32>
    tpu.vector_store %arg4[%c0_144, %c0_145, %c0_146], %147 {strides = array<i32>} : memref<1x1x128xf32, #tpu.memory_space<vmem>>, vector<1x1x128xf32>,
    return
  }
  func.func @transform_0(%arg0: i32) -> (i32, i32, i32, i32) {
    %c0_i32 = arith.constant 0 : i32
    %c0_i32_0 = arith.constant 0 : i32
    %c0_i32_1 = arith.constant 0 : i32
    %c0_i32_2 = arith.constant 0 : i32
    return %arg0, %c0_i32, %c0_i32_0, %c0_i32_1 : i32, i32, i32, i32
  }
  func.func @transform_1(%arg0: i32) -> (i32, i32, i32) {
    %c0_i32 = arith.constant 0 : i32
    %c0_i32_0 = arith.constant 0 : i32
    %c0_i32_1 = arith.constant 0 : i32
    %c0_i32_2 = arith.constant 0 : i32
    return %c0_i32, %c0_i32_0, %c0_i32_1 : i32, i32, i32
  }
  func.func @transform_2(%arg0: i32) -> (i32, i32) {
    %c0_i32 = arith.constant 0 : i32
    %c0_i32_0 = arith.constant 0 : i32
    %c0_i32_1 = arith.constant 0 : i32
    return %c0_i32, %c0_i32_0 : i32, i32
  }
  func.func @transform_3(%arg0: i32) -> (i32, i32, i32) {
    %c0_i32 = arith.constant 0 : i32
    %c0_i32_0 = arith.constant 0 : i32
    %c0_i32_1 = arith.constant 0 : i32
    return %arg0, %c0_i32, %c0_i32_0 : i32, i32, i32
  }
}

module attributes {stable_mosaic.version = 11 : i64} {
  func.func @fc_kernel(%arg0: i32, %arg1: memref<2x128xf32, #tpu.memory_space<vmem>>, %arg2: memref<128x128xf32, #tpu.memory_space<vmem>>, %arg3: memref<1x128xf32, #tpu.memory_space<vmem>>, %arg4: memref<2x128xf32, #tpu.memory_space<vmem>>) attributes {dimension_semantics = [#tpu.dimension_semantics<parallel>], iteration_bounds = array<i64: 1>, scalar_prefetch = 0 : i64, scratch_operands = 0 : i64, tpu.core_type = #tpu.core_type<tc>, window_params = [{transform_indices = @transform_0, window_bounds = array<i64: 2, 128>}, {pipeline_mode = #tpu.pipeline_mode<synchronous>, transform_indices = @transform_1, window_bounds = array<i64: 128, 128>}, {pipeline_mode = #tpu.pipeline_mode<synchronous>, transform_indices = @transform_2, window_bounds = array<i64: 1, 128>}, {transform_indices = @transform_3, window_bounds = array<i64: 2, 128>}]} {
    %c0 = arith.constant 0 : index
    %c0_0 = arith.constant 0 : index
    %0 = vector.load %arg1[%c0, %c0_0] : memref<2x128xf32, #tpu.memory_space<vmem>>, vector<2x128xf32>
    %c0_1 = arith.constant 0 : index
    %c0_2 = arith.constant 0 : index
    %1 = vector.load %arg2[%c0_1, %c0_2] : memref<128x128xf32, #tpu.memory_space<vmem>>, vector<128x128xf32>
    %cst = arith.constant dense<0.000000e+00> : vector<2x128xf32>
    %2 = tpu.matmul %0, %1, %cst {dimension_numbers = #tpu.dot_dimension_numbers<[1], [0], [0], [1], [0, 0, 1, 1], [], []>} : vector<2x128xf32>, vector<128x128xf32>, vector<2x128xf32> -> vector<2x128xf32>
    %c0_3 = arith.constant 0 : index
    %c0_4 = arith.constant 0 : index
    %3 = vector.load %arg3[%c0_3, %c0_4] : memref<1x128xf32, #tpu.memory_space<vmem>>, vector<1x128xf32>
    %4 = vector.broadcast %3 : vector<1x128xf32> to vector<2x128xf32>
    %5 = arith.addf %2, %4 : vector<2x128xf32>
    %c0_5 = arith.constant 0 : index
    %c0_6 = arith.constant 0 : index
    %6 = vector.load %arg4[%c0_5, %c0_6] : memref<2x128xf32, #tpu.memory_space<vmem>>, vector<2x128xf32>
    tpu.vector_store %arg4[%c0_5, %c0_6], %5 {strides = array<i32>} : memref<2x128xf32, #tpu.memory_space<vmem>>, vector<2x128xf32>,
    return
  }
  func.func @transform_0(%arg0: i32) -> (i32, i32) {
    %c0_i32 = arith.constant 0 : i32
    %c0_i32_0 = arith.constant 0 : i32
    return %arg0, %c0_i32 : i32, i32
  }
  func.func @transform_1(%arg0: i32) -> (i32, i32) {
    %c0_i32 = arith.constant 0 : i32
    %c0_i32_0 = arith.constant 0 : i32
    %c0_i32_1 = arith.constant 0 : i32
    return %c0_i32, %c0_i32_0 : i32, i32
  }
  func.func @transform_2(%arg0: i32) -> (i32, i32) {
    %c0_i32 = arith.constant 0 : i32
    %c0_i32_0 = arith.constant 0 : i32
    %c0_i32_1 = arith.constant 0 : i32
    return %c0_i32, %c0_i32_0 : i32, i32
  }
  func.func @transform_3(%arg0: i32) -> (i32, i32) {
    %c0_i32 = arith.constant 0 : i32
    %c0_i32_0 = arith.constant 0 : i32
    return %arg0, %c0_i32 : i32, i32
  }
}

</mosaic_0001>

<llo_original>
// kernel: cnn_forward.3
$region0: #{cnn_forward.3}
  #allocation0 [shape = 'u32[]', space=smem, size = 0x4, offset = 0x4, fixed_abs, tag = 'smem constant byte address 0x4 - core index']
  #allocation1 [shape = 'u32[144,128]{1,0:T(1,128)}', space=vmem, size = 0x12000, scoped, tag = 'internal scratch']
  %s0 = inlined_call_operand.vmem [shape: f32[2,128], index: 0, kind: input, shape index: {}]
  %s1 = inlined_call_operand.vmem [shape: f32[128,128], index: 1, kind: input, shape index: {}]
  %s2 = inlined_call_operand.vmem [shape: f32[1,128], index: 2, kind: input, shape index: {}]
  %s3 = inlined_call_operand.hbm [shape: f32[2,128], index: 3, kind: output, shape index: {}]
  %s4 = sld [smem:[#allocation0]]
  $region22: #{cnn_forward.3} parent=0
    _
  %s6 = ssub.s32 1, %s4
  %s7 = scalar_select 0, %s6, %s4
  $region1: #{cnn_forward.3} parent=0
    #allocation2 [shape = 'u8[1024]{0}', space=vmem, size = 0x400, scoped, tag = 'output window, operand 0, single buffered']
    #allocation3 [shape = 's32[1]{0}', space=sflag, size = 0x4, scoped, tag = 'scoped memory for cnn_forward.3']
    %8 = vsyncpa [#allocation3], 0
    // Predicated region
    $region2: #{cnn_forward.3} parent=1 // pred_check
      _
    $region3: #{cnn_forward.3} parent=1 // pred_check_branch
      %10 = sbr.rel (0) target = $region5
    $region4: #{cnn_forward.3} parent=1 // pred_region
      _
    $region5: #{cnn_forward.3} parent=1 // pred_fallthru
      _
    // Predicated region
    $region6: #{cnn_forward.3} parent=1 // pred_check
      _
    $region7: #{cnn_forward.3} parent=1 // pred_check_branch
      %12 = sbr.rel (0) target = $region9
    $region8: #{cnn_forward.3} parent=1 // pred_region
      _
    $region9: #{cnn_forward.3} parent=1 // pred_fallthru
      _
    // Predicated region
    $region10: #{cnn_forward.3} parent=1 // pred_check
      _
    $region11: #{cnn_forward.3} parent=1 // pred_check_branch
      %14 = sbr.rel (0) target = $region13
    $region12: #{cnn_forward.3} parent=1 // pred_region
      _
    $region13: #{cnn_forward.3} parent=1 // pred_fallthru
      _
    %v15 = vld [vmem:[%s0] sm:$0x3]
    %v16 = vld [vmem:[%s1] sm:$0xff]
    %v17 = vld [vmem:[%s1 + $0x8] sm:$0xff]
    %v18 = vld [vmem:[%s1 + $0x10] sm:$0xff]
    %v19 = vld [vmem:[%s1 + $0x18] sm:$0xff]
    %v20 = vld [vmem:[%s1 + $0x20] sm:$0xff]
    %v21 = vld [vmem:[%s1 + $0x28] sm:$0xff]
    %v22 = vld [vmem:[%s1 + $0x30] sm:$0xff]
    %v23 = vld [vmem:[%s1 + $0x38] sm:$0xff]
    %v24 = vld [vmem:[%s1 + $0x40] sm:$0xff]
    %v25 = vld [vmem:[%s1 + $0x48] sm:$0xff]
    %v26 = vld [vmem:[%s1 + $0x50] sm:$0xff]
    %v27 = vld [vmem:[%s1 + $0x58] sm:$0xff]
    %v28 = vld [vmem:[%s1 + $0x60] sm:$0xff]
    %v29 = vld [vmem:[%s1 + $0x68] sm:$0xff]
    %v30 = vld [vmem:[%s1 + $0x70] sm:$0xff]
    %v31 = vld [vmem:[%s1 + $0x78] sm:$0xff]
    %v32 = vld [vmem:[%s2] sm:$0x1]
    %v34 = vlaneseq
    %v35 = vshrl.u32 %v34, 7
    %v36 = vsub.s32 0, %v35
    %v37 = vrot.slane %v32, %v36
    %39 = vmatprep.subr.mxu0 0.0
    %40 = vmatpush1.msra.mxu0 %v31
    %41 = vmatprep.subr.mxu0 0.0
    %42 = vmatpush1.msra.mxu0 %v30
    %43 = vmatprep.subr.mxu0 0.0
    %44 = vmatpush1.msra.mxu0 %v29
    %45 = vmatprep.subr.mxu0 0.0
    %46 = vmatpush1.msra.mxu0 %v28
    %47 = vmatprep.subr.mxu0 0.0
    %48 = vmatpush1.msra.mxu0 %v27
    %49 = vmatprep.subr.mxu0 0.0
    %50 = vmatpush1.msra.mxu0 %v26
    %51 = vmatprep.subr.mxu0 0.0
    %52 = vmatpush1.msra.mxu0 %v25
    %53 = vmatprep.subr.mxu0 0.0
    %54 = vmatpush1.msra.mxu0 %v24
    %55 = vmatprep.subr.mxu0 0.0
    %56 = vmatpush1.msra.mxu0 %v23
    %57 = vmatprep.subr.mxu0 0.0
    %58 = vmatpush1.msra.mxu0 %v22
    %59 = vmatprep.subr.mxu0 0.0
    %60 = vmatpush1.msra.mxu0 %v21
    %61 = vmatprep.subr.mxu0 0.0
    %62 = vmatpush1.msra.mxu0 %v20
    %63 = vmatprep.subr.mxu0 0.0
    %64 = vmatpush1.msra.mxu0 %v19
    %65 = vmatprep.subr.mxu0 0.0
    %66 = vmatpush1.msra.mxu0 %v18
    %67 = vmatprep.subr.mxu0 0.0
    %68 = vmatpush1.msra.mxu0 %v17
    %69 = vmatprep.subr.mxu0 0.0
    %70 = vmatpush1.msra.mxu0 %v16
    %71 = vmatprep.subr.mxu0 0.0
    %72 = vmatpush2.msra.mxu0 0.0
    %73 = vmatprep.subr.mxu0 0.0
    %74 = vmatpush2.msra.mxu0 0.0
    %75 = vmatprep.subr.mxu0 0.0
    %76 = vmatpush2.msra.mxu0 0.0
    %77 = vmatprep.subr.mxu0 0.0
    %78 = vmatpush2.msra.mxu0 0.0
    %79 = vmatprep.subr.mxu0 0.0
    %80 = vmatpush2.msra.mxu0 0.0
    %81 = vmatprep.subr.mxu0 0.0
    %82 = vmatpush2.msra.mxu0 0.0
    %83 = vmatprep.subr.mxu0 0.0
    %84 = vmatpush2.msra.mxu0 0.0
    %85 = vmatprep.subr.mxu0 0.0
    %86 = vmatpush2.msra.mxu0 0.0
    %87 = vmatprep.subr.mxu0 0.0
    %88 = vmatpush2.msra.mxu0 0.0
    %89 = vmatprep.subr.mxu0 0.0
    %90 = vmatpush2.msra.mxu0 0.0
    %91 = vmatprep.subr.mxu0 0.0
    %92 = vmatpush2.msra.mxu0 0.0
    %93 = vmatprep.subr.mxu0 0.0
    %94 = vmatpush2.msra.mxu0 0.0
    %95 = vmatprep.subr.mxu0 0.0
    %96 = vmatpush2.msra.mxu0 0.0
    %97 = vmatprep.subr.mxu0 0.0
    %98 = vmatpush2.msra.mxu0 0.0
    %99 = vmatprep.subr.mxu0 0.0
    %100 = vmatpush2.msra.mxu0 0.0
    %101 = vmatprep.subr.mxu0 0.0
    %102 = vmatpush2.msra.mxu0 0.0
    %103 = vmatprep.mubr.f32.mxu0 0.0
    %104 = vmatmul.mubr.f32.gmra.mxu0 %v15
    %v105 = vpop.f32.mrf.mxu0
    %v106 = vadd.f32 %v37, %v105
    %v107 = vpop.f32.mrf.mxu0
    %108 = vdwg.mxu0
    %109 = vst [vmem:[#allocation2] sm:$0x3] %v106
    // Predicated region
    $region14: #{cnn_forward.3} parent=1 // pred_check
      _
    $region15: #{cnn_forward.3} parent=1 // pred_check_branch
      %111 = sbr.rel (0) target = $region17
    $region16: #{cnn_forward.3} parent=1 // pred_region
      %s113 = ssub.s32 32, 32
      %114 = vsyncadd [#allocation3], %s113
      %s116 = sshll.u32 [#allocation2], 4
      %s117 = int_to_ptr.vmem [resolvable:$true] %s116
      %119 = dma.vmem_to_hbm [thread:$0]  %s117, 32, %s3, [#allocation3]
    $region17: #{cnn_forward.3} parent=1 // pred_fallthru
      _
    // Predicated region
    $region18: #{cnn_forward.3} parent=1 // pred_check
      _
    $region19: #{cnn_forward.3} parent=1 // pred_check_branch
      %121 = sbr.rel (0) target = $region21
    $region20: #{cnn_forward.3} parent=1 // pred_region
      %122 = dma.done [#allocation3], 32
    $region21: #{cnn_forward.3} parent=1 // pred_fallthru
      _
    %123 = vsyncpa [#allocation3], 1

// kernel: cnn_forward.2
$region0: #{cnn_forward.2}
  #allocation0 [shape = 'u32[]', space=smem, size = 0x4, offset = 0x4, fixed_abs, tag = 'smem constant byte address 0x4 - core index']
  #allocation1 [shape = 'u32[144,128]{1,0:T(1,128)}', space=vmem, size = 0x12000, scoped, tag = 'internal scratch']
  %s0 = inlined_call_operand.vmem [shape: bf16[2,18,18,4], index: 0, kind: input, shape index: {}]
  %s1 = inlined_call_operand.vmem [shape: bf16[9,4,128], index: 1, kind: input, shape index: {}]
  %s2 = inlined_call_operand.vmem [shape: f32[1,128], index: 2, kind: input, shape index: {}]
  %s3 = inlined_call_operand.vmem [shape: f32[2,1,128], index: 3, kind: output, shape index: {}]
  %s4 = sld [smem:[#allocation0]]
  $region45: #{cnn_forward.2} parent=0
    _
  %s6 = ssub.s32 1, %s4
  %s7 = scalar_select 0, %s6, %s4
  loop: start=0, step=1, limit=4
  $region2: #{cnn_forward.2} parent=0 // loop_pre_header
    _
  $region3: #{cnn_forward.2} parent=0 // loop_header
    %s9 = sphi 0, %s13
    %p10 = scmp.ge.s32.totalorder %s9, 4
    %s19 = sphi 0, %s21
    %s22 = sphi 0, %s19
    %s23 = sphi 0, %s22
    %s39 = sphi 0, %s23
    %s43 = sphi 0, %s43
    %s45 = sphi 0, %s43
    %s46 = sphi 0, %s45
    %s60 = sphi 0, %s46
    %s64 = sphi 0, %s64
    %s66 = sphi 0, %s64
    %s67 = sphi 0, %s66
    %s81 = sphi 0, %s67
    %s87 = sphi 0, %s89
    %s90 = sphi 0, %s87
    %s91 = sphi 0, %s90
    %s107 = sphi 0, %s91
  $region4: #{cnn_forward.2} parent=0 // loop_header_branch
    %12 = sbr.rel (%p10) target = $region8
  $region5: #{cnn_forward.2} parent=0 // loop_body
    %s14 = ssub.s32 %s9, 1
    %s15 = ssub.s32 %s9, 2
    %s16 = sadd.s32 %s9, 1
    %s17 = ssub.s32 %s9, %s16
    %p18 = scmp.eq.s32.totalorder %s17, 0
    %s20 = sadd.s32 %s19, 1
    %s21 = scalar_select %p18, %s19, %s20
    %p24 = pneg %p18
    %p25 = scmp.eq.s32.totalorder %s9, 1
    %p26 = por %p24, %p25
    %p27 = scmp.ne.s32.totalorder %s19, %s22
    %p28 = scmp.eq.s32.totalorder %s9, 0
    %p29 = por %p27, %p28
    %p30 = scmp.ne.s32.totalorder %s19, %s22
    %p31 = scmp.eq.s32.totalorder %s14, 1
    %p32 = por %p30, %p31
    %p33 = scmp.ne.s32.totalorder %s22, %s23
    %p34 = scmp.eq.s32.totalorder %s14, 0
    %p35 = por %p33, %p34
    %p36 = scmp.ne.s32.totalorder %s22, %s23
    %p37 = scmp.eq.s32.totalorder %s15, 1
    %p38 = por %p36, %p37
    %p40 = scmp.ne.s32.totalorder %s23, %s39
    %p41 = scmp.eq.s32.totalorder %s15, 0
    %p42 = por %p40, %p41
    %s44 = sadd.s32 %s43, 1
    %p47 = scmp.eq.s32.totalorder %s9, 1
    %p48 = scmp.ne.s32.totalorder %s43, %s45
    %p49 = scmp.eq.s32.totalorder %s9, 0
    %p50 = por %p48, %p49
    %p51 = scmp.ne.s32.totalorder %s43, %s45
    %p52 = scmp.eq.s32.totalorder %s14, 1
    %p53 = por %p51, %p52
    %p54 = scmp.ne.s32.totalorder %s45, %s46
    %p55 = scmp.eq.s32.totalorder %s14, 0
    %p56 = por %p54, %p55
    %p57 = scmp.ne.s32.totalorder %s45, %s46
    %p58 = scmp.eq.s32.totalorder %s15, 1
    %p59 = por %p57, %p58
    %p61 = scmp.ne.s32.totalorder %s46, %s60
    %p62 = scmp.eq.s32.totalorder %s15, 0
    %p63 = por %p61, %p62
    %s65 = sadd.s32 %s64, 1
    %p68 = scmp.eq.s32.totalorder %s9, 1
    %p69 = scmp.ne.s32.totalorder %s64, %s66
    %p70 = scmp.eq.s32.totalorder %s9, 0
    %p71 = por %p69, %p70
    %p72 = scmp.ne.s32.totalorder %s64, %s66
    %p73 = scmp.eq.s32.totalorder %s14, 1
    %p74 = por %p72, %p73
    %p75 = scmp.ne.s32.totalorder %s66, %s67
    %p76 = scmp.eq.s32.totalorder %s14, 0
    %p77 = por %p75, %p76
    %p78 = scmp.ne.s32.totalorder %s66, %s67
    %p79 = scmp.eq.s32.totalorder %s15, 1
    %p80 = por %p78, %p79
    %p82 = scmp.ne.s32.totalorder %s67, %s81
    %p83 = scmp.eq.s32.totalorder %s15, 0
    %p84 = por %p82, %p83
    %s85 = ssub.s32 %s9, %s16
    %p86 = scmp.eq.s32.totalorder %s85, 0
    %s88 = sadd.s32 %s87, 1
    %s89 = scalar_select %p86, %s87, %s88
    %p92 = pneg %p86
    %p93 = scmp.eq.s32.totalorder %s9, 1
    %p94 = por %p92, %p93
    %p95 = scmp.ne.s32.totalorder %s87, %s90
    %p96 = scmp.eq.s32.totalorder %s9, 0
    %p97 = por %p95, %p96
    %p98 = scmp.ne.s32.totalorder %s87, %s90
    %p99 = scmp.eq.s32.totalorder %s14, 1
    %p100 = por %p98, %p99
    %p101 = scmp.ne.s32.totalorder %s90, %s91
    %p102 = scmp.eq.s32.totalorder %s14, 0
    %p103 = por %p101, %p102
    %p104 = scmp.ne.s32.totalorder %s90, %s91
    %p105 = scmp.eq.s32.totalorder %s15, 1
    %p106 = por %p104, %p105
    %p108 = scmp.ne.s32.totalorder %s91, %s107
    %p109 = scmp.eq.s32.totalorder %s15, 0
    %p110 = por %p108, %p109
    %p111 = scmp.le.s32.totalorder 1, %s9
    %p112 = scmp.lt.s32.totalorder %s9, 3
    %p113 = pnand %p111, %p112
    %p114 = pneg %p113
    // Predicated region
    $region9: #{cnn_forward.2} parent=5 // pred_check
      _
    $region10: #{cnn_forward.2} parent=5 // pred_check_branch
      %116 = sbr.rel (%p113) target = $region12
    $region11: #{cnn_forward.2} parent=5 // pred_region
      %s117 = ssub.s32 %s9, 1
      // Predicated region
      $region13: #{cnn_forward.2} parent=11 // pred_check
        %p118 = pneg %p56
      $region14: #{cnn_forward.2} parent=11 // pred_check_branch
        %120 = sbr.rel (%p118) target = $region16
      $region15: #{cnn_forward.2} parent=11 // pred_region
        _
      $region16: #{cnn_forward.2} parent=11 // pred_fallthru
        _
      // Predicated region
      $region17: #{cnn_forward.2} parent=11 // pred_check
        %p121 = pneg %p77
      $region18: #{cnn_forward.2} parent=11 // pred_check_branch
        %123 = sbr.rel (%p121) target = $region20
      $region19: #{cnn_forward.2} parent=11 // pred_region
        _
      $region20: #{cnn_forward.2} parent=11 // pred_fallthru
        _
    $region12: #{cnn_forward.2} parent=5 // pred_fallthru
      _
    %p124 = scmp.lt.s32.totalorder %s9, 2
    // Predicated region
    $region21: #{cnn_forward.2} parent=5 // pred_check
      %p125 = pneg %p124
    $region22: #{cnn_forward.2} parent=5 // pred_check_branch
      %127 = sbr.rel (%p125) target = $region24
    $region23: #{cnn_forward.2} parent=5 // pred_region
      // Predicated region
      $region25: #{cnn_forward.2} parent=23 // pred_check
        %p128 = pneg %p29
      $region26: #{cnn_forward.2} parent=23 // pred_check_branch
        %130 = sbr.rel (%p128) target = $region28
      $region27: #{cnn_forward.2} parent=23 // pred_region
        %p131 = scmp.lt.s32.totalorder %s9, 1
        %s132 = scalar_select %p131, %s9, 1
        %s133 = smul.addr %s132, 54
        %s134 = smul.addr %s133, 4
        %s135 = scalar_lea.vmem %s0, %s134
      $region28: #{cnn_forward.2} parent=23 // pred_fallthru
        _
    $region24: #{cnn_forward.2} parent=5 // pred_fallthru
      _
    %p136 = scmp.le.s32.totalorder 1, %s9
    %p137 = scmp.lt.s32.totalorder %s9, 3
    %p138 = pnand %p136, %p137
    %p139 = pneg %p138
    // Predicated region
    $region29: #{cnn_forward.2} parent=5 // pred_check
      _
    $region30: #{cnn_forward.2} parent=5 // pred_check_branch
      %141 = sbr.rel (%p138) target = $region32
    $region31: #{cnn_forward.2} parent=5 // pred_region
      %s142 = ssub.s32 %s9, 1
      %p143 = scmp.lt.s32.totalorder %s14, 1
      %s144 = scalar_select %p143, %s14, 1
      %s145 = smul.addr %s144, 54
      %s146 = smul.addr %s145, 4
      %s147 = scalar_lea.vmem %s0, %s146
      %p148 = pneg %p35
      %p149 = pneg %p32
      %p150 = pneg %p56
      %p151 = pneg %p53
      %p152 = pneg %p77
      %p153 = pneg %p74
      %p154 = pneg %p103
      %p155 = pneg %p100
      %p156 = scmp.lt.s32.totalorder %s14, 1
      %s157 = scalar_select %p156, %s14, 1
      %s158 = scalar_lea.vmem %s3, %s157
      %p159 = scmp.lt.s32.totalorder %s14, 1
      %s160 = scalar_select %p159, %s14, 1
      %s161 = smul.addr %s160, 54
      %s162 = smul.addr %s161, 4
      %s163 = scalar_lea.vmem %s0, %s162
      %p164 = scmp.lt.s32.totalorder %s14, 1
      %s165 = scalar_select %p164, %s14, 1
      %s166 = scalar_lea.vmem %s3, %s165
      %v168 = vld [vmem:[%s163] sm:$0xf]
      %v169 = vld [vmem:[%s163 + $0x4] sm:$0xf]
      %v170 = vld [vmem:[%s163 + $0xc] sm:$0xf]
      %v171 = vld [vmem:[%s163 + $0x10] sm:$0xf]
      %v172 = vld [vmem:[%s163 + $0x18] sm:$0xf]
      %v173 = vld [vmem:[%s163 + $0x1c] sm:$0xf]
      %v174 = vld [vmem:[%s163 + $0x24] sm:$0xf]
      %v175 = vld [vmem:[%s163 + $0x28] sm:$0xf]
      %v176 = vld [vmem:[%s163 + $0x30] sm:$0xf]
      %v177 = vld [vmem:[%s163 + $0x34] sm:$0xf]
      %v178 = vld [vmem:[%s163 + $0x3c] sm:$0xf]
      %v179 = vld [vmem:[%s163 + $0x40] sm:$0xf]
      %v180 = vld [vmem:[%s163 + $0x48] sm:$0xf]
      %v181 = vld [vmem:[%s163 + $0x4c] sm:$0xf]
      %v182 = vld [vmem:[%s163 + $0x54] sm:$0xf]
      %v183 = vld [vmem:[%s163 + $0x58] sm:$0xf]
      %v184 = vld [vmem:[%s1] sm:$0x3]
      %v185 = vld [vmem:[%s163 + $0x8] sm:$0x1]
      %v186 = vld [vmem:[%s163 + $0x14] sm:$0x1]
      %v187 = vld [vmem:[%s163 + $0x20] sm:$0x1]
      %v188 = vld [vmem:[%s163 + $0x2c] sm:$0x1]
      %v189 = vld [vmem:[%s163 + $0x38] sm:$0x1]
      %v190 = vld [vmem:[%s163 + $0x44] sm:$0x1]
      %v191 = vld [vmem:[%s163 + $0x50] sm:$0x1]
      %v192 = vld [vmem:[%s163 + $0x5c] sm:$0x1]
      %vm193 = vsmask.f32 3328
      %vm194 = vsmask.f32 7440
      %vm195 = vmor %vm193, %vm194
      %v197 = vshrl.u32 %v168, 16
      %v199 = vrot.slane %v197, 4
      %v200 = vshll.u32 %v168, 16
      %v202 = vrot.slane %v200, 5
      %v203 = vor.u32 %v199, %v202
      %v204 = vrot.slane %v203, 4
      %v206 = vshll.u32 %v169, 16
      %v208 = vrot.slane %v206, 5
      %v209 = vsel %vm195, %v204, %v208
      %v210 = vshrl.u32 %v169, 16
      %v212 = vrot.slane %v210, 4
      %v213 = vor.u32 %v212, %v208
      %v214 = vrot.slane %v213, 4
      %v216 = vshll.u32 %v185, 16
      %v218 = vrot.slane %v216, 5
      %v219 = vsel %vm195, %v214, %v218
      %v221 = vshrl.u32 %v170, 16
      %v223 = vrot.slane %v221, 4
      %v224 = vshll.u32 %v170, 16
      %v226 = vrot.slane %v224, 5
      %v227 = vor.u32 %v223, %v226
      %v228 = vrot.slane %v227, 4
      %v230 = vshll.u32 %v171, 16
      %v232 = vrot.slane %v230, 5
      %v233 = vsel %vm195, %v228, %v232
      %v234 = vshrl.u32 %v171, 16
      %v236 = vrot.slane %v234, 4
      %v237 = vor.u32 %v236, %v232
      %v238 = vrot.slane %v237, 4
      %v240 = vshll.u32 %v186, 16
      %v242 = vrot.slane %v240, 5
      %v243 = vsel %vm195, %v238, %v242
      %v245 = vshrl.u32 %v172, 16
      %v247 = vrot.slane %v245, 4
      %v248 = vshll.u32 %v172, 16
      %v250 = vrot.slane %v248, 5
      %v251 = vor.u32 %v247, %v250
      %v252 = vrot.slane %v251, 4
      %v254 = vshll.u32 %v173, 16
      %v256 = vrot.slane %v254, 5
      %v257 = vsel %vm195, %v252, %v256
      %v258 = vshrl.u32 %v173, 16
      %v260 = vrot.slane %v258, 4
      %v261 = vor.u32 %v260, %v256
      %v262 = vrot.slane %v261, 4
      %v264 = vshll.u32 %v187, 16
      %v266 = vrot.slane %v264, 5
      %v267 = vsel %vm195, %v262, %v266
      %v269 = vshrl.u32 %v174, 16
      %v271 = vrot.slane %v269, 4
      %v272 = vshll.u32 %v174, 16
      %v274 = vrot.slane %v272, 5
      %v275 = vor.u32 %v271, %v274
      %v276 = vrot.slane %v275, 4
      %v278 = vshll.u32 %v175, 16
      %v280 = vrot.slane %v278, 5
      %v281 = vsel %vm195, %v276, %v280
      %v282 = vshrl.u32 %v175, 16
      %v284 = vrot.slane %v282, 4
      %v285 = vor.u32 %v284, %v280
      %v286 = vrot.slane %v285, 4
      %v288 = vshll.u32 %v188, 16
      %v290 = vrot.slane %v288, 5
      %v291 = vsel %vm195, %v286, %v290
      %v293 = vshrl.u32 %v176, 16
      %v295 = vrot.slane %v293, 4
      %v296 = vshll.u32 %v176, 16
      %v298 = vrot.slane %v296, 5
      %v299 = vor.u32 %v295, %v298
      %v300 = vrot.slane %v299, 4
      %v302 = vshll.u32 %v177, 16
      %v304 = vrot.slane %v302, 5
      %v305 = vsel %vm195, %v300, %v304
      %v306 = vshrl.u32 %v177, 16
      %v308 = vrot.slane %v306, 4
      %v309 = vor.u32 %v308, %v304
      %v310 = vrot.slane %v309, 4
      %v312 = vshll.u32 %v189, 16
      %v314 = vrot.slane %v312, 5
      %v315 = vsel %vm195, %v310, %v314
      %v317 = vshrl.u32 %v178, 16
      %v319 = vrot.slane %v317, 4
      %v320 = vshll.u32 %v178, 16
      %v322 = vrot.slane %v320, 5
      %v323 = vor.u32 %v319, %v322
      %v324 = vrot.slane %v323, 4
      %v326 = vshll.u32 %v179, 16
      %v328 = vrot.slane %v326, 5
      %v329 = vsel %vm195, %v324, %v328
      %v330 = vshrl.u32 %v179, 16
      %v332 = vrot.slane %v330, 4
      %v333 = vor.u32 %v332, %v328
      %v334 = vrot.slane %v333, 4
      %v336 = vshll.u32 %v190, 16
      %v338 = vrot.slane %v336, 5
      %v339 = vsel %vm195, %v334, %v338
      %v341 = vshrl.u32 %v180, 16
      %v343 = vrot.slane %v341, 4
      %v344 = vshll.u32 %v180, 16
      %v346 = vrot.slane %v344, 5
      %v347 = vor.u32 %v343, %v346
      %v348 = vrot.slane %v347, 4
      %v350 = vshll.u32 %v181, 16
      %v352 = vrot.slane %v350, 5
      %v353 = vsel %vm195, %v348, %v352
      %v354 = vshrl.u32 %v181, 16
      %v356 = vrot.slane %v354, 4
      %v357 = vor.u32 %v356, %v352
      %v358 = vrot.slane %v357, 4
      %v360 = vshll.u32 %v191, 16
      %v362 = vrot.slane %v360, 5
      %v363 = vsel %vm195, %v358, %v362
      %v365 = vshrl.u32 %v182, 16
      %v367 = vrot.slane %v365, 4
      %v368 = vshll.u32 %v182, 16
      %v370 = vrot.slane %v368, 5
      %v371 = vor.u32 %v367, %v370
      %v372 = vrot.slane %v371, 4
      %v374 = vshll.u32 %v183, 16
      %v376 = vrot.slane %v374, 5
      %v377 = vsel %vm195, %v372, %v376
      %v378 = vshrl.u32 %v183, 16
      %v380 = vrot.slane %v378, 4
      %v381 = vor.u32 %v380, %v376
      %v382 = vrot.slane %v381, 4
      %v384 = vshll.u32 %v192, 16
      %v386 = vrot.slane %v384, 5
      %v387 = vsel %vm195, %v382, %v386
      %s388 = scalar_lea.vmem %s1, 2
      %v389 = vld [vmem:[%s388] sm:$0x3]
      %v390 = vunpack.c.l.b16 %v209
      %v391 = vunpack.c.l.b16 %v219
      %v392 = vunpack.c.l.b16 %v233
      %v393 = vunpack.c.l.b16 %v243
      %v394 = vunpack.c.l.b16 %v257
      %v395 = vunpack.c.l.b16 %v267
      %v396 = vunpack.c.l.b16 %v281
      %v397 = vunpack.c.l.b16 %v291
      %v398 = vunpack.c.l.b16 %v305
      %v399 = vunpack.c.l.b16 %v315
      %v400 = vunpack.c.l.b16 %v329
      %v401 = vunpack.c.l.b16 %v339
      %v402 = vunpack.c.l.b16 %v353
      %v403 = vunpack.c.l.b16 %v363
      %v404 = vunpack.c.l.b16 %v377
      %v405 = vunpack.c.l.b16 %v387
      %v406 = vpack.c.b16 %v391, %v390
      %v407 = vpack.c.b16 %v393, %v392
      %v408 = vpack.c.b16 %v395, %v394
      %v409 = vpack.c.b16 %v397, %v396
      %v410 = vpack.c.b16 %v399, %v398
      %v411 = vpack.c.b16 %v401, %v400
      %v412 = vpack.c.b16 %v403, %v402
      %v413 = vpack.c.b16 %v405, %v404
      %vm414 = vcmask 31744
      %v416 = vsel %vm414, %v406, 0
      %v419 = vsel %vm414, %v407, 0
      %v422 = vsel %vm414, %v408, 0
      %v425 = vsel %vm414, %v409, 0
      %v428 = vsel %vm414, %v410, 0
      %v431 = vsel %vm414, %v411, 0
      %v434 = vsel %vm414, %v412, 0
      %v437 = vsel %vm414, %v413, 0
      %vm439 = vcmask 1041408
      %v441 = vsel %vm439, %v389, 0
      %443 = vmatprep.subr.bf16.mxu0 0
      %444 = vmatpush1.bf16.msra.mxu0 0
      %445 = vmatprep.subr.bf16.mxu0 0
      %446 = vmatpush1.bf16.msra.mxu0 0
      %447 = vmatprep.subr.bf16.mxu0 0
      %448 = vmatpush1.bf16.msra.mxu0 0
      %449 = vmatprep.subr.bf16.mxu0 0
      %450 = vmatpush1.bf16.msra.mxu0 0
      %451 = vmatprep.subr.bf16.mxu0 0
      %452 = vmatpush1.bf16.msra.mxu0 0
      %453 = vmatprep.subr.bf16.mxu0 0
      %454 = vmatpush1.bf16.msra.mxu0 0
      %455 = vmatprep.subr.bf16.mxu0 0
      %456 = vmatpush1.bf16.msra.mxu0 0
      %457 = vmatprep.subr.bf16.mxu0 0
      %458 = vmatpush1.bf16.msra.mxu0 %v441
      %459 = vmatprep.subr.bf16.mxu0 0
      %460 = vmatpush2.bf16.msra.mxu0 0
      %461 = vmatprep.subr.bf16.mxu0 0
      %462 = vmatpush2.bf16.msra.mxu0 0
      %463 = vmatprep.subr.bf16.mxu0 0
      %464 = vmatpush2.bf16.msra.mxu0 0
      %465 = vmatprep.subr.bf16.mxu0 0
      %466 = vmatpush2.bf16.msra.mxu0 0
      %467 = vmatprep.subr.bf16.mxu0 0
      %468 = vmatpush2.bf16.msra.mxu0 0
      %469 = vmatprep.subr.bf16.mxu0 0
      %470 = vmatpush2.bf16.msra.mxu0 0
      %471 = vmatprep.subr.bf16.mxu0 0
      %472 = vmatpush2.bf16.msra.mxu0 0
      %473 = vmatprep.subr.bf16.mxu0 0
      %474 = vmatpush2.bf16.msra.mxu0 0
      %475 = vmatprep.mubr.bf16.mxu0 0
      %476 = vmatmul.mubr.bf16.gmra.mxu0 %v416
      %v477 = vpop.f32.mrf.mxu0
      %v478 = vadd.f32 0.0, %v477
      %v479 = vpop.f32.mrf.mxu0
      %v480 = vpop.f32.mrf.mxu0
      %v481 = vadd.f32 0.0, %v480
      %v482 = vpop.f32.mrf.mxu0
      %483 = vmatprep.mubr.bf16.mxu0 0
      %484 = vmatmul.mubr.bf16.gmra.mxu0 %v419
      %v485 = vpop.f32.mrf.mxu0
      %v486 = vadd.f32 0.0, %v485
      %v487 = vpop.f32.mrf.mxu0
      %v488 = vpop.f32.mrf.mxu0
      %v489 = vadd.f32 0.0, %v488
      %v490 = vpop.f32.mrf.mxu0
      %491 = vmatprep.mubr.bf16.mxu0 0
      %492 = vmatmul.mubr.bf16.gmra.mxu0 %v422
      %v493 = vpop.f32.mrf.mxu0
      %v494 = vadd.f32 0.0, %v493
      %v495 = vpop.f32.mrf.mxu0
      %v496 = vpop.f32.mrf.mxu0
      %v497 = vadd.f32 0.0, %v496
      %v498 = vpop.f32.mrf.mxu0
      %499 = vmatprep.mubr.bf16.mxu0 0
      %500 = vmatmul.mubr.bf16.gmra.mxu0 %v425
      %v501 = vpop.f32.mrf.mxu0
      %v502 = vadd.f32 0.0, %v501
      %v503 = vpop.f32.mrf.mxu0
      %v504 = vpop.f32.mrf.mxu0
      %v505 = vadd.f32 0.0, %v504
      %v506 = vpop.f32.mrf.mxu0
      %507 = vmatprep.mubr.bf16.mxu0 0
      %508 = vmatmul.mubr.bf16.gmra.mxu0 %v428
      %v509 = vpop.f32.mrf.mxu0
      %v510 = vadd.f32 0.0, %v509
      %v511 = vpop.f32.mrf.mxu0
      %v512 = vpop.f32.mrf.mxu0
      %v513 = vadd.f32 0.0, %v512
      %v514 = vpop.f32.mrf.mxu0
      %515 = vmatprep.mubr.bf16.mxu0 0
      %516 = vmatmul.mubr.bf16.gmra.mxu0 %v431
      %v517 = vpop.f32.mrf.mxu0
      %v518 = vadd.f32 0.0, %v517
      %v519 = vpop.f32.mrf.mxu0
      %v520 = vpop.f32.mrf.mxu0
      %v521 = vadd.f32 0.0, %v520
      %v522 = vpop.f32.mrf.mxu0
      %523 = vmatprep.mubr.bf16.mxu0 0
      %524 = vmatmul.mubr.bf16.gmra.mxu0 %v434
      %v525 = vpop.f32.mrf.mxu0
      %v526 = vadd.f32 0.0, %v525
      %v527 = vpop.f32.mrf.mxu0
      %v528 = vpop.f32.mrf.mxu0
      %v529 = vadd.f32 0.0, %v528
      %v530 = vpop.f32.mrf.mxu0
      %531 = vmatprep.mubr.bf16.mxu0 0
      %532 = vmatmul.mubr.bf16.gmra.mxu0 %v437
      %v533 = vpop.f32.mrf.mxu0
      %v534 = vadd.f32 0.0, %v533
      %v535 = vpop.f32.mrf.mxu0
      %v536 = vpop.f32.mrf.mxu0
      %v537 = vadd.f32 0.0, %v536
      %v538 = vpop.f32.mrf.mxu0
      %539 = vdwg.mxu0
      %v556 = vunpack.c.l.b16 %v168
      %v557 = vunpack.c.l.b16 %v169
      %v558 = vunpack.c.l.b16 %v170
      %v559 = vunpack.c.l.b16 %v171
      %v560 = vunpack.c.l.b16 %v172
      %v561 = vunpack.c.l.b16 %v173
      %v562 = vunpack.c.l.b16 %v174
      %v563 = vunpack.c.l.b16 %v175
      %v564 = vunpack.c.l.b16 %v176
      %v565 = vunpack.c.l.b16 %v177
      %v566 = vunpack.c.l.b16 %v178
      %v567 = vunpack.c.l.b16 %v179
      %v568 = vunpack.c.l.b16 %v180
      %v569 = vunpack.c.l.b16 %v181
      %v570 = vunpack.c.l.b16 %v182
      %v571 = vunpack.c.l.b16 %v183
      %v572 = vpack.c.b16 %v557, %v556
      %v573 = vpack.c.b16 %v559, %v558
      %v574 = vpack.c.b16 %v561, %v560
      %v575 = vpack.c.b16 %v563, %v562
      %v576 = vpack.c.b16 %v565, %v564
      %v577 = vpack.c.b16 %v567, %v566
      %v578 = vpack.c.b16 %v569, %v568
      %v579 = vpack.c.b16 %v571, %v570
      %v581 = vsel %vm414, %v572, 0
      %v584 = vsel %vm414, %v573, 0
      %v587 = vsel %vm414, %v574, 0
      %v590 = vsel %vm414, %v575, 0
      %v593 = vsel %vm414, %v576, 0
      %v596 = vsel %vm414, %v577, 0
      %v599 = vsel %vm414, %v578, 0
      %v602 = vsel %vm414, %v579, 0
      %v605 = vsel %vm439, %v184, 0
      %607 = vmatprep.subr.bf16.mxu0 0
      %608 = vmatpush1.bf16.msra.mxu0 0
      %609 = vmatprep.subr.bf16.mxu0 0
      %610 = vmatpush1.bf16.msra.mxu0 0
      %611 = vmatprep.subr.bf16.mxu0 0
      %612 = vmatpush1.bf16.msra.mxu0 0
      %613 = vmatprep.subr.bf16.mxu0 0
      %614 = vmatpush1.bf16.msra.mxu0 0
      %615 = vmatprep.subr.bf16.mxu0 0
      %616 = vmatpush1.bf16.msra.mxu0 0
      %617 = vmatprep.subr.bf16.mxu0 0
      %618 = vmatpush1.bf16.msra.mxu0 0
      %619 = vmatprep.subr.bf16.mxu0 0
      %620 = vmatpush1.bf16.msra.mxu0 0
      %621 = vmatprep.subr.bf16.mxu0 0
      %622 = vmatpush1.bf16.msra.mxu0 %v605
      %623 = vmatprep.subr.bf16.mxu0 0
      %624 = vmatpush2.bf16.msra.mxu0 0
      %625 = vmatprep.subr.bf16.mxu0 0
      %626 = vmatpush2.bf16.msra.mxu0 0
      %627 = vmatprep.subr.bf16.mxu0 0
      %628 = vmatpush2.bf16.msra.mxu0 0
      %629 = vmatprep.subr.bf16.mxu0 0
      %630 = vmatpush2.bf16.msra.mxu0 0
      %631 = vmatprep.subr.bf16.mxu0 0
      %632 = vmatpush2.bf16.msra.mxu0 0
      %633 = vmatprep.subr.bf16.mxu0 0
      %634 = vmatpush2.bf16.msra.mxu0 0
      %635 = vmatprep.subr.bf16.mxu0 0
      %636 = vmatpush2.bf16.msra.mxu0 0
      %637 = vmatprep.subr.bf16.mxu0 0
      %638 = vmatpush2.bf16.msra.mxu0 0
      %639 = vmatprep.mubr.bf16.mxu0 0
      %640 = vmatmul.mubr.bf16.gmra.mxu0 %v581
      %v641 = vpop.f32.mrf.mxu0
      %v642 = vadd.f32 %v478, %v641
      %v643 = vpop.f32.mrf.mxu0
      %v644 = vpop.f32.mrf.mxu0
      %v645 = vadd.f32 %v481, %v644
      %v646 = vpop.f32.mrf.mxu0
      %647 = vmatprep.mubr.bf16.mxu0 0
      %648 = vmatmul.mubr.bf16.gmra.mxu0 %v584
      %v649 = vpop.f32.mrf.mxu0
      %v650 = vadd.f32 %v486, %v649
      %v651 = vpop.f32.mrf.mxu0
      %v652 = vpop.f32.mrf.mxu0
      %v653 = vadd.f32 %v489, %v652
      %v654 = vpop.f32.mrf.mxu0
      %655 = vmatprep.mubr.bf16.mxu0 0
      %656 = vmatmul.mubr.bf16.gmra.mxu0 %v587
      %v657 = vpop.f32.mrf.mxu0
      %v658 = vadd.f32 %v494, %v657
      %v659 = vpop.f32.mrf.mxu0
      %v660 = vpop.f32.mrf.mxu0
      %v661 = vadd.f32 %v497, %v660
      %v662 = vpop.f32.mrf.mxu0
      %663 = vmatprep.mubr.bf16.mxu0 0
      %664 = vmatmul.mubr.bf16.gmra.mxu0 %v590
      %v665 = vpop.f32.mrf.mxu0
      %v666 = vadd.f32 %v502, %v665
      %v667 = vpop.f32.mrf.mxu0
      %v668 = vpop.f32.mrf.mxu0
      %v669 = vadd.f32 %v505, %v668
      %v670 = vpop.f32.mrf.mxu0
      %671 = vmatprep.mubr.bf16.mxu0 0
      %672 = vmatmul.mubr.bf16.gmra.mxu0 %v593
      %v673 = vpop.f32.mrf.mxu0
      %v674 = vadd.f32 %v510, %v673
      %v675 = vpop.f32.mrf.mxu0
      %v676 = vpop.f32.mrf.mxu0
      %v677 = vadd.f32 %v513, %v676
      %v678 = vpop.f32.mrf.mxu0
      %679 = vmatprep.mubr.bf16.mxu0 0
      %680 = vmatmul.mubr.bf16.gmra.mxu0 %v596
      %v681 = vpop.f32.mrf.mxu0
      %v682 = vadd.f32 %v518, %v681
      %v683 = vpop.f32.mrf.mxu0
      %v684 = vpop.f32.mrf.mxu0
      %v685 = vadd.f32 %v521, %v684
      %v686 = vpop.f32.mrf.mxu0
      %687 = vmatprep.mubr.bf16.mxu0 0
      %688 = vmatmul.mubr.bf16.gmra.mxu0 %v599
      %v689 = vpop.f32.mrf.mxu0
      %v690 = vadd.f32 %v526, %v689
      %v691 = vpop.f32.mrf.mxu0
      %v692 = vpop.f32.mrf.mxu0
      %v693 = vadd.f32 %v529, %v692
      %v694 = vpop.f32.mrf.mxu0
      %695 = vmatprep.mubr.bf16.mxu0 0
      %696 = vmatmul.mubr.bf16.gmra.mxu0 %v602
      %v697 = vpop.f32.mrf.mxu0
      %v698 = vadd.f32 %v534, %v697
      %v699 = vpop.f32.mrf.mxu0
      %v700 = vpop.f32.mrf.mxu0
      %v701 = vadd.f32 %v537, %v700
      %v702 = vpop.f32.mrf.mxu0
      %703 = vdwg.mxu0
      %v704 = vld [vmem:[%s163] sm:$0xe]
      %v705 = vld [vmem:[%s163 + $0xc] sm:$0xe]
      %v706 = vld [vmem:[%s163 + $0x18] sm:$0xe]
      %v707 = vld [vmem:[%s163 + $0x24] sm:$0xe]
      %v708 = vld [vmem:[%s163 + $0x30] sm:$0xe]
      %v709 = vld [vmem:[%s163 + $0x3c] sm:$0xe]
      %v710 = vld [vmem:[%s163 + $0x48] sm:$0xe]
      %v711 = vld [vmem:[%s163 + $0x54] sm:$0xe]
      %vm728 = vcmask 1042432
      %vm729 = vcmask 1046532
      %vm730 = vmor %vm728, %vm729
      %v731 = vrot.slane %v704, 5
      %v732 = vrot.slane %v731, 4
      %v733 = vrot.slane %v169, 5
      %v734 = vsel %vm730, %v732, %v733
      %v735 = vrot.slane %v733, 4
      %v736 = vrot.slane %v185, 5
      %v737 = vsel %vm730, %v735, %v736
      %v738 = vrot.slane %v705, 5
      %v739 = vrot.slane %v738, 4
      %v740 = vrot.slane %v171, 5
      %v741 = vsel %vm730, %v739, %v740
      %v742 = vrot.slane %v740, 4
      %v743 = vrot.slane %v186, 5
      %v744 = vsel %vm730, %v742, %v743
      %v745 = vrot.slane %v706, 5
      %v746 = vrot.slane %v745, 4
      %v747 = vrot.slane %v173, 5
      %v748 = vsel %vm730, %v746, %v747
      %v749 = vrot.slane %v747, 4
      %v750 = vrot.slane %v187, 5
      %v751 = vsel %vm730, %v749, %v750
      %v752 = vrot.slane %v707, 5
      %v753 = vrot.slane %v752, 4
      %v754 = vrot.slane %v175, 5
      %v755 = vsel %vm730, %v753, %v754
      %v756 = vrot.slane %v754, 4
      %v757 = vrot.slane %v188, 5
      %v758 = vsel %vm730, %v756, %v757
      %v759 = vrot.slane %v708, 5
      %v760 = vrot.slane %v759, 4
      %v761 = vrot.slane %v177, 5
      %v762 = vsel %vm730, %v760, %v761
      %v763 = vrot.slane %v761, 4
      %v764 = vrot.slane %v189, 5
      %v765 = vsel %vm730, %v763, %v764
      %v766 = vrot.slane %v709, 5
      %v767 = vrot.slane %v766, 4
      %v768 = vrot.slane %v179, 5
      %v769 = vsel %vm730, %v767, %v768
      %v770 = vrot.slane %v768, 4
      %v771 = vrot.slane %v190, 5
      %v772 = vsel %vm730, %v770, %v771
      %v773 = vrot.slane %v710, 5
      %v774 = vrot.slane %v773, 4
      %v775 = vrot.slane %v181, 5
      %v776 = vsel %vm730, %v774, %v775
      %v777 = vrot.slane %v775, 4
      %v778 = vrot.slane %v191, 5
      %v779 = vsel %vm730, %v777, %v778
      %v780 = vrot.slane %v711, 5
      %v781 = vrot.slane %v780, 4
      %v782 = vrot.slane %v183, 5
      %v783 = vsel %vm730, %v781, %v782
      %v784 = vrot.slane %v782, 4
      %v785 = vrot.slane %v192, 5
      %v786 = vsel %vm730, %v784, %v785
      %s787 = scalar_lea.vmem %s1, 4
      %v788 = vld [vmem:[%s787] sm:$0x3]
      %v789 = vunpack.c.l.b16 %v734
      %v790 = vunpack.c.l.b16 %v737
      %v791 = vunpack.c.l.b16 %v741
      %v792 = vunpack.c.l.b16 %v744
      %v793 = vunpack.c.l.b16 %v748
      %v794 = vunpack.c.l.b16 %v751
      %v795 = vunpack.c.l.b16 %v755
      %v796 = vunpack.c.l.b16 %v758
      %v797 = vunpack.c.l.b16 %v762
      %v798 = vunpack.c.l.b16 %v765
      %v799 = vunpack.c.l.b16 %v769
      %v800 = vunpack.c.l.b16 %v772
      %v801 = vunpack.c.l.b16 %v776
      %v802 = vunpack.c.l.b16 %v779
      %v803 = vunpack.c.l.b16 %v783
      %v804 = vunpack.c.l.b16 %v786
      %v805 = vpack.c.b16 %v790, %v789
      %v806 = vpack.c.b16 %v792, %v791
      %v807 = vpack.c.b16 %v794, %v793
      %v808 = vpack.c.b16 %v796, %v795
      %v809 = vpack.c.b16 %v798, %v797
      %v810 = vpack.c.b16 %v800, %v799
      %v811 = vpack.c.b16 %v802, %v801
      %v812 = vpack.c.b16 %v804, %v803
      %v814 = vsel %vm414, %v805, 0
      %v817 = vsel %vm414, %v806, 0
      %v820 = vsel %vm414, %v807, 0
      %v823 = vsel %vm414, %v808, 0
      %v826 = vsel %vm414, %v809, 0
      %v829 = vsel %vm414, %v810, 0
      %v832 = vsel %vm414, %v811, 0
      %v835 = vsel %vm414, %v812, 0
      %v838 = vsel %vm439, %v788, 0
      %840 = vmatprep.subr.bf16.mxu0 0
      %841 = vmatpush1.bf16.msra.mxu0 0
      %842 = vmatprep.subr.bf16.mxu0 0
      %843 = vmatpush1.bf16.msra.mxu0 0
      %844 = vmatprep.subr.bf16.mxu0 0
      %845 = vmatpush1.bf16.msra.mxu0 0
      %846 = vmatprep.subr.bf16.mxu0 0
      %847 = vmatpush1.bf16.msra.mxu0 0
      %848 = vmatprep.subr.bf16.mxu0 0
      %849 = vmatpush1.bf16.msra.mxu0 0
      %850 = vmatprep.subr.bf16.mxu0 0
      %851 = vmatpush1.bf16.msra.mxu0 0
      %852 = vmatprep.subr.bf16.mxu0 0
      %853 = vmatpush1.bf16.msra.mxu0 0
      %854 = vmatprep.subr.bf16.mxu0 0
      %855 = vmatpush1.bf16.msra.mxu0 %v838
      %856 = vmatprep.subr.bf16.mxu0 0
      %857 = vmatpush2.bf16.msra.mxu0 0
      %858 = vmatprep.subr.bf16.mxu0 0
      %859 = vmatpush2.bf16.msra.mxu0 0
      %860 = vmatprep.subr.bf16.mxu0 0
      %861 = vmatpush2.bf16.msra.mxu0 0
      %862 = vmatprep.subr.bf16.mxu0 0
      %863 = vmatpush2.bf16.msra.mxu0 0
      %864 = vmatprep.subr.bf16.mxu0 0
      %865 = vmatpush2.bf16.msra.mxu0 0
      %866 = vmatprep.subr.bf16.mxu0 0
      %867 = vmatpush2.bf16.msra.mxu0 0
      %868 = vmatprep.subr.bf16.mxu0 0
      %869 = vmatpush2.bf16.msra.mxu0 0
      %870 = vmatprep.subr.bf16.mxu0 0
      %871 = vmatpush2.bf16.msra.mxu0 0
      %872 = vmatprep.mubr.bf16.mxu0 0
      %873 = vmatmul.mubr.bf16.gmra.mxu0 %v814
      %v874 = vpop.f32.mrf.mxu0
      %v875 = vadd.f32 0.0, %v874
      %v876 = vpop.f32.mrf.mxu0
      %v877 = vpop.f32.mrf.mxu0
      %v878 = vadd.f32 0.0, %v877
      %v879 = vpop.f32.mrf.mxu0
      %880 = vmatprep.mubr.bf16.mxu0 0
      %881 = vmatmul.mubr.bf16.gmra.mxu0 %v817
      %v882 = vpop.f32.mrf.mxu0
      %v883 = vadd.f32 0.0, %v882
      %v884 = vpop.f32.mrf.mxu0
      %v885 = vpop.f32.mrf.mxu0
      %v886 = vadd.f32 0.0, %v885
      %v887 = vpop.f32.mrf.mxu0
      %888 = vmatprep.mubr.bf16.mxu0 0
      %889 = vmatmul.mubr.bf16.gmra.mxu0 %v820
      %v890 = vpop.f32.mrf.mxu0
      %v891 = vadd.f32 0.0, %v890
      %v892 = vpop.f32.mrf.mxu0
      %v893 = vpop.f32.mrf.mxu0
      %v894 = vadd.f32 0.0, %v893
      %v895 = vpop.f32.mrf.mxu0
      %896 = vmatprep.mubr.bf16.mxu0 0
      %897 = vmatmul.mubr.bf16.gmra.mxu0 %v823
      %v898 = vpop.f32.mrf.mxu0
      %v899 = vadd.f32 0.0, %v898
      %v900 = vpop.f32.mrf.mxu0
      %v901 = vpop.f32.mrf.mxu0
      %v902 = vadd.f32 0.0, %v901
      %v903 = vpop.f32.mrf.mxu0
      %904 = vmatprep.mubr.bf16.mxu0 0
      %905 = vmatmul.mubr.bf16.gmra.mxu0 %v826
      %v906 = vpop.f32.mrf.mxu0
      %v907 = vadd.f32 0.0, %v906
      %v908 = vpop.f32.mrf.mxu0
      %v909 = vpop.f32.mrf.mxu0
      %v910 = vadd.f32 0.0, %v909
      %v911 = vpop.f32.mrf.mxu0
      %912 = vmatprep.mubr.bf16.mxu0 0
      %913 = vmatmul.mubr.bf16.gmra.mxu0 %v829
      %v914 = vpop.f32.mrf.mxu0
      %v915 = vadd.f32 0.0, %v914
      %v916 = vpop.f32.mrf.mxu0
      %v917 = vpop.f32.mrf.mxu0
      %v918 = vadd.f32 0.0, %v917
      %v919 = vpop.f32.mrf.mxu0
      %920 = vmatprep.mubr.bf16.mxu0 0
      %921 = vmatmul.mubr.bf16.gmra.mxu0 %v832
      %v922 = vpop.f32.mrf.mxu0
      %v923 = vadd.f32 0.0, %v922
      %v924 = vpop.f32.mrf.mxu0
      %v925 = vpop.f32.mrf.mxu0
      %v926 = vadd.f32 0.0, %v925
      %v927 = vpop.f32.mrf.mxu0
      %928 = vmatprep.mubr.bf16.mxu0 0
      %929 = vmatmul.mubr.bf16.gmra.mxu0 %v835
      %v930 = vpop.f32.mrf.mxu0
      %v931 = vadd.f32 0.0, %v930
      %v932 = vpop.f32.mrf.mxu0
      %v933 = vpop.f32.mrf.mxu0
      %v934 = vadd.f32 0.0, %v933
      %v935 = vpop.f32.mrf.mxu0
      %936 = vdwg.mxu0
      %v937 = vadd.f32 %v642, %v875
      %v938 = vadd.f32 %v645, %v878
      %v939 = vadd.f32 %v650, %v883
      %v940 = vadd.f32 %v653, %v886
      %v941 = vadd.f32 %v658, %v891
      %v942 = vadd.f32 %v661, %v894
      %v943 = vadd.f32 %v666, %v899
      %v944 = vadd.f32 %v669, %v902
      %v945 = vadd.f32 %v674, %v907
      %v946 = vadd.f32 %v677, %v910
      %v947 = vadd.f32 %v682, %v915
      %v948 = vadd.f32 %v685, %v918
      %v949 = vadd.f32 %v690, %v923
      %v950 = vadd.f32 %v693, %v926
      %v951 = vadd.f32 %v698, %v931
      %v952 = vadd.f32 %v701, %v934
      %s953 = scalar_lea.vmem %s163, 12
      %v954 = vld [vmem:[%s953] sm:$0xf]
      %v955 = vld [vmem:[%s953 + $0x4] sm:$0xf]
      %v956 = vld [vmem:[%s953 + $0xc] sm:$0xf]
      %v957 = vld [vmem:[%s953 + $0x10] sm:$0xf]
      %v958 = vld [vmem:[%s953 + $0x18] sm:$0xf]
      %v959 = vld [vmem:[%s953 + $0x1c] sm:$0xf]
      %v960 = vld [vmem:[%s953 + $0x24] sm:$0xf]
      %v961 = vld [vmem:[%s953 + $0x28] sm:$0xf]
      %v962 = vld [vmem:[%s953 + $0x30] sm:$0xf]
      %v963 = vld [vmem:[%s953 + $0x34] sm:$0xf]
      %v964 = vld [vmem:[%s953 + $0x3c] sm:$0xf]
      %v965 = vld [vmem:[%s953 + $0x40] sm:$0xf]
      %v966 = vld [vmem:[%s953 + $0x48] sm:$0xf]
      %v967 = vld [vmem:[%s953 + $0x4c] sm:$0xf]
      %v968 = vld [vmem:[%s953 + $0x54] sm:$0xf]
      %v969 = vld [vmem:[%s953 + $0x58] sm:$0xf]
      %s970 = scalar_lea.vmem %s1, 6
      %v971 = vld [vmem:[%s970] sm:$0x3]
      %v988 = vunpack.c.l.b16 %v954
      %v989 = vunpack.c.l.b16 %v955
      %v990 = vunpack.c.l.b16 %v956
      %v991 = vunpack.c.l.b16 %v957
      %v992 = vunpack.c.l.b16 %v958
      %v993 = vunpack.c.l.b16 %v959
      %v994 = vunpack.c.l.b16 %v960
      %v995 = vunpack.c.l.b16 %v961
      %v996 = vunpack.c.l.b16 %v962
      %v997 = vunpack.c.l.b16 %v963
      %v998 = vunpack.c.l.b16 %v964
      %v999 = vunpack.c.l.b16 %v965
      %v1000 = vunpack.c.l.b16 %v966
      %v1001 = vunpack.c.l.b16 %v967
      %v1002 = vunpack.c.l.b16 %v968
      %v1003 = vunpack.c.l.b16 %v969
      %v1004 = vpack.c.b16 %v989, %v988
      %v1005 = vpack.c.b16 %v991, %v990
      %v1006 = vpack.c.b16 %v993, %v992
      %v1007 = vpack.c.b16 %v995, %v994
      %v1008 = vpack.c.b16 %v997, %v996
      %v1009 = vpack.c.b16 %v999, %v998
      %v1010 = vpack.c.b16 %v1001, %v1000
      %v1011 = vpack.c.b16 %v1003, %v1002
      %v1013 = vsel %vm414, %v1004, 0
      %v1016 = vsel %vm414, %v1005, 0
      %v1019 = vsel %vm414, %v1006, 0
      %v1022 = vsel %vm414, %v1007, 0
      %v1025 = vsel %vm414, %v1008, 0
      %v1028 = vsel %vm414, %v1009, 0
      %v1031 = vsel %vm414, %v1010, 0
      %v1034 = vsel %vm414, %v1011, 0
      %v1037 = vsel %vm439, %v971, 0
      %1039 = vmatprep.subr.bf16.mxu0 0
      %1040 = vmatpush1.bf16.msra.mxu0 0
      %1041 = vmatprep.subr.bf16.mxu0 0
      %1042 = vmatpush1.bf16.msra.mxu0 0
      %1043 = vmatprep.subr.bf16.mxu0 0
      %1044 = vmatpush1.bf16.msra.mxu0 0
      %1045 = vmatprep.subr.bf16.mxu0 0
      %1046 = vmatpush1.bf16.msra.mxu0 0
      %1047 = vmatprep.subr.bf16.mxu0 0
      %1048 = vmatpush1.bf16.msra.mxu0 0
      %1049 = vmatprep.subr.bf16.mxu0 0
      %1050 = vmatpush1.bf16.msra.mxu0 0
      %1051 = vmatprep.subr.bf16.mxu0 0
      %1052 = vmatpush1.bf16.msra.mxu0 0
      %1053 = vmatprep.subr.bf16.mxu0 0
      %1054 = vmatpush1.bf16.msra.mxu0 %v1037
      %1055 = vmatprep.subr.bf16.mxu0 0
      %1056 = vmatpush2.bf16.msra.mxu0 0
      %1057 = vmatprep.subr.bf16.mxu0 0
      %1058 = vmatpush2.bf16.msra.mxu0 0
      %1059 = vmatprep.subr.bf16.mxu0 0
      %1060 = vmatpush2.bf16.msra.mxu0 0
      %1061 = vmatprep.subr.bf16.mxu0 0
      %1062 = vmatpush2.bf16.msra.mxu0 0
      %1063 = vmatprep.subr.bf16.mxu0 0
      %1064 = vmatpush2.bf16.msra.mxu0 0
      %1065 = vmatprep.subr.bf16.mxu0 0
      %1066 = vmatpush2.bf16.msra.mxu0 0
      %1067 = vmatprep.subr.bf16.mxu0 0
      %1068 = vmatpush2.bf16.msra.mxu0 0
      %1069 = vmatprep.subr.bf16.mxu0 0
      %1070 = vmatpush2.bf16.msra.mxu0 0
      %1071 = vmatprep.mubr.bf16.mxu0 0
      %1072 = vmatmul.mubr.bf16.gmra.mxu0 %v1013
      %v1073 = vpop.f32.mrf.mxu0
      %v1074 = vadd.f32 0.0, %v1073
      %v1075 = vpop.f32.mrf.mxu0
      %v1076 = vpop.f32.mrf.mxu0
      %v1077 = vadd.f32 0.0, %v1076
      %v1078 = vpop.f32.mrf.mxu0
      %1079 = vmatprep.mubr.bf16.mxu0 0
      %1080 = vmatmul.mubr.bf16.gmra.mxu0 %v1016
      %v1081 = vpop.f32.mrf.mxu0
      %v1082 = vadd.f32 0.0, %v1081
      %v1083 = vpop.f32.mrf.mxu0
      %v1084 = vpop.f32.mrf.mxu0
      %v1085 = vadd.f32 0.0, %v1084
      %v1086 = vpop.f32.mrf.mxu0
      %1087 = vmatprep.mubr.bf16.mxu0 0
      %1088 = vmatmul.mubr.bf16.gmra.mxu0 %v1019
      %v1089 = vpop.f32.mrf.mxu0
      %v1090 = vadd.f32 0.0, %v1089
      %v1091 = vpop.f32.mrf.mxu0
      %v1092 = vpop.f32.mrf.mxu0
      %v1093 = vadd.f32 0.0, %v1092
      %v1094 = vpop.f32.mrf.mxu0
      %1095 = vmatprep.mubr.bf16.mxu0 0
      %1096 = vmatmul.mubr.bf16.gmra.mxu0 %v1022
      %v1097 = vpop.f32.mrf.mxu0
      %v1098 = vadd.f32 0.0, %v1097
      %v1099 = vpop.f32.mrf.mxu0
      %v1100 = vpop.f32.mrf.mxu0
      %v1101 = vadd.f32 0.0, %v1100
      %v1102 = vpop.f32.mrf.mxu0
      %1103 = vmatprep.mubr.bf16.mxu0 0
      %1104 = vmatmul.mubr.bf16.gmra.mxu0 %v1025
      %v1105 = vpop.f32.mrf.mxu0
      %v1106 = vadd.f32 0.0, %v1105
      %v1107 = vpop.f32.mrf.mxu0
      %v1108 = vpop.f32.mrf.mxu0
      %v1109 = vadd.f32 0.0, %v1108
      %v1110 = vpop.f32.mrf.mxu0
      %1111 = vmatprep.mubr.bf16.mxu0 0
      %1112 = vmatmul.mubr.bf16.gmra.mxu0 %v1028
      %v1113 = vpop.f32.mrf.mxu0
      %v1114 = vadd.f32 0.0, %v1113
      %v1115 = vpop.f32.mrf.mxu0
      %v1116 = vpop.f32.mrf.mxu0
      %v1117 = vadd.f32 0.0, %v1116
      %v1118 = vpop.f32.mrf.mxu0
      %1119 = vmatprep.mubr.bf16.mxu0 0
      %1120 = vmatmul.mubr.bf16.gmra.mxu0 %v1031
      %v1121 = vpop.f32.mrf.mxu0
      %v1122 = vadd.f32 0.0, %v1121
      %v1123 = vpop.f32.mrf.mxu0
      %v1124 = vpop.f32.mrf.mxu0
      %v1125 = vadd.f32 0.0, %v1124
      %v1126 = vpop.f32.mrf.mxu0
      %1127 = vmatprep.mubr.bf16.mxu0 0
      %1128 = vmatmul.mubr.bf16.gmra.mxu0 %v1034
      %v1129 = vpop.f32.mrf.mxu0
      %v1130 = vadd.f32 0.0, %v1129
      %v1131 = vpop.f32.mrf.mxu0
      %v1132 = vpop.f32.mrf.mxu0
      %v1133 = vadd.f32 0.0, %v1132
      %v1134 = vpop.f32.mrf.mxu0
      %1135 = vdwg.mxu0
      %v1136 = vadd.f32 %v937, %v1074
      %v1137 = vadd.f32 %v938, %v1077
      %v1138 = vadd.f32 %v939, %v1082
      %v1139 = vadd.f32 %v940, %v1085
      %v1140 = vadd.f32 %v941, %v1090
      %v1141 = vadd.f32 %v942, %v1093
      %v1142 = vadd.f32 %v943, %v1098
      %v1143 = vadd.f32 %v944, %v1101
      %v1144 = vadd.f32 %v945, %v1106
      %v1145 = vadd.f32 %v946, %v1109
      %v1146 = vadd.f32 %v947, %v1114
      %v1147 = vadd.f32 %v948, %v1117
      %v1148 = vadd.f32 %v949, %v1122
      %v1149 = vadd.f32 %v950, %v1125
      %v1150 = vadd.f32 %v951, %v1130
      %v1151 = vadd.f32 %v952, %v1133
      %v1152 = vld [vmem:[%s953] sm:$0xf]
      %v1153 = vld [vmem:[%s953 + $0x4] sm:$0xf]
      %v1154 = vld [vmem:[%s953 + $0x8] sm:$0x1]
      %v1155 = vld [vmem:[%s953 + $0xc] sm:$0xf]
      %v1156 = vld [vmem:[%s953 + $0x10] sm:$0xf]
      %v1157 = vld [vmem:[%s953 + $0x14] sm:$0x1]
      %v1158 = vld [vmem:[%s953 + $0x18] sm:$0xf]
      %v1159 = vld [vmem:[%s953 + $0x1c] sm:$0xf]
      %v1160 = vld [vmem:[%s953 + $0x20] sm:$0x1]
      %v1161 = vld [vmem:[%s953 + $0x24] sm:$0xf]
      %v1162 = vld [vmem:[%s953 + $0x28] sm:$0xf]
      %v1163 = vld [vmem:[%s953 + $0x2c] sm:$0x1]
      %v1164 = vld [vmem:[%s953 + $0x30] sm:$0xf]
      %v1165 = vld [vmem:[%s953 + $0x34] sm:$0xf]
      %v1166 = vld [vmem:[%s953 + $0x38] sm:$0x1]
      %v1167 = vld [vmem:[%s953 + $0x3c] sm:$0xf]
      %v1168 = vld [vmem:[%s953 + $0x40] sm:$0xf]
      %v1169 = vld [vmem:[%s953 + $0x44] sm:$0x1]
      %v1170 = vld [vmem:[%s953 + $0x48] sm:$0xf]
      %v1171 = vld [vmem:[%s953 + $0x4c] sm:$0xf]
      %v1172 = vld [vmem:[%s953 + $0x50] sm:$0x1]
      %v1173 = vld [vmem:[%s953 + $0x54] sm:$0xf]
      %v1174 = vld [vmem:[%s953 + $0x58] sm:$0xf]
      %v1175 = vld [vmem:[%s953 + $0x5c] sm:$0x1]
      %v1177 = vshrl.u32 %v1152, 16
      %v1179 = vrot.slane %v1177, 4
      %v1180 = vshll.u32 %v1152, 16
      %v1182 = vrot.slane %v1180, 5
      %v1183 = vor.u32 %v1179, %v1182
      %v1184 = vrot.slane %v1183, 4
      %v1186 = vshll.u32 %v1153, 16
      %v1188 = vrot.slane %v1186, 5
      %v1189 = vsel %vm195, %v1184, %v1188
      %v1190 = vshrl.u32 %v1153, 16
      %v1192 = vrot.slane %v1190, 4
      %v1193 = vor.u32 %v1192, %v1188
      %v1194 = vrot.slane %v1193, 4
      %v1196 = vshll.u32 %v1154, 16
      %v1198 = vrot.slane %v1196, 5
      %v1199 = vsel %vm195, %v1194, %v1198
      %v1201 = vshrl.u32 %v1155, 16
      %v1203 = vrot.slane %v1201, 4
      %v1204 = vshll.u32 %v1155, 16
      %v1206 = vrot.slane %v1204, 5
      %v1207 = vor.u32 %v1203, %v1206
      %v1208 = vrot.slane %v1207, 4
      %v1210 = vshll.u32 %v1156, 16
      %v1212 = vrot.slane %v1210, 5
      %v1213 = vsel %vm195, %v1208, %v1212
      %v1214 = vshrl.u32 %v1156, 16
      %v1216 = vrot.slane %v1214, 4
      %v1217 = vor.u32 %v1216, %v1212
      %v1218 = vrot.slane %v1217, 4
      %v1220 = vshll.u32 %v1157, 16
      %v1222 = vrot.slane %v1220, 5
      %v1223 = vsel %vm195, %v1218, %v1222
      %v1225 = vshrl.u32 %v1158, 16
      %v1227 = vrot.slane %v1225, 4
      %v1228 = vshll.u32 %v1158, 16
      %v1230 = vrot.slane %v1228, 5
      %v1231 = vor.u32 %v1227, %v1230
      %v1232 = vrot.slane %v1231, 4
      %v1234 = vshll.u32 %v1159, 16
      %v1236 = vrot.slane %v1234, 5
      %v1237 = vsel %vm195, %v1232, %v1236
      %v1238 = vshrl.u32 %v1159, 16
      %v1240 = vrot.slane %v1238, 4
      %v1241 = vor.u32 %v1240, %v1236
      %v1242 = vrot.slane %v1241, 4
      %v1244 = vshll.u32 %v1160, 16
      %v1246 = vrot.slane %v1244, 5
      %v1247 = vsel %vm195, %v1242, %v1246
      %v1249 = vshrl.u32 %v1161, 16
      %v1251 = vrot.slane %v1249, 4
      %v1252 = vshll.u32 %v1161, 16
      %v1254 = vrot.slane %v1252, 5
      %v1255 = vor.u32 %v1251, %v1254
      %v1256 = vrot.slane %v1255, 4
      %v1258 = vshll.u32 %v1162, 16
      %v1260 = vrot.slane %v1258, 5
      %v1261 = vsel %vm195, %v1256, %v1260
      %v1262 = vshrl.u32 %v1162, 16
      %v1264 = vrot.slane %v1262, 4
      %v1265 = vor.u32 %v1264, %v1260
      %v1266 = vrot.slane %v1265, 4
      %v1268 = vshll.u32 %v1163, 16
      %v1270 = vrot.slane %v1268, 5
      %v1271 = vsel %vm195, %v1266, %v1270
      %v1273 = vshrl.u32 %v1164, 16
      %v1275 = vrot.slane %v1273, 4
      %v1276 = vshll.u32 %v1164, 16
      %v1278 = vrot.slane %v1276, 5
      %v1279 = vor.u32 %v1275, %v1278
      %v1280 = vrot.slane %v1279, 4
      %v1282 = vshll.u32 %v1165, 16
      %v1284 = vrot.slane %v1282, 5
      %v1285 = vsel %vm195, %v1280, %v1284
      %v1286 = vshrl.u32 %v1165, 16
      %v1288 = vrot.slane %v1286, 4
      %v1289 = vor.u32 %v1288, %v1284
      %v1290 = vrot.slane %v1289, 4
      %v1292 = vshll.u32 %v1166, 16
      %v1294 = vrot.slane %v1292, 5
      %v1295 = vsel %vm195, %v1290, %v1294
      %v1297 = vshrl.u32 %v1167, 16
      %v1299 = vrot.slane %v1297, 4
      %v1300 = vshll.u32 %v1167, 16
      %v1302 = vrot.slane %v1300, 5
      %v1303 = vor.u32 %v1299, %v1302
      %v1304 = vrot.slane %v1303, 4
      %v1306 = vshll.u32 %v1168, 16
      %v1308 = vrot.slane %v1306, 5
      %v1309 = vsel %vm195, %v1304, %v1308
      %v1310 = vshrl.u32 %v1168, 16
      %v1312 = vrot.slane %v1310, 4
      %v1313 = vor.u32 %v1312, %v1308
      %v1314 = vrot.slane %v1313, 4
      %v1316 = vshll.u32 %v1169, 16
      %v1318 = vrot.slane %v1316, 5
      %v1319 = vsel %vm195, %v1314, %v1318
      %v1321 = vshrl.u32 %v1170, 16
      %v1323 = vrot.slane %v1321, 4
      %v1324 = vshll.u32 %v1170, 16
      %v1326 = vrot.slane %v1324, 5
      %v1327 = vor.u32 %v1323, %v1326
      %v1328 = vrot.slane %v1327, 4
      %v1330 = vshll.u32 %v1171, 16
      %v1332 = vrot.slane %v1330, 5
      %v1333 = vsel %vm195, %v1328, %v1332
      %v1334 = vshrl.u32 %v1171, 16
      %v1336 = vrot.slane %v1334, 4
      %v1337 = vor.u32 %v1336, %v1332
      %v1338 = vrot.slane %v1337, 4
      %v1340 = vshll.u32 %v1172, 16
      %v1342 = vrot.slane %v1340, 5
      %v1343 = vsel %vm195, %v1338, %v1342
      %v1345 = vshrl.u32 %v1173, 16
      %v1347 = vrot.slane %v1345, 4
      %v1348 = vshll.u32 %v1173, 16
      %v1350 = vrot.slane %v1348, 5
      %v1351 = vor.u32 %v1347, %v1350
      %v1352 = vrot.slane %v1351, 4
      %v1354 = vshll.u32 %v1174, 16
      %v1356 = vrot.slane %v1354, 5
      %v1357 = vsel %vm195, %v1352, %v1356
      %v1358 = vshrl.u32 %v1174, 16
      %v1360 = vrot.slane %v1358, 4
      %v1361 = vor.u32 %v1360, %v1356
      %v1362 = vrot.slane %v1361, 4
      %v1364 = vshll.u32 %v1175, 16
      %v1366 = vrot.slane %v1364, 5
      %v1367 = vsel %vm195, %v1362, %v1366
      %s1368 = scalar_lea.vmem %s1, 8
      %v1369 = vld [vmem:[%s1368] sm:$0x3]
      %v1370 = vunpack.c.l.b16 %v1189
      %v1371 = vunpack.c.l.b16 %v1199
      %v1372 = vunpack.c.l.b16 %v1213
      %v1373 = vunpack.c.l.b16 %v1223
      %v1374 = vunpack.c.l.b16 %v1237
      %v1375 = vunpack.c.l.b16 %v1247
      %v1376 = vunpack.c.l.b16 %v1261
      %v1377 = vunpack.c.l.b16 %v1271
      %v1378 = vunpack.c.l.b16 %v1285
      %v1379 = vunpack.c.l.b16 %v1295
      %v1380 = vunpack.c.l.b16 %v1309
      %v1381 = vunpack.c.l.b16 %v1319
      %v1382 = vunpack.c.l.b16 %v1333
      %v1383 = vunpack.c.l.b16 %v1343
      %v1384 = vunpack.c.l.b16 %v1357
      %v1385 = vunpack.c.l.b16 %v1367
      %v1386 = vpack.c.b16 %v1371, %v1370
      %v1387 = vpack.c.b16 %v1373, %v1372
      %v1388 = vpack.c.b16 %v1375, %v1374
      %v1389 = vpack.c.b16 %v1377, %v1376
      %v1390 = vpack.c.b16 %v1379, %v1378
      %v1391 = vpack.c.b16 %v1381, %v1380
      %v1392 = vpack.c.b16 %v1383, %v1382
      %v1393 = vpack.c.b16 %v1385, %v1384
      %v1395 = vsel %vm414, %v1386, 0
      %v1398 = vsel %vm414, %v1387, 0
      %v1401 = vsel %vm414, %v1388, 0
      %v1404 = vsel %vm414, %v1389, 0
      %v1407 = vsel %vm414, %v1390, 0
      %v1410 = vsel %vm414, %v1391, 0
      %v1413 = vsel %vm414, %v1392, 0
      %v1416 = vsel %vm414, %v1393, 0
      %v1419 = vsel %vm439, %v1369, 0
      %1421 = vmatprep.subr.bf16.mxu0 0
      %1422 = vmatpush1.bf16.msra.mxu0 0
      %1423 = vmatprep.subr.bf16.mxu0 0
      %1424 = vmatpush1.bf16.msra.mxu0 0
      %1425 = vmatprep.subr.bf16.mxu0 0
      %1426 = vmatpush1.bf16.msra.mxu0 0
      %1427 = vmatprep.subr.bf16.mxu0 0
      %1428 = vmatpush1.bf16.msra.mxu0 0
      %1429 = vmatprep.subr.bf16.mxu0 0
      %1430 = vmatpush1.bf16.msra.mxu0 0
      %1431 = vmatprep.subr.bf16.mxu0 0
      %1432 = vmatpush1.bf16.msra.mxu0 0
      %1433 = vmatprep.subr.bf16.mxu0 0
      %1434 = vmatpush1.bf16.msra.mxu0 0
      %1435 = vmatprep.subr.bf16.mxu0 0
      %1436 = vmatpush1.bf16.msra.mxu0 %v1419
      %1437 = vmatprep.subr.bf16.mxu0 0
      %1438 = vmatpush2.bf16.msra.mxu0 0
      %1439 = vmatprep.subr.bf16.mxu0 0
      %1440 = vmatpush2.bf16.msra.mxu0 0
      %1441 = vmatprep.subr.bf16.mxu0 0
      %1442 = vmatpush2.bf16.msra.mxu0 0
      %1443 = vmatprep.subr.bf16.mxu0 0
      %1444 = vmatpush2.bf16.msra.mxu0 0
      %1445 = vmatprep.subr.bf16.mxu0 0
      %1446 = vmatpush2.bf16.msra.mxu0 0
      %1447 = vmatprep.subr.bf16.mxu0 0
      %1448 = vmatpush2.bf16.msra.mxu0 0
      %1449 = vmatprep.subr.bf16.mxu0 0
      %1450 = vmatpush2.bf16.msra.mxu0 0
      %1451 = vmatprep.subr.bf16.mxu0 0
      %1452 = vmatpush2.bf16.msra.mxu0 0
      %1453 = vmatprep.mubr.bf16.mxu0 0
      %1454 = vmatmul.mubr.bf16.gmra.mxu0 %v1395
      %v1455 = vpop.f32.mrf.mxu0
      %v1456 = vadd.f32 0.0, %v1455
      %v1457 = vpop.f32.mrf.mxu0
      %v1458 = vpop.f32.mrf.mxu0
      %v1459 = vadd.f32 0.0, %v1458
      %v1460 = vpop.f32.mrf.mxu0
      %1461 = vmatprep.mubr.bf16.mxu0 0
      %1462 = vmatmul.mubr.bf16.gmra.mxu0 %v1398
      %v1463 = vpop.f32.mrf.mxu0
      %v1464 = vadd.f32 0.0, %v1463
      %v1465 = vpop.f32.mrf.mxu0
      %v1466 = vpop.f32.mrf.mxu0
      %v1467 = vadd.f32 0.0, %v1466
      %v1468 = vpop.f32.mrf.mxu0
      %1469 = vmatprep.mubr.bf16.mxu0 0
      %1470 = vmatmul.mubr.bf16.gmra.mxu0 %v1401
      %v1471 = vpop.f32.mrf.mxu0
      %v1472 = vadd.f32 0.0, %v1471
      %v1473 = vpop.f32.mrf.mxu0
      %v1474 = vpop.f32.mrf.mxu0
      %v1475 = vadd.f32 0.0, %v1474
      %v1476 = vpop.f32.mrf.mxu0
      %1477 = vmatprep.mubr.bf16.mxu0 0
      %1478 = vmatmul.mubr.bf16.gmra.mxu0 %v1404
      %v1479 = vpop.f32.mrf.mxu0
      %v1480 = vadd.f32 0.0, %v1479
      %v1481 = vpop.f32.mrf.mxu0
      %v1482 = vpop.f32.mrf.mxu0
      %v1483 = vadd.f32 0.0, %v1482
      %v1484 = vpop.f32.mrf.mxu0
      %1485 = vmatprep.mubr.bf16.mxu0 0
      %1486 = vmatmul.mubr.bf16.gmra.mxu0 %v1407
      %v1487 = vpop.f32.mrf.mxu0
      %v1488 = vadd.f32 0.0, %v1487
      %v1489 = vpop.f32.mrf.mxu0
      %v1490 = vpop.f32.mrf.mxu0
      %v1491 = vadd.f32 0.0, %v1490
      %v1492 = vpop.f32.mrf.mxu0
      %1493 = vmatprep.mubr.bf16.mxu0 0
      %1494 = vmatmul.mubr.bf16.gmra.mxu0 %v1410
      %v1495 = vpop.f32.mrf.mxu0
      %v1496 = vadd.f32 0.0, %v1495
      %v1497 = vpop.f32.mrf.mxu0
      %v1498 = vpop.f32.mrf.mxu0
      %v1499 = vadd.f32 0.0, %v1498
      %v1500 = vpop.f32.mrf.mxu0
      %1501 = vmatprep.mubr.bf16.mxu0 0
      %1502 = vmatmul.mubr.bf16.gmra.mxu0 %v1413
      %v1503 = vpop.f32.mrf.mxu0
      %v1504 = vadd.f32 0.0, %v1503
      %v1505 = vpop.f32.mrf.mxu0
      %v1506 = vpop.f32.mrf.mxu0
      %v1507 = vadd.f32 0.0, %v1506
      %v1508 = vpop.f32.mrf.mxu0
      %1509 = vmatprep.mubr.bf16.mxu0 0
      %1510 = vmatmul.mubr.bf16.gmra.mxu0 %v1416
      %v1511 = vpop.f32.mrf.mxu0
      %v1512 = vadd.f32 0.0, %v1511
      %v1513 = vpop.f32.mrf.mxu0
      %v1514 = vpop.f32.mrf.mxu0
      %v1515 = vadd.f32 0.0, %v1514
      %v1516 = vpop.f32.mrf.mxu0
      %1517 = vdwg.mxu0
      %v1518 = vadd.f32 %v1136, %v1456
      %v1519 = vadd.f32 %v1137, %v1459
      %v1520 = vadd.f32 %v1138, %v1464
      %v1521 = vadd.f32 %v1139, %v1467
      %v1522 = vadd.f32 %v1140, %v1472
      %v1523 = vadd.f32 %v1141, %v1475
      %v1524 = vadd.f32 %v1142, %v1480
      %v1525 = vadd.f32 %v1143, %v1483
      %v1526 = vadd.f32 %v1144, %v1488
      %v1527 = vadd.f32 %v1145, %v1491
      %v1528 = vadd.f32 %v1146, %v1496
      %v1529 = vadd.f32 %v1147, %v1499
      %v1530 = vadd.f32 %v1148, %v1504
      %v1531 = vadd.f32 %v1149, %v1507
      %v1532 = vadd.f32 %v1150, %v1512
      %v1533 = vadd.f32 %v1151, %v1515
      %v1534 = vld [vmem:[%s953] sm:$0xe]
      %v1535 = vld [vmem:[%s953 + $0xc] sm:$0xe]
      %v1536 = vld [vmem:[%s953 + $0x18] sm:$0xe]
      %v1537 = vld [vmem:[%s953 + $0x24] sm:$0xe]
      %v1538 = vld [vmem:[%s953 + $0x30] sm:$0xe]
      %v1539 = vld [vmem:[%s953 + $0x3c] sm:$0xe]
      %v1540 = vld [vmem:[%s953 + $0x48] sm:$0xe]
      %v1541 = vld [vmem:[%s953 + $0x54] sm:$0xe]
      %v1566 = vrot.slane %v1534, 5
      %v1567 = vrot.slane %v1566, 4
      %v1568 = vrot.slane %v1153, 5
      %v1569 = vsel %vm730, %v1567, %v1568
      %v1570 = vrot.slane %v1568, 4
      %v1571 = vrot.slane %v1154, 5
      %v1572 = vsel %vm730, %v1570, %v1571
      %v1573 = vrot.slane %v1535, 5
      %v1574 = vrot.slane %v1573, 4
      %v1575 = vrot.slane %v1156, 5
      %v1576 = vsel %vm730, %v1574, %v1575
      %v1577 = vrot.slane %v1575, 4
      %v1578 = vrot.slane %v1157, 5
      %v1579 = vsel %vm730, %v1577, %v1578
      %v1580 = vrot.slane %v1536, 5
      %v1581 = vrot.slane %v1580, 4
      %v1582 = vrot.slane %v1159, 5
      %v1583 = vsel %vm730, %v1581, %v1582
      %v1584 = vrot.slane %v1582, 4
      %v1585 = vrot.slane %v1160, 5
      %v1586 = vsel %vm730, %v1584, %v1585
      %v1587 = vrot.slane %v1537, 5
      %v1588 = vrot.slane %v1587, 4
      %v1589 = vrot.slane %v1162, 5
      %v1590 = vsel %vm730, %v1588, %v1589
      %v1591 = vrot.slane %v1589, 4
      %v1592 = vrot.slane %v1163, 5
      %v1593 = vsel %vm730, %v1591, %v1592
      %v1594 = vrot.slane %v1538, 5
      %v1595 = vrot.slane %v1594, 4
      %v1596 = vrot.slane %v1165, 5
      %v1597 = vsel %vm730, %v1595, %v1596
      %v1598 = vrot.slane %v1596, 4
      %v1599 = vrot.slane %v1166, 5
      %v1600 = vsel %vm730, %v1598, %v1599
      %v1601 = vrot.slane %v1539, 5
      %v1602 = vrot.slane %v1601, 4
      %v1603 = vrot.slane %v1168, 5
      %v1604 = vsel %vm730, %v1602, %v1603
      %v1605 = vrot.slane %v1603, 4
      %v1606 = vrot.slane %v1169, 5
      %v1607 = vsel %vm730, %v1605, %v1606
      %v1608 = vrot.slane %v1540, 5
      %v1609 = vrot.slane %v1608, 4
      %v1610 = vrot.slane %v1171, 5
      %v1611 = vsel %vm730, %v1609, %v1610
      %v1612 = vrot.slane %v1610, 4
      %v1613 = vrot.slane %v1172, 5
      %v1614 = vsel %vm730, %v1612, %v1613
      %v1615 = vrot.slane %v1541, 5
      %v1616 = vrot.slane %v1615, 4
      %v1617 = vrot.slane %v1174, 5
      %v1618 = vsel %vm730, %v1616, %v1617
      %v1619 = vrot.slane %v1617, 4
      %v1620 = vrot.slane %v1175, 5
      %v1621 = vsel %vm730, %v1619, %v1620
      %s1622 = scalar_lea.vmem %s1, 10
      %v1623 = vld [vmem:[%s1622] sm:$0x3]
      %v1624 = vunpack.c.l.b16 %v1569
      %v1625 = vunpack.c.l.b16 %v1572
      %v1626 = vunpack.c.l.b16 %v1576
      %v1627 = vunpack.c.l.b16 %v1579
      %v1628 = vunpack.c.l.b16 %v1583
      %v1629 = vunpack.c.l.b16 %v1586
      %v1630 = vunpack.c.l.b16 %v1590
      %v1631 = vunpack.c.l.b16 %v1593
      %v1632 = vunpack.c.l.b16 %v1597
      %v1633 = vunpack.c.l.b16 %v1600
      %v1634 = vunpack.c.l.b16 %v1604
      %v1635 = vunpack.c.l.b16 %v1607
      %v1636 = vunpack.c.l.b16 %v1611
      %v1637 = vunpack.c.l.b16 %v1614
      %v1638 = vunpack.c.l.b16 %v1618
      %v1639 = vunpack.c.l.b16 %v1621
      %v1640 = vpack.c.b16 %v1625, %v1624
      %v1641 = vpack.c.b16 %v1627, %v1626
      %v1642 = vpack.c.b16 %v1629, %v1628
      %v1643 = vpack.c.b16 %v1631, %v1630
      %v1644 = vpack.c.b16 %v1633, %v1632
      %v1645 = vpack.c.b16 %v1635, %v1634
      %v1646 = vpack.c.b16 %v1637, %v1636
      %v1647 = vpack.c.b16 %v1639, %v1638
      %v1649 = vsel %vm414, %v1640, 0
      %v1652 = vsel %vm414, %v1641, 0
      %v1655 = vsel %vm414, %v1642, 0
      %v1658 = vsel %vm414, %v1643, 0
      %v1661 = vsel %vm414, %v1644, 0
      %v1664 = vsel %vm414, %v1645, 0
      %v1667 = vsel %vm414, %v1646, 0
      %v1670 = vsel %vm414, %v1647, 0
      %v1673 = vsel %vm439, %v1623, 0
      %1675 = vmatprep.subr.bf16.mxu0 0
      %1676 = vmatpush1.bf16.msra.mxu0 0
      %1677 = vmatprep.subr.bf16.mxu0 0
      %1678 = vmatpush1.bf16.msra.mxu0 0
      %1679 = vmatprep.subr.bf16.mxu0 0
      %1680 = vmatpush1.bf16.msra.mxu0 0
      %1681 = vmatprep.subr.bf16.mxu0 0
      %1682 = vmatpush1.bf16.msra.mxu0 0
      %1683 = vmatprep.subr.bf16.mxu0 0
      %1684 = vmatpush1.bf16.msra.mxu0 0
      %1685 = vmatprep.subr.bf16.mxu0 0
      %1686 = vmatpush1.bf16.msra.mxu0 0
      %1687 = vmatprep.subr.bf16.mxu0 0
      %1688 = vmatpush1.bf16.msra.mxu0 0
      %1689 = vmatprep.subr.bf16.mxu0 0
      %1690 = vmatpush1.bf16.msra.mxu0 %v1673
      %1691 = vmatprep.subr.bf16.mxu0 0
      %1692 = vmatpush2.bf16.msra.mxu0 0
      %1693 = vmatprep.subr.bf16.mxu0 0
      %1694 = vmatpush2.bf16.msra.mxu0 0
      %1695 = vmatprep.subr.bf16.mxu0 0
      %1696 = vmatpush2.bf16.msra.mxu0 0
      %1697 = vmatprep.subr.bf16.mxu0 0
      %1698 = vmatpush2.bf16.msra.mxu0 0
      %1699 = vmatprep.subr.bf16.mxu0 0
      %1700 = vmatpush2.bf16.msra.mxu0 0
      %1701 = vmatprep.subr.bf16.mxu0 0
      %1702 = vmatpush2.bf16.msra.mxu0 0
      %1703 = vmatprep.subr.bf16.mxu0 0
      %1704 = vmatpush2.bf16.msra.mxu0 0
      %1705 = vmatprep.subr.bf16.mxu0 0
      %1706 = vmatpush2.bf16.msra.mxu0 0
      %1707 = vmatprep.mubr.bf16.mxu0 0
      %1708 = vmatmul.mubr.bf16.gmra.mxu0 %v1649
      %v1709 = vpop.f32.mrf.mxu0
      %v1710 = vadd.f32 0.0, %v1709
      %v1711 = vpop.f32.mrf.mxu0
      %v1712 = vpop.f32.mrf.mxu0
      %v1713 = vadd.f32 0.0, %v1712
      %v1714 = vpop.f32.mrf.mxu0
      %1715 = vmatprep.mubr.bf16.mxu0 0
      %1716 = vmatmul.mubr.bf16.gmra.mxu0 %v1652
      %v1717 = vpop.f32.mrf.mxu0
      %v1718 = vadd.f32 0.0, %v1717
      %v1719 = vpop.f32.mrf.mxu0
      %v1720 = vpop.f32.mrf.mxu0
      %v1721 = vadd.f32 0.0, %v1720
      %v1722 = vpop.f32.mrf.mxu0
      %1723 = vmatprep.mubr.bf16.mxu0 0
      %1724 = vmatmul.mubr.bf16.gmra.mxu0 %v1655
      %v1725 = vpop.f32.mrf.mxu0
      %v1726 = vadd.f32 0.0, %v1725
      %v1727 = vpop.f32.mrf.mxu0
      %v1728 = vpop.f32.mrf.mxu0
      %v1729 = vadd.f32 0.0, %v1728
      %v1730 = vpop.f32.mrf.mxu0
      %1731 = vmatprep.mubr.bf16.mxu0 0
      %1732 = vmatmul.mubr.bf16.gmra.mxu0 %v1658
      %v1733 = vpop.f32.mrf.mxu0
      %v1734 = vadd.f32 0.0, %v1733
      %v1735 = vpop.f32.mrf.mxu0
      %v1736 = vpop.f32.mrf.mxu0
      %v1737 = vadd.f32 0.0, %v1736
      %v1738 = vpop.f32.mrf.mxu0
      %1739 = vmatprep.mubr.bf16.mxu0 0
      %1740 = vmatmul.mubr.bf16.gmra.mxu0 %v1661
      %v1741 = vpop.f32.mrf.mxu0
      %v1742 = vadd.f32 0.0, %v1741
      %v1743 = vpop.f32.mrf.mxu0
      %v1744 = vpop.f32.mrf.mxu0
      %v1745 = vadd.f32 0.0, %v1744
      %v1746 = vpop.f32.mrf.mxu0
      %1747 = vmatprep.mubr.bf16.mxu0 0
      %1748 = vmatmul.mubr.bf16.gmra.mxu0 %v1664
      %v1749 = vpop.f32.mrf.mxu0
      %v1750 = vadd.f32 0.0, %v1749
      %v1751 = vpop.f32.mrf.mxu0
      %v1752 = vpop.f32.mrf.mxu0
      %v1753 = vadd.f32 0.0, %v1752
      %v1754 = vpop.f32.mrf.mxu0
      %1755 = vmatprep.mubr.bf16.mxu0 0
      %1756 = vmatmul.mubr.bf16.gmra.mxu0 %v1667
      %v1757 = vpop.f32.mrf.mxu0
      %v1758 = vadd.f32 0.0, %v1757
      %v1759 = vpop.f32.mrf.mxu0
      %v1760 = vpop.f32.mrf.mxu0
      %v1761 = vadd.f32 0.0, %v1760
      %v1762 = vpop.f32.mrf.mxu0
      %1763 = vmatprep.mubr.bf16.mxu0 0
      %1764 = vmatmul.mubr.bf16.gmra.mxu0 %v1670
      %v1765 = vpop.f32.mrf.mxu0
      %v1766 = vadd.f32 0.0, %v1765
      %v1767 = vpop.f32.mrf.mxu0
      %v1768 = vpop.f32.mrf.mxu0
      %v1769 = vadd.f32 0.0, %v1768
      %v1770 = vpop.f32.mrf.mxu0
      %1771 = vdwg.mxu0
      %v1772 = vadd.f32 %v1518, %v1710
      %v1773 = vadd.f32 %v1519, %v1713
      %v1774 = vadd.f32 %v1520, %v1718
      %v1775 = vadd.f32 %v1521, %v1721
      %v1776 = vadd.f32 %v1522, %v1726
      %v1777 = vadd.f32 %v1523, %v1729
      %v1778 = vadd.f32 %v1524, %v1734
      %v1779 = vadd.f32 %v1525, %v1737
      %v1780 = vadd.f32 %v1526, %v1742
      %v1781 = vadd.f32 %v1527, %v1745
      %v1782 = vadd.f32 %v1528, %v1750
      %v1783 = vadd.f32 %v1529, %v1753
      %v1784 = vadd.f32 %v1530, %v1758
      %v1785 = vadd.f32 %v1531, %v1761
      %v1786 = vadd.f32 %v1532, %v1766
      %v1787 = vadd.f32 %v1533, %v1769
      %s1788 = scalar_lea.vmem %s163, 24
      %v1789 = vld [vmem:[%s1788] sm:$0xf]
      %v1790 = vld [vmem:[%s1788 + $0x4] sm:$0xf]
      %v1791 = vld [vmem:[%s1788 + $0xc] sm:$0xf]
      %v1792 = vld [vmem:[%s1788 + $0x10] sm:$0xf]
      %v1793 = vld [vmem:[%s1788 + $0x18] sm:$0xf]
      %v1794 = vld [vmem:[%s1788 + $0x1c] sm:$0xf]
      %v1795 = vld [vmem:[%s1788 + $0x24] sm:$0xf]
      %v1796 = vld [vmem:[%s1788 + $0x28] sm:$0xf]
      %v1797 = vld [vmem:[%s1788 + $0x30] sm:$0xf]
      %v1798 = vld [vmem:[%s1788 + $0x34] sm:$0xf]
      %v1799 = vld [vmem:[%s1788 + $0x3c] sm:$0xf]
      %v1800 = vld [vmem:[%s1788 + $0x40] sm:$0xf]
      %v1801 = vld [vmem:[%s1788 + $0x48] sm:$0xf]
      %v1802 = vld [vmem:[%s1788 + $0x4c] sm:$0xf]
      %v1803 = vld [vmem:[%s1788 + $0x54] sm:$0xf]
      %v1804 = vld [vmem:[%s1788 + $0x58] sm:$0xf]
      %s1805 = scalar_lea.vmem %s1, 12
      %v1806 = vld [vmem:[%s1805] sm:$0x3]
      %v1823 = vunpack.c.l.b16 %v1789
      %v1824 = vunpack.c.l.b16 %v1790
      %v1825 = vunpack.c.l.b16 %v1791
      %v1826 = vunpack.c.l.b16 %v1792
      %v1827 = vunpack.c.l.b16 %v1793
      %v1828 = vunpack.c.l.b16 %v1794
      %v1829 = vunpack.c.l.b16 %v1795
      %v1830 = vunpack.c.l.b16 %v1796
      %v1831 = vunpack.c.l.b16 %v1797
      %v1832 = vunpack.c.l.b16 %v1798
      %v1833 = vunpack.c.l.b16 %v1799
      %v1834 = vunpack.c.l.b16 %v1800
      %v1835 = vunpack.c.l.b16 %v1801
      %v1836 = vunpack.c.l.b16 %v1802
      %v1837 = vunpack.c.l.b16 %v1803
      %v1838 = vunpack.c.l.b16 %v1804
      %v1839 = vpack.c.b16 %v1824, %v1823
      %v1840 = vpack.c.b16 %v1826, %v1825
      %v1841 = vpack.c.b16 %v1828, %v1827
      %v1842 = vpack.c.b16 %v1830, %v1829
      %v1843 = vpack.c.b16 %v1832, %v1831
      %v1844 = vpack.c.b16 %v1834, %v1833
      %v1845 = vpack.c.b16 %v1836, %v1835
      %v1846 = vpack.c.b16 %v1838, %v1837
      %v1848 = vsel %vm414, %v1839, 0
      %v1851 = vsel %vm414, %v1840, 0
      %v1854 = vsel %vm414, %v1841, 0
      %v1857 = vsel %vm414, %v1842, 0
      %v1860 = vsel %vm414, %v1843, 0
      %v1863 = vsel %vm414, %v1844, 0
      %v1866 = vsel %vm414, %v1845, 0
      %v1869 = vsel %vm414, %v1846, 0
      %v1872 = vsel %vm439, %v1806, 0
      %1874 = vmatprep.subr.bf16.mxu0 0
      %1875 = vmatpush1.bf16.msra.mxu0 0
      %1876 = vmatprep.subr.bf16.mxu0 0
      %1877 = vmatpush1.bf16.msra.mxu0 0
      %1878 = vmatprep.subr.bf16.mxu0 0
      %1879 = vmatpush1.bf16.msra.mxu0 0
      %1880 = vmatprep.subr.bf16.mxu0 0
      %1881 = vmatpush1.bf16.msra.mxu0 0
      %1882 = vmatprep.subr.bf16.mxu0 0
      %1883 = vmatpush1.bf16.msra.mxu0 0
      %1884 = vmatprep.subr.bf16.mxu0 0
      %1885 = vmatpush1.bf16.msra.mxu0 0
      %1886 = vmatprep.subr.bf16.mxu0 0
      %1887 = vmatpush1.bf16.msra.mxu0 0
      %1888 = vmatprep.subr.bf16.mxu0 0
      %1889 = vmatpush1.bf16.msra.mxu0 %v1872
      %1890 = vmatprep.subr.bf16.mxu0 0
      %1891 = vmatpush2.bf16.msra.mxu0 0
      %1892 = vmatprep.subr.bf16.mxu0 0
      %1893 = vmatpush2.bf16.msra.mxu0 0
      %1894 = vmatprep.subr.bf16.mxu0 0
      %1895 = vmatpush2.bf16.msra.mxu0 0
      %1896 = vmatprep.subr.bf16.mxu0 0
      %1897 = vmatpush2.bf16.msra.mxu0 0
      %1898 = vmatprep.subr.bf16.mxu0 0
      %1899 = vmatpush2.bf16.msra.mxu0 0
      %1900 = vmatprep.subr.bf16.mxu0 0
      %1901 = vmatpush2.bf16.msra.mxu0 0
      %1902 = vmatprep.subr.bf16.mxu0 0
      %1903 = vmatpush2.bf16.msra.mxu0 0
      %1904 = vmatprep.subr.bf16.mxu0 0
      %1905 = vmatpush2.bf16.msra.mxu0 0
      %1906 = vmatprep.mubr.bf16.mxu0 0
      %1907 = vmatmul.mubr.bf16.gmra.mxu0 %v1848
      %v1908 = vpop.f32.mrf.mxu0
      %v1909 = vadd.f32 0.0, %v1908
      %v1910 = vpop.f32.mrf.mxu0
      %v1911 = vpop.f32.mrf.mxu0
      %v1912 = vadd.f32 0.0, %v1911
      %v1913 = vpop.f32.mrf.mxu0
      %1914 = vmatprep.mubr.bf16.mxu0 0
      %1915 = vmatmul.mubr.bf16.gmra.mxu0 %v1851
      %v1916 = vpop.f32.mrf.mxu0
      %v1917 = vadd.f32 0.0, %v1916
      %v1918 = vpop.f32.mrf.mxu0
      %v1919 = vpop.f32.mrf.mxu0
      %v1920 = vadd.f32 0.0, %v1919
      %v1921 = vpop.f32.mrf.mxu0
      %1922 = vmatprep.mubr.bf16.mxu0 0
      %1923 = vmatmul.mubr.bf16.gmra.mxu0 %v1854
      %v1924 = vpop.f32.mrf.mxu0
      %v1925 = vadd.f32 0.0, %v1924
      %v1926 = vpop.f32.mrf.mxu0
      %v1927 = vpop.f32.mrf.mxu0
      %v1928 = vadd.f32 0.0, %v1927
      %v1929 = vpop.f32.mrf.mxu0
      %1930 = vmatprep.mubr.bf16.mxu0 0
      %1931 = vmatmul.mubr.bf16.gmra.mxu0 %v1857
      %v1932 = vpop.f32.mrf.mxu0
      %v1933 = vadd.f32 0.0, %v1932
      %v1934 = vpop.f32.mrf.mxu0
      %v1935 = vpop.f32.mrf.mxu0
      %v1936 = vadd.f32 0.0, %v1935
      %v1937 = vpop.f32.mrf.mxu0
      %1938 = vmatprep.mubr.bf16.mxu0 0
      %1939 = vmatmul.mubr.bf16.gmra.mxu0 %v1860
      %v1940 = vpop.f32.mrf.mxu0
      %v1941 = vadd.f32 0.0, %v1940
      %v1942 = vpop.f32.mrf.mxu0
      %v1943 = vpop.f32.mrf.mxu0
      %v1944 = vadd.f32 0.0, %v1943
      %v1945 = vpop.f32.mrf.mxu0
      %1946 = vmatprep.mubr.bf16.mxu0 0
      %1947 = vmatmul.mubr.bf16.gmra.mxu0 %v1863
      %v1948 = vpop.f32.mrf.mxu0
      %v1949 = vadd.f32 0.0, %v1948
      %v1950 = vpop.f32.mrf.mxu0
      %v1951 = vpop.f32.mrf.mxu0
      %v1952 = vadd.f32 0.0, %v1951
      %v1953 = vpop.f32.mrf.mxu0
      %1954 = vmatprep.mubr.bf16.mxu0 0
      %1955 = vmatmul.mubr.bf16.gmra.mxu0 %v1866
      %v1956 = vpop.f32.mrf.mxu0
      %v1957 = vadd.f32 0.0, %v1956
      %v1958 = vpop.f32.mrf.mxu0
      %v1959 = vpop.f32.mrf.mxu0
      %v1960 = vadd.f32 0.0, %v1959
      %v1961 = vpop.f32.mrf.mxu0
      %1962 = vmatprep.mubr.bf16.mxu0 0
      %1963 = vmatmul.mubr.bf16.gmra.mxu0 %v1869
      %v1964 = vpop.f32.mrf.mxu0
      %v1965 = vadd.f32 0.0, %v1964
      %v1966 = vpop.f32.mrf.mxu0
      %v1967 = vpop.f32.mrf.mxu0
      %v1968 = vadd.f32 0.0, %v1967
      %v1969 = vpop.f32.mrf.mxu0
      %1970 = vdwg.mxu0
      %v1971 = vadd.f32 %v1772, %v1909
      %v1972 = vadd.f32 %v1773, %v1912
      %v1973 = vadd.f32 %v1774, %v1917
      %v1974 = vadd.f32 %v1775, %v1920
      %v1975 = vadd.f32 %v1776, %v1925
      %v1976 = vadd.f32 %v1777, %v1928
      %v1977 = vadd.f32 %v1778, %v1933
      %v1978 = vadd.f32 %v1779, %v1936
      %v1979 = vadd.f32 %v1780, %v1941
      %v1980 = vadd.f32 %v1781, %v1944
      %v1981 = vadd.f32 %v1782, %v1949
      %v1982 = vadd.f32 %v1783, %v1952
      %v1983 = vadd.f32 %v1784, %v1957
      %v1984 = vadd.f32 %v1785, %v1960
      %v1985 = vadd.f32 %v1786, %v1965
      %v1986 = vadd.f32 %v1787, %v1968
      %v1987 = vld [vmem:[%s1788] sm:$0xf]
      %v1988 = vld [vmem:[%s1788 + $0x4] sm:$0xf]
      %v1989 = vld [vmem:[%s1788 + $0x8] sm:$0x1]
      %v1990 = vld [vmem:[%s1788 + $0xc] sm:$0xf]
      %v1991 = vld [vmem:[%s1788 + $0x10] sm:$0xf]
      %v1992 = vld [vmem:[%s1788 + $0x14] sm:$0x1]
      %v1993 = vld [vmem:[%s1788 + $0x18] sm:$0xf]
      %v1994 = vld [vmem:[%s1788 + $0x1c] sm:$0xf]
      %v1995 = vld [vmem:[%s1788 + $0x20] sm:$0x1]
      %v1996 = vld [vmem:[%s1788 + $0x24] sm:$0xf]
      %v1997 = vld [vmem:[%s1788 + $0x28] sm:$0xf]
      %v1998 = vld [vmem:[%s1788 + $0x2c] sm:$0x1]
      %v1999 = vld [vmem:[%s1788 + $0x30] sm:$0xf]
      %v2000 = vld [vmem:[%s1788 + $0x34] sm:$0xf]
      %v2001 = vld [vmem:[%s1788 + $0x38] sm:$0x1]
      %v2002 = vld [vmem:[%s1788 + $0x3c] sm:$0xf]
      %v2003 = vld [vmem:[%s1788 + $0x40] sm:$0xf]
      %v2004 = vld [vmem:[%s1788 + $0x44] sm:$0x1]
      %v2005 = vld [vmem:[%s1788 + $0x48] sm:$0xf]
      %v2006 = vld [vmem:[%s1788 + $0x4c] sm:$0xf]
      %v2007 = vld [vmem:[%s1788 + $0x50] sm:$0x1]
      %v2008 = vld [vmem:[%s1788 + $0x54] sm:$0xf]
      %v2009 = vld [vmem:[%s1788 + $0x58] sm:$0xf]
      %v2010 = vld [vmem:[%s1788 + $0x5c] sm:$0x1]
      %v2012 = vshrl.u32 %v1987, 16
      %v2014 = vrot.slane %v2012, 4
      %v2015 = vshll.u32 %v1987, 16
      %v2017 = vrot.slane %v2015, 5
      %v2018 = vor.u32 %v2014, %v2017
      %v2019 = vrot.slane %v2018, 4
      %v2021 = vshll.u32 %v1988, 16
      %v2023 = vrot.slane %v2021, 5
      %v2024 = vsel %vm195, %v2019, %v2023
      %v2025 = vshrl.u32 %v1988, 16
      %v2027 = vrot.slane %v2025, 4
      %v2028 = vor.u32 %v2027, %v2023
      %v2029 = vrot.slane %v2028, 4
      %v2031 = vshll.u32 %v1989, 16
      %v2033 = vrot.slane %v2031, 5
      %v2034 = vsel %vm195, %v2029, %v2033
      %v2036 = vshrl.u32 %v1990, 16
      %v2038 = vrot.slane %v2036, 4
      %v2039 = vshll.u32 %v1990, 16
      %v2041 = vrot.slane %v2039, 5
      %v2042 = vor.u32 %v2038, %v2041
      %v2043 = vrot.slane %v2042, 4
      %v2045 = vshll.u32 %v1991, 16
      %v2047 = vrot.slane %v2045, 5
      %v2048 = vsel %vm195, %v2043, %v2047
      %v2049 = vshrl.u32 %v1991, 16
      %v2051 = vrot.slane %v2049, 4
      %v2052 = vor.u32 %v2051, %v2047
      %v2053 = vrot.slane %v2052, 4
      %v2055 = vshll.u32 %v1992, 16
      %v2057 = vrot.slane %v2055, 5
      %v2058 = vsel %vm195, %v2053, %v2057
      %v2060 = vshrl.u32 %v1993, 16
      %v2062 = vrot.slane %v2060, 4
      %v2063 = vshll.u32 %v1993, 16
      %v2065 = vrot.slane %v2063, 5
      %v2066 = vor.u32 %v2062, %v2065
      %v2067 = vrot.slane %v2066, 4
      %v2069 = vshll.u32 %v1994, 16
      %v2071 = vrot.slane %v2069, 5
      %v2072 = vsel %vm195, %v2067, %v2071
      %v2073 = vshrl.u32 %v1994, 16
      %v2075 = vrot.slane %v2073, 4
      %v2076 = vor.u32 %v2075, %v2071
      %v2077 = vrot.slane %v2076, 4
      %v2079 = vshll.u32 %v1995, 16
      %v2081 = vrot.slane %v2079, 5
      %v2082 = vsel %vm195, %v2077, %v2081
      %v2084 = vshrl.u32 %v1996, 16
      %v2086 = vrot.slane %v2084, 4
      %v2087 = vshll.u32 %v1996, 16
      %v2089 = vrot.slane %v2087, 5
      %v2090 = vor.u32 %v2086, %v2089
      %v2091 = vrot.slane %v2090, 4
      %v2093 = vshll.u32 %v1997, 16
      %v2095 = vrot.slane %v2093, 5
      %v2096 = vsel %vm195, %v2091, %v2095
      %v2097 = vshrl.u32 %v1997, 16
      %v2099 = vrot.slane %v2097, 4
      %v2100 = vor.u32 %v2099, %v2095
      %v2101 = vrot.slane %v2100, 4
      %v2103 = vshll.u32 %v1998, 16
      %v2105 = vrot.slane %v2103, 5
      %v2106 = vsel %vm195, %v2101, %v2105
      %v2108 = vshrl.u32 %v1999, 16
      %v2110 = vrot.slane %v2108, 4
      %v2111 = vshll.u32 %v1999, 16
      %v2113 = vrot.slane %v2111, 5
      %v2114 = vor.u32 %v2110, %v2113
      %v2115 = vrot.slane %v2114, 4
      %v2117 = vshll.u32 %v2000, 16
      %v2119 = vrot.slane %v2117, 5
      %v2120 = vsel %vm195, %v2115, %v2119
      %v2121 = vshrl.u32 %v2000, 16
      %v2123 = vrot.slane %v2121, 4
      %v2124 = vor.u32 %v2123, %v2119
      %v2125 = vrot.slane %v2124, 4
      %v2127 = vshll.u32 %v2001, 16
      %v2129 = vrot.slane %v2127, 5
      %v2130 = vsel %vm195, %v2125, %v2129
      %v2132 = vshrl.u32 %v2002, 16
      %v2134 = vrot.slane %v2132, 4
      %v2135 = vshll.u32 %v2002, 16
      %v2137 = vrot.slane %v2135, 5
      %v2138 = vor.u32 %v2134, %v2137
      %v2139 = vrot.slane %v2138, 4
      %v2141 = vshll.u32 %v2003, 16
      %v2143 = vrot.slane %v2141, 5
      %v2144 = vsel %vm195, %v2139, %v2143
      %v2145 = vshrl.u32 %v2003, 16
      %v2147 = vrot.slane %v2145, 4
      %v2148 = vor.u32 %v2147, %v2143
      %v2149 = vrot.slane %v2148, 4
      %v2151 = vshll.u32 %v2004, 16
      %v2153 = vrot.slane %v2151, 5
      %v2154 = vsel %vm195, %v2149, %v2153
      %v2156 = vshrl.u32 %v2005, 16
      %v2158 = vrot.slane %v2156, 4
      %v2159 = vshll.u32 %v2005, 16
      %v2161 = vrot.slane %v2159, 5
      %v2162 = vor.u32 %v2158, %v2161
      %v2163 = vrot.slane %v2162, 4
      %v2165 = vshll.u32 %v2006, 16
      %v2167 = vrot.slane %v2165, 5
      %v2168 = vsel %vm195, %v2163, %v2167
      %v2169 = vshrl.u32 %v2006, 16
      %v2171 = vrot.slane %v2169, 4
      %v2172 = vor.u32 %v2171, %v2167
      %v2173 = vrot.slane %v2172, 4
      %v2175 = vshll.u32 %v2007, 16
      %v2177 = vrot.slane %v2175, 5
      %v2178 = vsel %vm195, %v2173, %v2177
      %v2180 = vshrl.u32 %v2008, 16
      %v2182 = vrot.slane %v2180, 4
      %v2183 = vshll.u32 %v2008, 16
      %v2185 = vrot.slane %v2183, 5
      %v2186 = vor.u32 %v2182, %v2185
      %v2187 = vrot.slane %v2186, 4
      %v2189 = vshll.u32 %v2009, 16
      %v2191 = vrot.slane %v2189, 5
      %v2192 = vsel %vm195, %v2187, %v2191
      %v2193 = vshrl.u32 %v2009, 16
      %v2195 = vrot.slane %v2193, 4
      %v2196 = vor.u32 %v2195, %v2191
      %v2197 = vrot.slane %v2196, 4
      %v2199 = vshll.u32 %v2010, 16
      %v2201 = vrot.slane %v2199, 5
      %v2202 = vsel %vm195, %v2197, %v2201
      %s2203 = scalar_lea.vmem %s1, 14
      %v2204 = vld [vmem:[%s2203] sm:$0x3]
      %v2205 = vunpack.c.l.b16 %v2024
      %v2206 = vunpack.c.l.b16 %v2034
      %v2207 = vunpack.c.l.b16 %v2048
      %v2208 = vunpack.c.l.b16 %v2058
      %v2209 = vunpack.c.l.b16 %v2072
      %v2210 = vunpack.c.l.b16 %v2082
      %v2211 = vunpack.c.l.b16 %v2096
      %v2212 = vunpack.c.l.b16 %v2106
      %v2213 = vunpack.c.l.b16 %v2120
      %v2214 = vunpack.c.l.b16 %v2130
      %v2215 = vunpack.c.l.b16 %v2144
      %v2216 = vunpack.c.l.b16 %v2154
      %v2217 = vunpack.c.l.b16 %v2168
      %v2218 = vunpack.c.l.b16 %v2178
      %v2219 = vunpack.c.l.b16 %v2192
      %v2220 = vunpack.c.l.b16 %v2202
      %v2221 = vpack.c.b16 %v2206, %v2205
      %v2222 = vpack.c.b16 %v2208, %v2207
      %v2223 = vpack.c.b16 %v2210, %v2209
      %v2224 = vpack.c.b16 %v2212, %v2211
      %v2225 = vpack.c.b16 %v2214, %v2213
      %v2226 = vpack.c.b16 %v2216, %v2215
      %v2227 = vpack.c.b16 %v2218, %v2217
      %v2228 = vpack.c.b16 %v2220, %v2219
      %v2230 = vsel %vm414, %v2221, 0
      %v2233 = vsel %vm414, %v2222, 0
      %v2236 = vsel %vm414, %v2223, 0
      %v2239 = vsel %vm414, %v2224, 0
      %v2242 = vsel %vm414, %v2225, 0
      %v2245 = vsel %vm414, %v2226, 0
      %v2248 = vsel %vm414, %v2227, 0
      %v2251 = vsel %vm414, %v2228, 0
      %v2254 = vsel %vm439, %v2204, 0
      %2256 = vmatprep.subr.bf16.mxu0 0
      %2257 = vmatpush1.bf16.msra.mxu0 0
      %2258 = vmatprep.subr.bf16.mxu0 0
      %2259 = vmatpush1.bf16.msra.mxu0 0
      %2260 = vmatprep.subr.bf16.mxu0 0
      %2261 = vmatpush1.bf16.msra.mxu0 0
      %2262 = vmatprep.subr.bf16.mxu0 0
      %2263 = vmatpush1.bf16.msra.mxu0 0
      %2264 = vmatprep.subr.bf16.mxu0 0
      %2265 = vmatpush1.bf16.msra.mxu0 0
      %2266 = vmatprep.subr.bf16.mxu0 0
      %2267 = vmatpush1.bf16.msra.mxu0 0
      %2268 = vmatprep.subr.bf16.mxu0 0
      %2269 = vmatpush1.bf16.msra.mxu0 0
      %2270 = vmatprep.subr.bf16.mxu0 0
      %2271 = vmatpush1.bf16.msra.mxu0 %v2254
      %2272 = vmatprep.subr.bf16.mxu0 0
      %2273 = vmatpush2.bf16.msra.mxu0 0
      %2274 = vmatprep.subr.bf16.mxu0 0
      %2275 = vmatpush2.bf16.msra.mxu0 0
      %2276 = vmatprep.subr.bf16.mxu0 0
      %2277 = vmatpush2.bf16.msra.mxu0 0
      %2278 = vmatprep.subr.bf16.mxu0 0
      %2279 = vmatpush2.bf16.msra.mxu0 0
      %2280 = vmatprep.subr.bf16.mxu0 0
      %2281 = vmatpush2.bf16.msra.mxu0 0
      %2282 = vmatprep.subr.bf16.mxu0 0
      %2283 = vmatpush2.bf16.msra.mxu0 0
      %2284 = vmatprep.subr.bf16.mxu0 0
      %2285 = vmatpush2.bf16.msra.mxu0 0
      %2286 = vmatprep.subr.bf16.mxu0 0
      %2287 = vmatpush2.bf16.msra.mxu0 0
      %2288 = vmatprep.mubr.bf16.mxu0 0
      %2289 = vmatmul.mubr.bf16.gmra.mxu0 %v2230
      %v2290 = vpop.f32.mrf.mxu0
      %v2291 = vadd.f32 0.0, %v2290
      %v2292 = vpop.f32.mrf.mxu0
      %v2293 = vpop.f32.mrf.mxu0
      %v2294 = vadd.f32 0.0, %v2293
      %v2295 = vpop.f32.mrf.mxu0
      %2296 = vmatprep.mubr.bf16.mxu0 0
      %2297 = vmatmul.mubr.bf16.gmra.mxu0 %v2233
      %v2298 = vpop.f32.mrf.mxu0
      %v2299 = vadd.f32 0.0, %v2298
      %v2300 = vpop.f32.mrf.mxu0
      %v2301 = vpop.f32.mrf.mxu0
      %v2302 = vadd.f32 0.0, %v2301
      %v2303 = vpop.f32.mrf.mxu0
      %2304 = vmatprep.mubr.bf16.mxu0 0
      %2305 = vmatmul.mubr.bf16.gmra.mxu0 %v2236
      %v2306 = vpop.f32.mrf.mxu0
      %v2307 = vadd.f32 0.0, %v2306
      %v2308 = vpop.f32.mrf.mxu0
      %v2309 = vpop.f32.mrf.mxu0
      %v2310 = vadd.f32 0.0, %v2309
      %v2311 = vpop.f32.mrf.mxu0
      %2312 = vmatprep.mubr.bf16.mxu0 0
      %2313 = vmatmul.mubr.bf16.gmra.mxu0 %v2239
      %v2314 = vpop.f32.mrf.mxu0
      %v2315 = vadd.f32 0.0, %v2314
      %v2316 = vpop.f32.mrf.mxu0
      %v2317 = vpop.f32.mrf.mxu0
      %v2318 = vadd.f32 0.0, %v2317
      %v2319 = vpop.f32.mrf.mxu0
      %2320 = vmatprep.mubr.bf16.mxu0 0
      %2321 = vmatmul.mubr.bf16.gmra.mxu0 %v2242
      %v2322 = vpop.f32.mrf.mxu0
      %v2323 = vadd.f32 0.0, %v2322
      %v2324 = vpop.f32.mrf.mxu0
      %v2325 = vpop.f32.mrf.mxu0
      %v2326 = vadd.f32 0.0, %v2325
      %v2327 = vpop.f32.mrf.mxu0
      %2328 = vmatprep.mubr.bf16.mxu0 0
      %2329 = vmatmul.mubr.bf16.gmra.mxu0 %v2245
      %v2330 = vpop.f32.mrf.mxu0
      %v2331 = vadd.f32 0.0, %v2330
      %v2332 = vpop.f32.mrf.mxu0
      %v2333 = vpop.f32.mrf.mxu0
      %v2334 = vadd.f32 0.0, %v2333
      %v2335 = vpop.f32.mrf.mxu0
      %2336 = vmatprep.mubr.bf16.mxu0 0
      %2337 = vmatmul.mubr.bf16.gmra.mxu0 %v2248
      %v2338 = vpop.f32.mrf.mxu0
      %v2339 = vadd.f32 0.0, %v2338
      %v2340 = vpop.f32.mrf.mxu0
      %v2341 = vpop.f32.mrf.mxu0
      %v2342 = vadd.f32 0.0, %v2341
      %v2343 = vpop.f32.mrf.mxu0
      %2344 = vmatprep.mubr.bf16.mxu0 0
      %2345 = vmatmul.mubr.bf16.gmra.mxu0 %v2251
      %v2346 = vpop.f32.mrf.mxu0
      %v2347 = vadd.f32 0.0, %v2346
      %v2348 = vpop.f32.mrf.mxu0
      %v2349 = vpop.f32.mrf.mxu0
      %v2350 = vadd.f32 0.0, %v2349
      %v2351 = vpop.f32.mrf.mxu0
      %2352 = vdwg.mxu0
      %v2353 = vadd.f32 %v1971, %v2291
      %v2354 = vadd.f32 %v1972, %v2294
      %v2355 = vadd.f32 %v1973, %v2299
      %v2356 = vadd.f32 %v1974, %v2302
      %v2357 = vadd.f32 %v1975, %v2307
      %v2358 = vadd.f32 %v1976, %v2310
      %v2359 = vadd.f32 %v1977, %v2315
      %v2360 = vadd.f32 %v1978, %v2318
      %v2361 = vadd.f32 %v1979, %v2323
      %v2362 = vadd.f32 %v1980, %v2326
      %v2363 = vadd.f32 %v1981, %v2331
      %v2364 = vadd.f32 %v1982, %v2334
      %v2365 = vadd.f32 %v1983, %v2339
      %v2366 = vadd.f32 %v1984, %v2342
      %v2367 = vadd.f32 %v1985, %v2347
      %v2368 = vadd.f32 %v1986, %v2350
      %v2369 = vld [vmem:[%s1788] sm:$0xe]
      %v2370 = vld [vmem:[%s1788 + $0xc] sm:$0xe]
      %v2371 = vld [vmem:[%s1788 + $0x18] sm:$0xe]
      %v2372 = vld [vmem:[%s1788 + $0x24] sm:$0xe]
      %v2373 = vld [vmem:[%s1788 + $0x30] sm:$0xe]
      %v2374 = vld [vmem:[%s1788 + $0x3c] sm:$0xe]
      %v2375 = vld [vmem:[%s1788 + $0x48] sm:$0xe]
      %v2376 = vld [vmem:[%s1788 + $0x54] sm:$0xe]
      %v2401 = vrot.slane %v2369, 5
      %v2402 = vrot.slane %v2401, 4
      %v2403 = vrot.slane %v1988, 5
      %v2404 = vsel %vm730, %v2402, %v2403
      %v2405 = vrot.slane %v2403, 4
      %v2406 = vrot.slane %v1989, 5
      %v2407 = vsel %vm730, %v2405, %v2406
      %v2408 = vrot.slane %v2370, 5
      %v2409 = vrot.slane %v2408, 4
      %v2410 = vrot.slane %v1991, 5
      %v2411 = vsel %vm730, %v2409, %v2410
      %v2412 = vrot.slane %v2410, 4
      %v2413 = vrot.slane %v1992, 5
      %v2414 = vsel %vm730, %v2412, %v2413
      %v2415 = vrot.slane %v2371, 5
      %v2416 = vrot.slane %v2415, 4
      %v2417 = vrot.slane %v1994, 5
      %v2418 = vsel %vm730, %v2416, %v2417
      %v2419 = vrot.slane %v2417, 4
      %v2420 = vrot.slane %v1995, 5
      %v2421 = vsel %vm730, %v2419, %v2420
      %v2422 = vrot.slane %v2372, 5
      %v2423 = vrot.slane %v2422, 4
      %v2424 = vrot.slane %v1997, 5
      %v2425 = vsel %vm730, %v2423, %v2424
      %v2426 = vrot.slane %v2424, 4
      %v2427 = vrot.slane %v1998, 5
      %v2428 = vsel %vm730, %v2426, %v2427
      %v2429 = vrot.slane %v2373, 5
      %v2430 = vrot.slane %v2429, 4
      %v2431 = vrot.slane %v2000, 5
      %v2432 = vsel %vm730, %v2430, %v2431
      %v2433 = vrot.slane %v2431, 4
      %v2434 = vrot.slane %v2001, 5
      %v2435 = vsel %vm730, %v2433, %v2434
      %v2436 = vrot.slane %v2374, 5
      %v2437 = vrot.slane %v2436, 4
      %v2438 = vrot.slane %v2003, 5
      %v2439 = vsel %vm730, %v2437, %v2438
      %v2440 = vrot.slane %v2438, 4
      %v2441 = vrot.slane %v2004, 5
      %v2442 = vsel %vm730, %v2440, %v2441
      %v2443 = vrot.slane %v2375, 5
      %v2444 = vrot.slane %v2443, 4
      %v2445 = vrot.slane %v2006, 5
      %v2446 = vsel %vm730, %v2444, %v2445
      %v2447 = vrot.slane %v2445, 4
      %v2448 = vrot.slane %v2007, 5
      %v2449 = vsel %vm730, %v2447, %v2448
      %v2450 = vrot.slane %v2376, 5
      %v2451 = vrot.slane %v2450, 4
      %v2452 = vrot.slane %v2009, 5
      %v2453 = vsel %vm730, %v2451, %v2452
      %v2454 = vrot.slane %v2452, 4
      %v2455 = vrot.slane %v2010, 5
      %v2456 = vsel %vm730, %v2454, %v2455
      %s2457 = scalar_lea.vmem %s1, 16
      %v2458 = vld [vmem:[%s2457] sm:$0x3]
      %v2459 = vunpack.c.l.b16 %v2404
      %v2460 = vunpack.c.l.b16 %v2407
      %v2461 = vunpack.c.l.b16 %v2411
      %v2462 = vunpack.c.l.b16 %v2414
      %v2463 = vunpack.c.l.b16 %v2418
      %v2464 = vunpack.c.l.b16 %v2421
      %v2465 = vunpack.c.l.b16 %v2425
      %v2466 = vunpack.c.l.b16 %v2428
      %v2467 = vunpack.c.l.b16 %v2432
      %v2468 = vunpack.c.l.b16 %v2435
      %v2469 = vunpack.c.l.b16 %v2439
      %v2470 = vunpack.c.l.b16 %v2442
      %v2471 = vunpack.c.l.b16 %v2446
      %v2472 = vunpack.c.l.b16 %v2449
      %v2473 = vunpack.c.l.b16 %v2453
      %v2474 = vunpack.c.l.b16 %v2456
      %v2475 = vpack.c.b16 %v2460, %v2459
      %v2476 = vpack.c.b16 %v2462, %v2461
      %v2477 = vpack.c.b16 %v2464, %v2463
      %v2478 = vpack.c.b16 %v2466, %v2465
      %v2479 = vpack.c.b16 %v2468, %v2467
      %v2480 = vpack.c.b16 %v2470, %v2469
      %v2481 = vpack.c.b16 %v2472, %v2471
      %v2482 = vpack.c.b16 %v2474, %v2473
      %v2484 = vsel %vm414, %v2475, 0
      %v2487 = vsel %vm414, %v2476, 0
      %v2490 = vsel %vm414, %v2477, 0
      %v2493 = vsel %vm414, %v2478, 0
      %v2496 = vsel %vm414, %v2479, 0
      %v2499 = vsel %vm414, %v2480, 0
      %v2502 = vsel %vm414, %v2481, 0
      %v2505 = vsel %vm414, %v2482, 0
      %v2508 = vsel %vm439, %v2458, 0
      %2510 = vmatprep.subr.bf16.mxu0 0
      %2511 = vmatpush1.bf16.msra.mxu0 0
      %2512 = vmatprep.subr.bf16.mxu0 0
      %2513 = vmatpush1.bf16.msra.mxu0 0
      %2514 = vmatprep.subr.bf16.mxu0 0
      %2515 = vmatpush1.bf16.msra.mxu0 0
      %2516 = vmatprep.subr.bf16.mxu0 0
      %2517 = vmatpush1.bf16.msra.mxu0 0
      %2518 = vmatprep.subr.bf16.mxu0 0
      %2519 = vmatpush1.bf16.msra.mxu0 0
      %2520 = vmatprep.subr.bf16.mxu0 0
      %2521 = vmatpush1.bf16.msra.mxu0 0
      %2522 = vmatprep.subr.bf16.mxu0 0
      %2523 = vmatpush1.bf16.msra.mxu0 0
      %2524 = vmatprep.subr.bf16.mxu0 0
      %2525 = vmatpush1.bf16.msra.mxu0 %v2508
      %2526 = vmatprep.subr.bf16.mxu0 0
      %2527 = vmatpush2.bf16.msra.mxu0 0
      %2528 = vmatprep.subr.bf16.mxu0 0
      %2529 = vmatpush2.bf16.msra.mxu0 0
      %2530 = vmatprep.subr.bf16.mxu0 0
      %2531 = vmatpush2.bf16.msra.mxu0 0
      %2532 = vmatprep.subr.bf16.mxu0 0
      %2533 = vmatpush2.bf16.msra.mxu0 0
      %2534 = vmatprep.subr.bf16.mxu0 0
      %2535 = vmatpush2.bf16.msra.mxu0 0
      %2536 = vmatprep.subr.bf16.mxu0 0
      %2537 = vmatpush2.bf16.msra.mxu0 0
      %2538 = vmatprep.subr.bf16.mxu0 0
      %2539 = vmatpush2.bf16.msra.mxu0 0
      %2540 = vmatprep.subr.bf16.mxu0 0
      %2541 = vmatpush2.bf16.msra.mxu0 0
      %2542 = vmatprep.mubr.bf16.mxu0 0
      %2543 = vmatmul.mubr.bf16.gmra.mxu0 %v2484
      %v2544 = vpop.f32.mrf.mxu0
      %v2545 = vadd.f32 0.0, %v2544
      %v2546 = vpop.f32.mrf.mxu0
      %v2547 = vpop.f32.mrf.mxu0
      %v2548 = vadd.f32 0.0, %v2547
      %v2549 = vpop.f32.mrf.mxu0
      %2550 = vmatprep.mubr.bf16.mxu0 0
      %2551 = vmatmul.mubr.bf16.gmra.mxu0 %v2487
      %v2552 = vpop.f32.mrf.mxu0
      %v2553 = vadd.f32 0.0, %v2552
      %v2554 = vpop.f32.mrf.mxu0
      %v2555 = vpop.f32.mrf.mxu0
      %v2556 = vadd.f32 0.0, %v2555
      %v2557 = vpop.f32.mrf.mxu0
      %2558 = vmatprep.mubr.bf16.mxu0 0
      %2559 = vmatmul.mubr.bf16.gmra.mxu0 %v2490
      %v2560 = vpop.f32.mrf.mxu0
      %v2561 = vadd.f32 0.0, %v2560
      %v2562 = vpop.f32.mrf.mxu0
      %v2563 = vpop.f32.mrf.mxu0
      %v2564 = vadd.f32 0.0, %v2563
      %v2565 = vpop.f32.mrf.mxu0
      %2566 = vmatprep.mubr.bf16.mxu0 0
      %2567 = vmatmul.mubr.bf16.gmra.mxu0 %v2493
      %v2568 = vpop.f32.mrf.mxu0
      %v2569 = vadd.f32 0.0, %v2568
      %v2570 = vpop.f32.mrf.mxu0
      %v2571 = vpop.f32.mrf.mxu0
      %v2572 = vadd.f32 0.0, %v2571
      %v2573 = vpop.f32.mrf.mxu0
      %2574 = vmatprep.mubr.bf16.mxu0 0
      %2575 = vmatmul.mubr.bf16.gmra.mxu0 %v2496
      %v2576 = vpop.f32.mrf.mxu0
      %v2577 = vadd.f32 0.0, %v2576
      %v2578 = vpop.f32.mrf.mxu0
      %v2579 = vpop.f32.mrf.mxu0
      %v2580 = vadd.f32 0.0, %v2579
      %v2581 = vpop.f32.mrf.mxu0
      %2582 = vmatprep.mubr.bf16.mxu0 0
      %2583 = vmatmul.mubr.bf16.gmra.mxu0 %v2499
      %v2584 = vpop.f32.mrf.mxu0
      %v2585 = vadd.f32 0.0, %v2584
      %v2586 = vpop.f32.mrf.mxu0
      %v2587 = vpop.f32.mrf.mxu0
      %v2588 = vadd.f32 0.0, %v2587
      %v2589 = vpop.f32.mrf.mxu0
      %2590 = vmatprep.mubr.bf16.mxu0 0
      %2591 = vmatmul.mubr.bf16.gmra.mxu0 %v2502
      %v2592 = vpop.f32.mrf.mxu0
      %v2593 = vadd.f32 0.0, %v2592
      %v2594 = vpop.f32.mrf.mxu0
      %v2595 = vpop.f32.mrf.mxu0
      %v2596 = vadd.f32 0.0, %v2595
      %v2597 = vpop.f32.mrf.mxu0
      %2598 = vmatprep.mubr.bf16.mxu0 0
      %2599 = vmatmul.mubr.bf16.gmra.mxu0 %v2505
      %v2600 = vpop.f32.mrf.mxu0
      %v2601 = vadd.f32 0.0, %v2600
      %v2602 = vpop.f32.mrf.mxu0
      %v2603 = vpop.f32.mrf.mxu0
      %v2604 = vadd.f32 0.0, %v2603
      %v2605 = vpop.f32.mrf.mxu0
      %2606 = vdwg.mxu0
      %v2607 = vadd.f32 %v2353, %v2545
      %v2608 = vadd.f32 %v2354, %v2548
      %v2609 = vadd.f32 %v2355, %v2553
      %v2610 = vadd.f32 %v2356, %v2556
      %v2611 = vadd.f32 %v2357, %v2561
      %v2612 = vadd.f32 %v2358, %v2564
      %v2613 = vadd.f32 %v2359, %v2569
      %v2614 = vadd.f32 %v2360, %v2572
      %v2615 = vadd.f32 %v2361, %v2577
      %v2616 = vadd.f32 %v2362, %v2580
      %v2617 = vadd.f32 %v2363, %v2585
      %v2618 = vadd.f32 %v2364, %v2588
      %v2619 = vadd.f32 %v2365, %v2593
      %v2620 = vadd.f32 %v2366, %v2596
      %v2621 = vadd.f32 %v2367, %v2601
      %v2622 = vadd.f32 %v2368, %v2604
      %v2623 = vld [vmem:[%s2] sm:$0x1]
      %v2625 = vlaneseq
      %v2626 = vshrl.u32 %v2625, 7
      %v2627 = vsub.s32 0, %v2626
      %v2628 = vrot.slane %v2623, %v2627
      %v2630 = vadd.f32 %v2607, %v2628
      %v2631 = vadd.f32 %v2608, %v2628
      %v2632 = vadd.f32 %v2609, %v2628
      %v2633 = vadd.f32 %v2610, %v2628
      %v2634 = vadd.f32 %v2611, %v2628
      %v2635 = vadd.f32 %v2612, %v2628
      %v2636 = vadd.f32 %v2613, %v2628
      %v2637 = vadd.f32 %v2614, %v2628
      %v2638 = vadd.f32 %v2615, %v2628
      %v2639 = vadd.f32 %v2616, %v2628
      %v2640 = vadd.f32 %v2617, %v2628
      %v2641 = vadd.f32 %v2618, %v2628
      %v2642 = vadd.f32 %v2619, %v2628
      %v2643 = vadd.f32 %v2620, %v2628
      %v2644 = vadd.f32 %v2621, %v2628
      %v2645 = vadd.f32 %v2622, %v2628
      %v2646 = vmax.f32 %v2630, 0.0
      %v2647 = vmax.f32 %v2631, 0.0
      %v2648 = vmax.f32 %v2632, 0.0
      %v2649 = vmax.f32 %v2633, 0.0
      %v2650 = vmax.f32 %v2634, 0.0
      %v2651 = vmax.f32 %v2635, 0.0
      %v2652 = vmax.f32 %v2636, 0.0
      %v2653 = vmax.f32 %v2637, 0.0
      %v2654 = vmax.f32 %v2638, 0.0
      %v2655 = vmax.f32 %v2639, 0.0
      %v2656 = vmax.f32 %v2640, 0.0
      %v2657 = vmax.f32 %v2641, 0.0
      %v2658 = vmax.f32 %v2642, 0.0
      %v2659 = vmax.f32 %v2643, 0.0
      %v2660 = vmax.f32 %v2644, 0.0
      %v2661 = vmax.f32 %v2645, 0.0
      %v2662 = vadd.f32 %v2646, %v2647
      %v2663 = vadd.f32 %v2662, %v2648
      %v2664 = vadd.f32 %v2663, %v2649
      %v2665 = vadd.f32 %v2664, %v2650
      %v2666 = vadd.f32 %v2665, %v2651
      %v2667 = vadd.f32 %v2666, %v2652
      %v2668 = vadd.f32 %v2667, %v2653
      %v2669 = vadd.f32 %v2668, %v2654
      %v2670 = vadd.f32 %v2669, %v2655
      %v2671 = vadd.f32 %v2670, %v2656
      %v2672 = vadd.f32 %v2671, %v2657
      %v2673 = vadd.f32 %v2672, %v2658
      %v2674 = vadd.f32 %v2673, %v2659
      %v2675 = vadd.f32 %v2674, %v2660
      %v2676 = vadd.f32 %v2675, %v2661
      %v2677 = vrot.slane %v2676, 4
      %v2678 = vadd.f32 %v2676, %v2677
      %v2679 = vrot.slane %v2678, 2
      %v2680 = vadd.f32 %v2678, %v2679
      %v2681 = vrot.slane %v2680, 1
      %v2682 = vadd.f32 %v2680, %v2681
      %v2683 = vadd.f32 %v2682, 0.0
      %s2684 = scalar_lea.vmem %s163, 96
      %v2685 = vld [vmem:[%s2684] sm:$0xf]
      %v2686 = vld [vmem:[%s2684 + $0x4] sm:$0xf]
      %v2687 = vld [vmem:[%s2684 + $0xc] sm:$0xf]
      %v2688 = vld [vmem:[%s2684 + $0x10] sm:$0xf]
      %v2689 = vld [vmem:[%s2684 + $0x18] sm:$0xf]
      %v2690 = vld [vmem:[%s2684 + $0x1c] sm:$0xf]
      %v2691 = vld [vmem:[%s2684 + $0x24] sm:$0xf]
      %v2692 = vld [vmem:[%s2684 + $0x28] sm:$0xf]
      %v2693 = vld [vmem:[%s2684 + $0x30] sm:$0xf]
      %v2694 = vld [vmem:[%s2684 + $0x34] sm:$0xf]
      %v2695 = vld [vmem:[%s2684 + $0x3c] sm:$0xf]
      %v2696 = vld [vmem:[%s2684 + $0x40] sm:$0xf]
      %v2697 = vld [vmem:[%s2684 + $0x48] sm:$0xf]
      %v2698 = vld [vmem:[%s2684 + $0x4c] sm:$0xf]
      %v2699 = vld [vmem:[%s2684 + $0x54] sm:$0xf]
      %v2700 = vld [vmem:[%s2684 + $0x58] sm:$0xf]
      %v2701 = vld [vmem:[%s2684 + $0x8] sm:$0x1]
      %v2702 = vld [vmem:[%s2684 + $0x14] sm:$0x1]
      %v2703 = vld [vmem:[%s2684 + $0x20] sm:$0x1]
      %v2704 = vld [vmem:[%s2684 + $0x2c] sm:$0x1]
      %v2705 = vld [vmem:[%s2684 + $0x38] sm:$0x1]
      %v2706 = vld [vmem:[%s2684 + $0x44] sm:$0x1]
      %v2707 = vld [vmem:[%s2684 + $0x50] sm:$0x1]
      %v2708 = vld [vmem:[%s2684 + $0x5c] sm:$0x1]
      %v2710 = vshrl.u32 %v2685, 16
      %v2712 = vrot.slane %v2710, 4
      %v2713 = vshll.u32 %v2685, 16
      %v2715 = vrot.slane %v2713, 5
      %v2716 = vor.u32 %v2712, %v2715
      %v2717 = vrot.slane %v2716, 4
      %v2719 = vshll.u32 %v2686, 16
      %v2721 = vrot.slane %v2719, 5
      %v2722 = vsel %vm195, %v2717, %v2721
      %v2723 = vshrl.u32 %v2686, 16
      %v2725 = vrot.slane %v2723, 4
      %v2726 = vor.u32 %v2725, %v2721
      %v2727 = vrot.slane %v2726, 4
      %v2729 = vshll.u32 %v2701, 16
      %v2731 = vrot.slane %v2729, 5
      %v2732 = vsel %vm195, %v2727, %v2731
      %v2734 = vshrl.u32 %v2687, 16
      %v2736 = vrot.slane %v2734, 4
      %v2737 = vshll.u32 %v2687, 16
      %v2739 = vrot.slane %v2737, 5
      %v2740 = vor.u32 %v2736, %v2739
      %v2741 = vrot.slane %v2740, 4
      %v2743 = vshll.u32 %v2688, 16
      %v2745 = vrot.slane %v2743, 5
      %v2746 = vsel %vm195, %v2741, %v2745
      %v2747 = vshrl.u32 %v2688, 16
      %v2749 = vrot.slane %v2747, 4
      %v2750 = vor.u32 %v2749, %v2745
      %v2751 = vrot.slane %v2750, 4
      %v2753 = vshll.u32 %v2702, 16
      %v2755 = vrot.slane %v2753, 5
      %v2756 = vsel %vm195, %v2751, %v2755
      %v2758 = vshrl.u32 %v2689, 16
      %v2760 = vrot.slane %v2758, 4
      %v2761 = vshll.u32 %v2689, 16
      %v2763 = vrot.slane %v2761, 5
      %v2764 = vor.u32 %v2760, %v2763
      %v2765 = vrot.slane %v2764, 4
      %v2767 = vshll.u32 %v2690, 16
      %v2769 = vrot.slane %v2767, 5
      %v2770 = vsel %vm195, %v2765, %v2769
      %v2771 = vshrl.u32 %v2690, 16
      %v2773 = vrot.slane %v2771, 4
      %v2774 = vor.u32 %v2773, %v2769
      %v2775 = vrot.slane %v2774, 4
      %v2777 = vshll.u32 %v2703, 16
      %v2779 = vrot.slane %v2777, 5
      %v2780 = vsel %vm195, %v2775, %v2779
      %v2782 = vshrl.u32 %v2691, 16
      %v2784 = vrot.slane %v2782, 4
      %v2785 = vshll.u32 %v2691, 16
      %v2787 = vrot.slane %v2785, 5
      %v2788 = vor.u32 %v2784, %v2787
      %v2789 = vrot.slane %v2788, 4
      %v2791 = vshll.u32 %v2692, 16
      %v2793 = vrot.slane %v2791, 5
      %v2794 = vsel %vm195, %v2789, %v2793
      %v2795 = vshrl.u32 %v2692, 16
      %v2797 = vrot.slane %v2795, 4
      %v2798 = vor.u32 %v2797, %v2793
      %v2799 = vrot.slane %v2798, 4
      %v2801 = vshll.u32 %v2704, 16
      %v2803 = vrot.slane %v2801, 5
      %v2804 = vsel %vm195, %v2799, %v2803
      %v2806 = vshrl.u32 %v2693, 16
      %v2808 = vrot.slane %v2806, 4
      %v2809 = vshll.u32 %v2693, 16
      %v2811 = vrot.slane %v2809, 5
      %v2812 = vor.u32 %v2808, %v2811
      %v2813 = vrot.slane %v2812, 4
      %v2815 = vshll.u32 %v2694, 16
      %v2817 = vrot.slane %v2815, 5
      %v2818 = vsel %vm195, %v2813, %v2817
      %v2819 = vshrl.u32 %v2694, 16
      %v2821 = vrot.slane %v2819, 4
      %v2822 = vor.u32 %v2821, %v2817
      %v2823 = vrot.slane %v2822, 4
      %v2825 = vshll.u32 %v2705, 16
      %v2827 = vrot.slane %v2825, 5
      %v2828 = vsel %vm195, %v2823, %v2827
      %v2830 = vshrl.u32 %v2695, 16
      %v2832 = vrot.slane %v2830, 4
      %v2833 = vshll.u32 %v2695, 16
      %v2835 = vrot.slane %v2833, 5
      %v2836 = vor.u32 %v2832, %v2835
      %v2837 = vrot.slane %v2836, 4
      %v2839 = vshll.u32 %v2696, 16
      %v2841 = vrot.slane %v2839, 5
      %v2842 = vsel %vm195, %v2837, %v2841
      %v2843 = vshrl.u32 %v2696, 16
      %v2845 = vrot.slane %v2843, 4
      %v2846 = vor.u32 %v2845, %v2841
      %v2847 = vrot.slane %v2846, 4
      %v2849 = vshll.u32 %v2706, 16
      %v2851 = vrot.slane %v2849, 5
      %v2852 = vsel %vm195, %v2847, %v2851
      %v2854 = vshrl.u32 %v2697, 16
      %v2856 = vrot.slane %v2854, 4
      %v2857 = vshll.u32 %v2697, 16
      %v2859 = vrot.slane %v2857, 5
      %v2860 = vor.u32 %v2856, %v2859
      %v2861 = vrot.slane %v2860, 4
      %v2863 = vshll.u32 %v2698, 16
      %v2865 = vrot.slane %v2863, 5
      %v2866 = vsel %vm195, %v2861, %v2865
      %v2867 = vshrl.u32 %v2698, 16
      %v2869 = vrot.slane %v2867, 4
      %v2870 = vor.u32 %v2869, %v2865
      %v2871 = vrot.slane %v2870, 4
      %v2873 = vshll.u32 %v2707, 16
      %v2875 = vrot.slane %v2873, 5
      %v2876 = vsel %vm195, %v2871, %v2875
      %v2878 = vshrl.u32 %v2699, 16
      %v2880 = vrot.slane %v2878, 4
      %v2881 = vshll.u32 %v2699, 16
      %v2883 = vrot.slane %v2881, 5
      %v2884 = vor.u32 %v2880, %v2883
      %v2885 = vrot.slane %v2884, 4
      %v2887 = vshll.u32 %v2700, 16
      %v2889 = vrot.slane %v2887, 5
      %v2890 = vsel %vm195, %v2885, %v2889
      %v2891 = vshrl.u32 %v2700, 16
      %v2893 = vrot.slane %v2891, 4
      %v2894 = vor.u32 %v2893, %v2889
      %v2895 = vrot.slane %v2894, 4
      %v2897 = vshll.u32 %v2708, 16
      %v2899 = vrot.slane %v2897, 5
      %v2900 = vsel %vm195, %v2895, %v2899
      %v2901 = vunpack.c.l.b16 %v2722
      %v2902 = vunpack.c.l.b16 %v2732
      %v2903 = vunpack.c.l.b16 %v2746
      %v2904 = vunpack.c.l.b16 %v2756
      %v2905 = vunpack.c.l.b16 %v2770
      %v2906 = vunpack.c.l.b16 %v2780
      %v2907 = vunpack.c.l.b16 %v2794
      %v2908 = vunpack.c.l.b16 %v2804
      %v2909 = vunpack.c.l.b16 %v2818
      %v2910 = vunpack.c.l.b16 %v2828
      %v2911 = vunpack.c.l.b16 %v2842
      %v2912 = vunpack.c.l.b16 %v2852
      %v2913 = vunpack.c.l.b16 %v2866
      %v2914 = vunpack.c.l.b16 %v2876
      %v2915 = vunpack.c.l.b16 %v2890
      %v2916 = vunpack.c.l.b16 %v2900
      %v2917 = vpack.c.b16 %v2902, %v2901
      %v2918 = vpack.c.b16 %v2904, %v2903
      %v2919 = vpack.c.b16 %v2906, %v2905
      %v2920 = vpack.c.b16 %v2908, %v2907
      %v2921 = vpack.c.b16 %v2910, %v2909
      %v2922 = vpack.c.b16 %v2912, %v2911
      %v2923 = vpack.c.b16 %v2914, %v2913
      %v2924 = vpack.c.b16 %v2916, %v2915
      %v2926 = vsel %vm414, %v2917, 0
      %v2929 = vsel %vm414, %v2918, 0
      %v2932 = vsel %vm414, %v2919, 0
      %v2935 = vsel %vm414, %v2920, 0
      %v2938 = vsel %vm414, %v2921, 0
      %v2941 = vsel %vm414, %v2922, 0
      %v2944 = vsel %vm414, %v2923, 0
      %v2947 = vsel %vm414, %v2924, 0
      %2949 = vmatprep.subr.bf16.mxu0 0
      %2950 = vmatpush1.bf16.msra.mxu0 0
      %2951 = vmatprep.subr.bf16.mxu0 0
      %2952 = vmatpush1.bf16.msra.mxu0 0
      %2953 = vmatprep.subr.bf16.mxu0 0
      %2954 = vmatpush1.bf16.msra.mxu0 0
      %2955 = vmatprep.subr.bf16.mxu0 0
      %2956 = vmatpush1.bf16.msra.mxu0 0
      %2957 = vmatprep.subr.bf16.mxu0 0
      %2958 = vmatpush1.bf16.msra.mxu0 0
      %2959 = vmatprep.subr.bf16.mxu0 0
      %2960 = vmatpush1.bf16.msra.mxu0 0
      %2961 = vmatprep.subr.bf16.mxu0 0
      %2962 = vmatpush1.bf16.msra.mxu0 0
      %2963 = vmatprep.subr.bf16.mxu0 0
      %2964 = vmatpush1.bf16.msra.mxu0 %v441
      %2965 = vmatprep.subr.bf16.mxu0 0
      %2966 = vmatpush2.bf16.msra.mxu0 0
      %2967 = vmatprep.subr.bf16.mxu0 0
      %2968 = vmatpush2.bf16.msra.mxu0 0
      %2969 = vmatprep.subr.bf16.mxu0 0
      %2970 = vmatpush2.bf16.msra.mxu0 0
      %2971 = vmatprep.subr.bf16.mxu0 0
      %2972 = vmatpush2.bf16.msra.mxu0 0
      %2973 = vmatprep.subr.bf16.mxu0 0
      %2974 = vmatpush2.bf16.msra.mxu0 0
      %2975 = vmatprep.subr.bf16.mxu0 0
      %2976 = vmatpush2.bf16.msra.mxu0 0
      %2977 = vmatprep.subr.bf16.mxu0 0
      %2978 = vmatpush2.bf16.msra.mxu0 0
      %2979 = vmatprep.subr.bf16.mxu0 0
      %2980 = vmatpush2.bf16.msra.mxu0 0
      %2981 = vmatprep.mubr.bf16.mxu0 0
      %2982 = vmatmul.mubr.bf16.gmra.mxu0 %v2926
      %v2983 = vpop.f32.mrf.mxu0
      %v2984 = vadd.f32 0.0, %v2983
      %v2985 = vpop.f32.mrf.mxu0
      %v2986 = vpop.f32.mrf.mxu0
      %v2987 = vadd.f32 0.0, %v2986
      %v2988 = vpop.f32.mrf.mxu0
      %2989 = vmatprep.mubr.bf16.mxu0 0
      %2990 = vmatmul.mubr.bf16.gmra.mxu0 %v2929
      %v2991 = vpop.f32.mrf.mxu0
      %v2992 = vadd.f32 0.0, %v2991
      %v2993 = vpop.f32.mrf.mxu0
      %v2994 = vpop.f32.mrf.mxu0
      %v2995 = vadd.f32 0.0, %v2994
      %v2996 = vpop.f32.mrf.mxu0
      %2997 = vmatprep.mubr.bf16.mxu0 0
      %2998 = vmatmul.mubr.bf16.gmra.mxu0 %v2932
      %v2999 = vpop.f32.mrf.mxu0
      %v3000 = vadd.f32 0.0, %v2999
      %v3001 = vpop.f32.mrf.mxu0
      %v3002 = vpop.f32.mrf.mxu0
      %v3003 = vadd.f32 0.0, %v3002
      %v3004 = vpop.f32.mrf.mxu0
      %3005 = vmatprep.mubr.bf16.mxu0 0
      %3006 = vmatmul.mubr.bf16.gmra.mxu0 %v2935
      %v3007 = vpop.f32.mrf.mxu0
      %v3008 = vadd.f32 0.0, %v3007
      %v3009 = vpop.f32.mrf.mxu0
      %v3010 = vpop.f32.mrf.mxu0
      %v3011 = vadd.f32 0.0, %v3010
      %v3012 = vpop.f32.mrf.mxu0
      %3013 = vmatprep.mubr.bf16.mxu0 0
      %3014 = vmatmul.mubr.bf16.gmra.mxu0 %v2938
      %v3015 = vpop.f32.mrf.mxu0
      %v3016 = vadd.f32 0.0, %v3015
      %v3017 = vpop.f32.mrf.mxu0
      %v3018 = vpop.f32.mrf.mxu0
      %v3019 = vadd.f32 0.0, %v3018
      %v3020 = vpop.f32.mrf.mxu0
      %3021 = vmatprep.mubr.bf16.mxu0 0
      %3022 = vmatmul.mubr.bf16.gmra.mxu0 %v2941
      %v3023 = vpop.f32.mrf.mxu0
      %v3024 = vadd.f32 0.0, %v3023
      %v3025 = vpop.f32.mrf.mxu0
      %v3026 = vpop.f32.mrf.mxu0
      %v3027 = vadd.f32 0.0, %v3026
      %v3028 = vpop.f32.mrf.mxu0
      %3029 = vmatprep.mubr.bf16.mxu0 0
      %3030 = vmatmul.mubr.bf16.gmra.mxu0 %v2944
      %v3031 = vpop.f32.mrf.mxu0
      %v3032 = vadd.f32 0.0, %v3031
      %v3033 = vpop.f32.mrf.mxu0
      %v3034 = vpop.f32.mrf.mxu0
      %v3035 = vadd.f32 0.0, %v3034
      %v3036 = vpop.f32.mrf.mxu0
      %3037 = vmatprep.mubr.bf16.mxu0 0
      %3038 = vmatmul.mubr.bf16.gmra.mxu0 %v2947
      %v3039 = vpop.f32.mrf.mxu0
      %v3040 = vadd.f32 0.0, %v3039
      %v3041 = vpop.f32.mrf.mxu0
      %v3042 = vpop.f32.mrf.mxu0
      %v3043 = vadd.f32 0.0, %v3042
      %v3044 = vpop.f32.mrf.mxu0
      %3045 = vdwg.mxu0
      %v3062 = vunpack.c.l.b16 %v2685
      %v3063 = vunpack.c.l.b16 %v2686
      %v3064 = vunpack.c.l.b16 %v2687
      %v3065 = vunpack.c.l.b16 %v2688
      %v3066 = vunpack.c.l.b16 %v2689
      %v3067 = vunpack.c.l.b16 %v2690
      %v3068 = vunpack.c.l.b16 %v2691
      %v3069 = vunpack.c.l.b16 %v2692
      %v3070 = vunpack.c.l.b16 %v2693
      %v3071 = vunpack.c.l.b16 %v2694
      %v3072 = vunpack.c.l.b16 %v2695
      %v3073 = vunpack.c.l.b16 %v2696
      %v3074 = vunpack.c.l.b16 %v2697
      %v3075 = vunpack.c.l.b16 %v2698
      %v3076 = vunpack.c.l.b16 %v2699
      %v3077 = vunpack.c.l.b16 %v2700
      %v3078 = vpack.c.b16 %v3063, %v3062
      %v3079 = vpack.c.b16 %v3065, %v3064
      %v3080 = vpack.c.b16 %v3067, %v3066
      %v3081 = vpack.c.b16 %v3069, %v3068
      %v3082 = vpack.c.b16 %v3071, %v3070
      %v3083 = vpack.c.b16 %v3073, %v3072
      %v3084 = vpack.c.b16 %v3075, %v3074
      %v3085 = vpack.c.b16 %v3077, %v3076
      %v3087 = vsel %vm414, %v3078, 0
      %v3090 = vsel %vm414, %v3079, 0
      %v3093 = vsel %vm414, %v3080, 0
      %v3096 = vsel %vm414, %v3081, 0
      %v3099 = vsel %vm414, %v3082, 0
      %v3102 = vsel %vm414, %v3083, 0
      %v3105 = vsel %vm414, %v3084, 0
      %v3108 = vsel %vm414, %v3085, 0
      %3110 = vmatprep.subr.bf16.mxu0 0
      %3111 = vmatpush1.bf16.msra.mxu0 0
      %3112 = vmatprep.subr.bf16.mxu0 0
      %3113 = vmatpush1.bf16.msra.mxu0 0
      %3114 = vmatprep.subr.bf16.mxu0 0
      %3115 = vmatpush1.bf16.msra.mxu0 0
      %3116 = vmatprep.subr.bf16.mxu0 0
      %3117 = vmatpush1.bf16.msra.mxu0 0
      %3118 = vmatprep.subr.bf16.mxu0 0
      %3119 = vmatpush1.bf16.msra.mxu0 0
      %3120 = vmatprep.subr.bf16.mxu0 0
      %3121 = vmatpush1.bf16.msra.mxu0 0
      %3122 = vmatprep.subr.bf16.mxu0 0
      %3123 = vmatpush1.bf16.msra.mxu0 0
      %3124 = vmatprep.subr.bf16.mxu0 0
      %3125 = vmatpush1.bf16.msra.mxu0 %v605
      %3126 = vmatprep.subr.bf16.mxu0 0
      %3127 = vmatpush2.bf16.msra.mxu0 0
      %3128 = vmatprep.subr.bf16.mxu0 0
      %3129 = vmatpush2.bf16.msra.mxu0 0
      %3130 = vmatprep.subr.bf16.mxu0 0
      %3131 = vmatpush2.bf16.msra.mxu0 0
      %3132 = vmatprep.subr.bf16.mxu0 0
      %3133 = vmatpush2.bf16.msra.mxu0 0
      %3134 = vmatprep.subr.bf16.mxu0 0
      %3135 = vmatpush2.bf16.msra.mxu0 0
      %3136 = vmatprep.subr.bf16.mxu0 0
      %3137 = vmatpush2.bf16.msra.mxu0 0
      %3138 = vmatprep.subr.bf16.mxu0 0
      %3139 = vmatpush2.bf16.msra.mxu0 0
      %3140 = vmatprep.subr.bf16.mxu0 0
      %3141 = vmatpush2.bf16.msra.mxu0 0
      %3142 = vmatprep.mubr.bf16.mxu0 0
      %3143 = vmatmul.mubr.bf16.gmra.mxu0 %v3087
      %v3144 = vpop.f32.mrf.mxu0
      %v3145 = vadd.f32 %v2984, %v3144
      %v3146 = vpop.f32.mrf.mxu0
      %v3147 = vpop.f32.mrf.mxu0
      %v3148 = vadd.f32 %v2987, %v3147
      %v3149 = vpop.f32.mrf.mxu0
      %3150 = vmatprep.mubr.bf16.mxu0 0
      %3151 = vmatmul.mubr.bf16.gmra.mxu0 %v3090
      %v3152 = vpop.f32.mrf.mxu0
      %v3153 = vadd.f32 %v2992, %v3152
      %v3154 = vpop.f32.mrf.mxu0
      %v3155 = vpop.f32.mrf.mxu0
      %v3156 = vadd.f32 %v2995, %v3155
      %v3157 = vpop.f32.mrf.mxu0
      %3158 = vmatprep.mubr.bf16.mxu0 0
      %3159 = vmatmul.mubr.bf16.gmra.mxu0 %v3093
      %v3160 = vpop.f32.mrf.mxu0
      %v3161 = vadd.f32 %v3000, %v3160
      %v3162 = vpop.f32.mrf.mxu0
      %v3163 = vpop.f32.mrf.mxu0
      %v3164 = vadd.f32 %v3003, %v3163
      %v3165 = vpop.f32.mrf.mxu0
      %3166 = vmatprep.mubr.bf16.mxu0 0
      %3167 = vmatmul.mubr.bf16.gmra.mxu0 %v3096
      %v3168 = vpop.f32.mrf.mxu0
      %v3169 = vadd.f32 %v3008, %v3168
      %v3170 = vpop.f32.mrf.mxu0
      %v3171 = vpop.f32.mrf.mxu0
      %v3172 = vadd.f32 %v3011, %v3171
      %v3173 = vpop.f32.mrf.mxu0
      %3174 = vmatprep.mubr.bf16.mxu0 0
      %3175 = vmatmul.mubr.bf16.gmra.mxu0 %v3099
      %v3176 = vpop.f32.mrf.mxu0
      %v3177 = vadd.f32 %v3016, %v3176
      %v3178 = vpop.f32.mrf.mxu0
      %v3179 = vpop.f32.mrf.mxu0
      %v3180 = vadd.f32 %v3019, %v3179
      %v3181 = vpop.f32.mrf.mxu0
      %3182 = vmatprep.mubr.bf16.mxu0 0
      %3183 = vmatmul.mubr.bf16.gmra.mxu0 %v3102
      %v3184 = vpop.f32.mrf.mxu0
      %v3185 = vadd.f32 %v3024, %v3184
      %v3186 = vpop.f32.mrf.mxu0
      %v3187 = vpop.f32.mrf.mxu0
      %v3188 = vadd.f32 %v3027, %v3187
      %v3189 = vpop.f32.mrf.mxu0
      %3190 = vmatprep.mubr.bf16.mxu0 0
      %3191 = vmatmul.mubr.bf16.gmra.mxu0 %v3105
      %v3192 = vpop.f32.mrf.mxu0
      %v3193 = vadd.f32 %v3032, %v3192
      %v3194 = vpop.f32.mrf.mxu0
      %v3195 = vpop.f32.mrf.mxu0
      %v3196 = vadd.f32 %v3035, %v3195
      %v3197 = vpop.f32.mrf.mxu0
      %3198 = vmatprep.mubr.bf16.mxu0 0
      %3199 = vmatmul.mubr.bf16.gmra.mxu0 %v3108
      %v3200 = vpop.f32.mrf.mxu0
      %v3201 = vadd.f32 %v3040, %v3200
      %v3202 = vpop.f32.mrf.mxu0
      %v3203 = vpop.f32.mrf.mxu0
      %v3204 = vadd.f32 %v3043, %v3203
      %v3205 = vpop.f32.mrf.mxu0
      %3206 = vdwg.mxu0
      %v3207 = vld [vmem:[%s2684] sm:$0xe]
      %v3208 = vld [vmem:[%s2684 + $0xc] sm:$0xe]
      %v3209 = vld [vmem:[%s2684 + $0x18] sm:$0xe]
      %v3210 = vld [vmem:[%s2684 + $0x24] sm:$0xe]
      %v3211 = vld [vmem:[%s2684 + $0x30] sm:$0xe]
      %v3212 = vld [vmem:[%s2684 + $0x3c] sm:$0xe]
      %v3213 = vld [vmem:[%s2684 + $0x48] sm:$0xe]
      %v3214 = vld [vmem:[%s2684 + $0x54] sm:$0xe]
      %v3231 = vrot.slane %v3207, 5
      %v3232 = vrot.slane %v3231, 4
      %v3233 = vrot.slane %v2686, 5
      %v3234 = vsel %vm730, %v3232, %v3233
      %v3235 = vrot.slane %v3233, 4
      %v3236 = vrot.slane %v2701, 5
      %v3237 = vsel %vm730, %v3235, %v3236
      %v3238 = vrot.slane %v3208, 5
      %v3239 = vrot.slane %v3238, 4
      %v3240 = vrot.slane %v2688, 5
      %v3241 = vsel %vm730, %v3239, %v3240
      %v3242 = vrot.slane %v3240, 4
      %v3243 = vrot.slane %v2702, 5
      %v3244 = vsel %vm730, %v3242, %v3243
      %v3245 = vrot.slane %v3209, 5
      %v3246 = vrot.slane %v3245, 4
      %v3247 = vrot.slane %v2690, 5
      %v3248 = vsel %vm730, %v3246, %v3247
      %v3249 = vrot.slane %v3247, 4
      %v3250 = vrot.slane %v2703, 5
      %v3251 = vsel %vm730, %v3249, %v3250
      %v3252 = vrot.slane %v3210, 5
      %v3253 = vrot.slane %v3252, 4
      %v3254 = vrot.slane %v2692, 5
      %v3255 = vsel %vm730, %v3253, %v3254
      %v3256 = vrot.slane %v3254, 4
      %v3257 = vrot.slane %v2704, 5
      %v3258 = vsel %vm730, %v3256, %v3257
      %v3259 = vrot.slane %v3211, 5
      %v3260 = vrot.slane %v3259, 4
      %v3261 = vrot.slane %v2694, 5
      %v3262 = vsel %vm730, %v3260, %v3261
      %v3263 = vrot.slane %v3261, 4
      %v3264 = vrot.slane %v2705, 5
      %v3265 = vsel %vm730, %v3263, %v3264
      %v3266 = vrot.slane %v3212, 5
      %v3267 = vrot.slane %v3266, 4
      %v3268 = vrot.slane %v2696, 5
      %v3269 = vsel %vm730, %v3267, %v3268
      %v3270 = vrot.slane %v3268, 4
      %v3271 = vrot.slane %v2706, 5
      %v3272 = vsel %vm730, %v3270, %v3271
      %v3273 = vrot.slane %v3213, 5
      %v3274 = vrot.slane %v3273, 4
      %v3275 = vrot.slane %v2698, 5
      %v3276 = vsel %vm730, %v3274, %v3275
      %v3277 = vrot.slane %v3275, 4
      %v3278 = vrot.slane %v2707, 5
      %v3279 = vsel %vm730, %v3277, %v3278
      %v3280 = vrot.slane %v3214, 5
      %v3281 = vrot.slane %v3280, 4
      %v3282 = vrot.slane %v2700, 5
      %v3283 = vsel %vm730, %v3281, %v3282
      %v3284 = vrot.slane %v3282, 4
      %v3285 = vrot.slane %v2708, 5
      %v3286 = vsel %vm730, %v3284, %v3285
      %v3287 = vunpack.c.l.b16 %v3234
      %v3288 = vunpack.c.l.b16 %v3237
      %v3289 = vunpack.c.l.b16 %v3241
      %v3290 = vunpack.c.l.b16 %v3244
      %v3291 = vunpack.c.l.b16 %v3248
      %v3292 = vunpack.c.l.b16 %v3251
      %v3293 = vunpack.c.l.b16 %v3255
      %v3294 = vunpack.c.l.b16 %v3258
      %v3295 = vunpack.c.l.b16 %v3262
      %v3296 = vunpack.c.l.b16 %v3265
      %v3297 = vunpack.c.l.b16 %v3269
      %v3298 = vunpack.c.l.b16 %v3272
      %v3299 = vunpack.c.l.b16 %v3276
      %v3300 = vunpack.c.l.b16 %v3279
      %v3301 = vunpack.c.l.b16 %v3283
      %v3302 = vunpack.c.l.b16 %v3286
      %v3303 = vpack.c.b16 %v3288, %v3287
      %v3304 = vpack.c.b16 %v3290, %v3289
      %v3305 = vpack.c.b16 %v3292, %v3291
      %v3306 = vpack.c.b16 %v3294, %v3293
      %v3307 = vpack.c.b16 %v3296, %v3295
      %v3308 = vpack.c.b16 %v3298, %v3297
      %v3309 = vpack.c.b16 %v3300, %v3299
      %v3310 = vpack.c.b16 %v3302, %v3301
      %v3312 = vsel %vm414, %v3303, 0
      %v3315 = vsel %vm414, %v3304, 0
      %v3318 = vsel %vm414, %v3305, 0
      %v3321 = vsel %vm414, %v3306, 0
      %v3324 = vsel %vm414, %v3307, 0
      %v3327 = vsel %vm414, %v3308, 0
      %v3330 = vsel %vm414, %v3309, 0
      %v3333 = vsel %vm414, %v3310, 0
      %3335 = vmatprep.subr.bf16.mxu0 0
      %3336 = vmatpush1.bf16.msra.mxu0 0
      %3337 = vmatprep.subr.bf16.mxu0 0
      %3338 = vmatpush1.bf16.msra.mxu0 0
      %3339 = vmatprep.subr.bf16.mxu0 0
      %3340 = vmatpush1.bf16.msra.mxu0 0
      %3341 = vmatprep.subr.bf16.mxu0 0
      %3342 = vmatpush1.bf16.msra.mxu0 0
      %3343 = vmatprep.subr.bf16.mxu0 0
      %3344 = vmatpush1.bf16.msra.mxu0 0
      %3345 = vmatprep.subr.bf16.mxu0 0
      %3346 = vmatpush1.bf16.msra.mxu0 0
      %3347 = vmatprep.subr.bf16.mxu0 0
      %3348 = vmatpush1.bf16.msra.mxu0 0
      %3349 = vmatprep.subr.bf16.mxu0 0
      %3350 = vmatpush1.bf16.msra.mxu0 %v838
      %3351 = vmatprep.subr.bf16.mxu0 0
      %3352 = vmatpush2.bf16.msra.mxu0 0
      %3353 = vmatprep.subr.bf16.mxu0 0
      %3354 = vmatpush2.bf16.msra.mxu0 0
      %3355 = vmatprep.subr.bf16.mxu0 0
      %3356 = vmatpush2.bf16.msra.mxu0 0
      %3357 = vmatprep.subr.bf16.mxu0 0
      %3358 = vmatpush2.bf16.msra.mxu0 0
      %3359 = vmatprep.subr.bf16.mxu0 0
      %3360 = vmatpush2.bf16.msra.mxu0 0
      %3361 = vmatprep.subr.bf16.mxu0 0
      %3362 = vmatpush2.bf16.msra.mxu0 0
      %3363 = vmatprep.subr.bf16.mxu0 0
      %3364 = vmatpush2.bf16.msra.mxu0 0
      %3365 = vmatprep.subr.bf16.mxu0 0
      %3366 = vmatpush2.bf16.msra.mxu0 0
      %3367 = vmatprep.mubr.bf16.mxu0 0
      %3368 = vmatmul.mubr.bf16.gmra.mxu0 %v3312
      %v3369 = vpop.f32.mrf.mxu0
      %v3370 = vadd.f32 0.0, %v3369
      %v3371 = vpop.f32.mrf.mxu0
      %v3372 = vpop.f32.mrf.mxu0
      %v3373 = vadd.f32 0.0, %v3372
      %v3374 = vpop.f32.mrf.mxu0
      %3375 = vmatprep.mubr.bf16.mxu0 0
      %3376 = vmatmul.mubr.bf16.gmra.mxu0 %v3315
      %v3377 = vpop.f32.mrf.mxu0
      %v3378 = vadd.f32 0.0, %v3377
      %v3379 = vpop.f32.mrf.mxu0
      %v3380 = vpop.f32.mrf.mxu0
      %v3381 = vadd.f32 0.0, %v3380
      %v3382 = vpop.f32.mrf.mxu0
      %3383 = vmatprep.mubr.bf16.mxu0 0
      %3384 = vmatmul.mubr.bf16.gmra.mxu0 %v3318
      %v3385 = vpop.f32.mrf.mxu0
      %v3386 = vadd.f32 0.0, %v3385
      %v3387 = vpop.f32.mrf.mxu0
      %v3388 = vpop.f32.mrf.mxu0
      %v3389 = vadd.f32 0.0, %v3388
      %v3390 = vpop.f32.mrf.mxu0
      %3391 = vmatprep.mubr.bf16.mxu0 0
      %3392 = vmatmul.mubr.bf16.gmra.mxu0 %v3321
      %v3393 = vpop.f32.mrf.mxu0
      %v3394 = vadd.f32 0.0, %v3393
      %v3395 = vpop.f32.mrf.mxu0
      %v3396 = vpop.f32.mrf.mxu0
      %v3397 = vadd.f32 0.0, %v3396
      %v3398 = vpop.f32.mrf.mxu0
      %3399 = vmatprep.mubr.bf16.mxu0 0
      %3400 = vmatmul.mubr.bf16.gmra.mxu0 %v3324
      %v3401 = vpop.f32.mrf.mxu0
      %v3402 = vadd.f32 0.0, %v3401
      %v3403 = vpop.f32.mrf.mxu0
      %v3404 = vpop.f32.mrf.mxu0
      %v3405 = vadd.f32 0.0, %v3404
      %v3406 = vpop.f32.mrf.mxu0
      %3407 = vmatprep.mubr.bf16.mxu0 0
      %3408 = vmatmul.mubr.bf16.gmra.mxu0 %v3327
      %v3409 = vpop.f32.mrf.mxu0
      %v3410 = vadd.f32 0.0, %v3409
      %v3411 = vpop.f32.mrf.mxu0
      %v3412 = vpop.f32.mrf.mxu0
      %v3413 = vadd.f32 0.0, %v3412
      %v3414 = vpop.f32.mrf.mxu0
      %3415 = vmatprep.mubr.bf16.mxu0 0
      %3416 = vmatmul.mubr.bf16.gmra.mxu0 %v3330
      %v3417 = vpop.f32.mrf.mxu0
      %v3418 = vadd.f32 0.0, %v3417
      %v3419 = vpop.f32.mrf.mxu0
      %v3420 = vpop.f32.mrf.mxu0
      %v3421 = vadd.f32 0.0, %v3420
      %v3422 = vpop.f32.mrf.mxu0
      %3423 = vmatprep.mubr.bf16.mxu0 0
      %3424 = vmatmul.mubr.bf16.gmra.mxu0 %v3333
      %v3425 = vpop.f32.mrf.mxu0
      %v3426 = vadd.f32 0.0, %v3425
      %v3427 = vpop.f32.mrf.mxu0
      %v3428 = vpop.f32.mrf.mxu0
      %v3429 = vadd.f32 0.0, %v3428
      %v3430 = vpop.f32.mrf.mxu0
      %3431 = vdwg.mxu0
      %v3432 = vadd.f32 %v3145, %v3370
      %v3433 = vadd.f32 %v3148, %v3373
      %v3434 = vadd.f32 %v3153, %v3378
      %v3435 = vadd.f32 %v3156, %v3381
      %v3436 = vadd.f32 %v3161, %v3386
      %v3437 = vadd.f32 %v3164, %v3389
      %v3438 = vadd.f32 %v3169, %v3394
      %v3439 = vadd.f32 %v3172, %v3397
      %v3440 = vadd.f32 %v3177, %v3402
      %v3441 = vadd.f32 %v3180, %v3405
      %v3442 = vadd.f32 %v3185, %v3410
      %v3443 = vadd.f32 %v3188, %v3413
      %v3444 = vadd.f32 %v3193, %v3418
      %v3445 = vadd.f32 %v3196, %v3421
      %v3446 = vadd.f32 %v3201, %v3426
      %v3447 = vadd.f32 %v3204, %v3429
      %s3448 = scalar_lea.vmem %s163, 108
      %v3449 = vld [vmem:[%s3448] sm:$0xf]
      %v3450 = vld [vmem:[%s3448 + $0x4] sm:$0xf]
      %v3451 = vld [vmem:[%s3448 + $0xc] sm:$0xf]
      %v3452 = vld [vmem:[%s3448 + $0x10] sm:$0xf]
      %v3453 = vld [vmem:[%s3448 + $0x18] sm:$0xf]
      %v3454 = vld [vmem:[%s3448 + $0x1c] sm:$0xf]
      %v3455 = vld [vmem:[%s3448 + $0x24] sm:$0xf]
      %v3456 = vld [vmem:[%s3448 + $0x28] sm:$0xf]
      %v3457 = vld [vmem:[%s3448 + $0x30] sm:$0xf]
      %v3458 = vld [vmem:[%s3448 + $0x34] sm:$0xf]
      %v3459 = vld [vmem:[%s3448 + $0x3c] sm:$0xf]
      %v3460 = vld [vmem:[%s3448 + $0x40] sm:$0xf]
      %v3461 = vld [vmem:[%s3448 + $0x48] sm:$0xf]
      %v3462 = vld [vmem:[%s3448 + $0x4c] sm:$0xf]
      %v3463 = vld [vmem:[%s3448 + $0x54] sm:$0xf]
      %v3464 = vld [vmem:[%s3448 + $0x58] sm:$0xf]
      %v3481 = vunpack.c.l.b16 %v3449
      %v3482 = vunpack.c.l.b16 %v3450
      %v3483 = vunpack.c.l.b16 %v3451
      %v3484 = vunpack.c.l.b16 %v3452
      %v3485 = vunpack.c.l.b16 %v3453
      %v3486 = vunpack.c.l.b16 %v3454
      %v3487 = vunpack.c.l.b16 %v3455
      %v3488 = vunpack.c.l.b16 %v3456
      %v3489 = vunpack.c.l.b16 %v3457
      %v3490 = vunpack.c.l.b16 %v3458
      %v3491 = vunpack.c.l.b16 %v3459
      %v3492 = vunpack.c.l.b16 %v3460
      %v3493 = vunpack.c.l.b16 %v3461
      %v3494 = vunpack.c.l.b16 %v3462
      %v3495 = vunpack.c.l.b16 %v3463
      %v3496 = vunpack.c.l.b16 %v3464
      %v3497 = vpack.c.b16 %v3482, %v3481
      %v3498 = vpack.c.b16 %v3484, %v3483
      %v3499 = vpack.c.b16 %v3486, %v3485
      %v3500 = vpack.c.b16 %v3488, %v3487
      %v3501 = vpack.c.b16 %v3490, %v3489
      %v3502 = vpack.c.b16 %v3492, %v3491
      %v3503 = vpack.c.b16 %v3494, %v3493
      %v3504 = vpack.c.b16 %v3496, %v3495
      %v3506 = vsel %vm414, %v3497, 0
      %v3509 = vsel %vm414, %v3498, 0
      %v3512 = vsel %vm414, %v3499, 0
      %v3515 = vsel %vm414, %v3500, 0
      %v3518 = vsel %vm414, %v3501, 0
      %v3521 = vsel %vm414, %v3502, 0
      %v3524 = vsel %vm414, %v3503, 0
      %v3527 = vsel %vm414, %v3504, 0
      %3529 = vmatprep.subr.bf16.mxu0 0
      %3530 = vmatpush1.bf16.msra.mxu0 0
      %3531 = vmatprep.subr.bf16.mxu0 0
      %3532 = vmatpush1.bf16.msra.mxu0 0
      %3533 = vmatprep.subr.bf16.mxu0 0
      %3534 = vmatpush1.bf16.msra.mxu0 0
      %3535 = vmatprep.subr.bf16.mxu0 0
      %3536 = vmatpush1.bf16.msra.mxu0 0
      %3537 = vmatprep.subr.bf16.mxu0 0
      %3538 = vmatpush1.bf16.msra.mxu0 0
      %3539 = vmatprep.subr.bf16.mxu0 0
      %3540 = vmatpush1.bf16.msra.mxu0 0
      %3541 = vmatprep.subr.bf16.mxu0 0
      %3542 = vmatpush1.bf16.msra.mxu0 0
      %3543 = vmatprep.subr.bf16.mxu0 0
      %3544 = vmatpush1.bf16.msra.mxu0 %v1037
      %3545 = vmatprep.subr.bf16.mxu0 0
      %3546 = vmatpush2.bf16.msra.mxu0 0
      %3547 = vmatprep.subr.bf16.mxu0 0
      %3548 = vmatpush2.bf16.msra.mxu0 0
      %3549 = vmatprep.subr.bf16.mxu0 0
      %3550 = vmatpush2.bf16.msra.mxu0 0
      %3551 = vmatprep.subr.bf16.mxu0 0
      %3552 = vmatpush2.bf16.msra.mxu0 0
      %3553 = vmatprep.subr.bf16.mxu0 0
      %3554 = vmatpush2.bf16.msra.mxu0 0
      %3555 = vmatprep.subr.bf16.mxu0 0
      %3556 = vmatpush2.bf16.msra.mxu0 0
      %3557 = vmatprep.subr.bf16.mxu0 0
      %3558 = vmatpush2.bf16.msra.mxu0 0
      %3559 = vmatprep.subr.bf16.mxu0 0
      %3560 = vmatpush2.bf16.msra.mxu0 0
      %3561 = vmatprep.mubr.bf16.mxu0 0
      %3562 = vmatmul.mubr.bf16.gmra.mxu0 %v3506
      %v3563 = vpop.f32.mrf.mxu0
      %v3564 = vadd.f32 0.0, %v3563
      %v3565 = vpop.f32.mrf.mxu0
      %v3566 = vpop.f32.mrf.mxu0
      %v3567 = vadd.f32 0.0, %v3566
      %v3568 = vpop.f32.mrf.mxu0
      %3569 = vmatprep.mubr.bf16.mxu0 0
      %3570 = vmatmul.mubr.bf16.gmra.mxu0 %v3509
      %v3571 = vpop.f32.mrf.mxu0
      %v3572 = vadd.f32 0.0, %v3571
      %v3573 = vpop.f32.mrf.mxu0
      %v3574 = vpop.f32.mrf.mxu0
      %v3575 = vadd.f32 0.0, %v3574
      %v3576 = vpop.f32.mrf.mxu0
      %3577 = vmatprep.mubr.bf16.mxu0 0
      %3578 = vmatmul.mubr.bf16.gmra.mxu0 %v3512
      %v3579 = vpop.f32.mrf.mxu0
      %v3580 = vadd.f32 0.0, %v3579
      %v3581 = vpop.f32.mrf.mxu0
      %v3582 = vpop.f32.mrf.mxu0
      %v3583 = vadd.f32 0.0, %v3582
      %v3584 = vpop.f32.mrf.mxu0
      %3585 = vmatprep.mubr.bf16.mxu0 0
      %3586 = vmatmul.mubr.bf16.gmra.mxu0 %v3515
      %v3587 = vpop.f32.mrf.mxu0
      %v3588 = vadd.f32 0.0, %v3587
      %v3589 = vpop.f32.mrf.mxu0
      %v3590 = vpop.f32.mrf.mxu0
      %v3591 = vadd.f32 0.0, %v3590
      %v3592 = vpop.f32.mrf.mxu0
      %3593 = vmatprep.mubr.bf16.mxu0 0
      %3594 = vmatmul.mubr.bf16.gmra.mxu0 %v3518
      %v3595 = vpop.f32.mrf.mxu0
      %v3596 = vadd.f32 0.0, %v3595
      %v3597 = vpop.f32.mrf.mxu0
      %v3598 = vpop.f32.mrf.mxu0
      %v3599 = vadd.f32 0.0, %v3598
      %v3600 = vpop.f32.mrf.mxu0
      %3601 = vmatprep.mubr.bf16.mxu0 0
      %3602 = vmatmul.mubr.bf16.gmra.mxu0 %v3521
      %v3603 = vpop.f32.mrf.mxu0
      %v3604 = vadd.f32 0.0, %v3603
      %v3605 = vpop.f32.mrf.mxu0
      %v3606 = vpop.f32.mrf.mxu0
      %v3607 = vadd.f32 0.0, %v3606
      %v3608 = vpop.f32.mrf.mxu0
      %3609 = vmatprep.mubr.bf16.mxu0 0
      %3610 = vmatmul.mubr.bf16.gmra.mxu0 %v3524
      %v3611 = vpop.f32.mrf.mxu0
      %v3612 = vadd.f32 0.0, %v3611
      %v3613 = vpop.f32.mrf.mxu0
      %v3614 = vpop.f32.mrf.mxu0
      %v3615 = vadd.f32 0.0, %v3614
      %v3616 = vpop.f32.mrf.mxu0
      %3617 = vmatprep.mubr.bf16.mxu0 0
      %3618 = vmatmul.mubr.bf16.gmra.mxu0 %v3527
      %v3619 = vpop.f32.mrf.mxu0
      %v3620 = vadd.f32 0.0, %v3619
      %v3621 = vpop.f32.mrf.mxu0
      %v3622 = vpop.f32.mrf.mxu0
      %v3623 = vadd.f32 0.0, %v3622
      %v3624 = vpop.f32.mrf.mxu0
      %3625 = vdwg.mxu0
      %v3626 = vadd.f32 %v3432, %v3564
      %v3627 = vadd.f32 %v3433, %v3567
      %v3628 = vadd.f32 %v3434, %v3572
      %v3629 = vadd.f32 %v3435, %v3575
      %v3630 = vadd.f32 %v3436, %v3580
      %v3631 = vadd.f32 %v3437, %v3583
      %v3632 = vadd.f32 %v3438, %v3588
      %v3633 = vadd.f32 %v3439, %v3591
      %v3634 = vadd.f32 %v3440, %v3596
      %v3635 = vadd.f32 %v3441, %v3599
      %v3636 = vadd.f32 %v3442, %v3604
      %v3637 = vadd.f32 %v3443, %v3607
      %v3638 = vadd.f32 %v3444, %v3612
      %v3639 = vadd.f32 %v3445, %v3615
      %v3640 = vadd.f32 %v3446, %v3620
      %v3641 = vadd.f32 %v3447, %v3623
      %v3642 = vld [vmem:[%s3448] sm:$0xf]
      %v3643 = vld [vmem:[%s3448 + $0x4] sm:$0xf]
      %v3644 = vld [vmem:[%s3448 + $0x8] sm:$0x1]
      %v3645 = vld [vmem:[%s3448 + $0xc] sm:$0xf]
      %v3646 = vld [vmem:[%s3448 + $0x10] sm:$0xf]
      %v3647 = vld [vmem:[%s3448 + $0x14] sm:$0x1]
      %v3648 = vld [vmem:[%s3448 + $0x18] sm:$0xf]
      %v3649 = vld [vmem:[%s3448 + $0x1c] sm:$0xf]
      %v3650 = vld [vmem:[%s3448 + $0x20] sm:$0x1]
      %v3651 = vld [vmem:[%s3448 + $0x24] sm:$0xf]
      %v3652 = vld [vmem:[%s3448 + $0x28] sm:$0xf]
      %v3653 = vld [vmem:[%s3448 + $0x2c] sm:$0x1]
      %v3654 = vld [vmem:[%s3448 + $0x30] sm:$0xf]
      %v3655 = vld [vmem:[%s3448 + $0x34] sm:$0xf]
      %v3656 = vld [vmem:[%s3448 + $0x38] sm:$0x1]
      %v3657 = vld [vmem:[%s3448 + $0x3c] sm:$0xf]
      %v3658 = vld [vmem:[%s3448 + $0x40] sm:$0xf]
      %v3659 = vld [vmem:[%s3448 + $0x44] sm:$0x1]
      %v3660 = vld [vmem:[%s3448 + $0x48] sm:$0xf]
      %v3661 = vld [vmem:[%s3448 + $0x4c] sm:$0xf]
      %v3662 = vld [vmem:[%s3448 + $0x50] sm:$0x1]
      %v3663 = vld [vmem:[%s3448 + $0x54] sm:$0xf]
      %v3664 = vld [vmem:[%s3448 + $0x58] sm:$0xf]
      %v3665 = vld [vmem:[%s3448 + $0x5c] sm:$0x1]
      %v3667 = vshrl.u32 %v3642, 16
      %v3669 = vrot.slane %v3667, 4
      %v3670 = vshll.u32 %v3642, 16
      %v3672 = vrot.slane %v3670, 5
      %v3673 = vor.u32 %v3669, %v3672
      %v3674 = vrot.slane %v3673, 4
      %v3676 = vshll.u32 %v3643, 16
      %v3678 = vrot.slane %v3676, 5
      %v3679 = vsel %vm195, %v3674, %v3678
      %v3680 = vshrl.u32 %v3643, 16
      %v3682 = vrot.slane %v3680, 4
      %v3683 = vor.u32 %v3682, %v3678
      %v3684 = vrot.slane %v3683, 4
      %v3686 = vshll.u32 %v3644, 16
      %v3688 = vrot.slane %v3686, 5
      %v3689 = vsel %vm195, %v3684, %v3688
      %v3691 = vshrl.u32 %v3645, 16
      %v3693 = vrot.slane %v3691, 4
      %v3694 = vshll.u32 %v3645, 16
      %v3696 = vrot.slane %v3694, 5
      %v3697 = vor.u32 %v3693, %v3696
      %v3698 = vrot.slane %v3697, 4
      %v3700 = vshll.u32 %v3646, 16
      %v3702 = vrot.slane %v3700, 5
      %v3703 = vsel %vm195, %v3698, %v3702
      %v3704 = vshrl.u32 %v3646, 16
      %v3706 = vrot.slane %v3704, 4
      %v3707 = vor.u32 %v3706, %v3702
      %v3708 = vrot.slane %v3707, 4
      %v3710 = vshll.u32 %v3647, 16
      %v3712 = vrot.slane %v3710, 5
      %v3713 = vsel %vm195, %v3708, %v3712
      %v3715 = vshrl.u32 %v3648, 16
      %v3717 = vrot.slane %v3715, 4
      %v3718 = vshll.u32 %v3648, 16
      %v3720 = vrot.slane %v3718, 5
      %v3721 = vor.u32 %v3717, %v3720
      %v3722 = vrot.slane %v3721, 4
      %v3724 = vshll.u32 %v3649, 16
      %v3726 = vrot.slane %v3724, 5
      %v3727 = vsel %vm195, %v3722, %v3726
      %v3728 = vshrl.u32 %v3649, 16
      %v3730 = vrot.slane %v3728, 4
      %v3731 = vor.u32 %v3730, %v3726
      %v3732 = vrot.slane %v3731, 4
      %v3734 = vshll.u32 %v3650, 16
      %v3736 = vrot.slane %v3734, 5
      %v3737 = vsel %vm195, %v3732, %v3736
      %v3739 = vshrl.u32 %v3651, 16
      %v3741 = vrot.slane %v3739, 4
      %v3742 = vshll.u32 %v3651, 16
      %v3744 = vrot.slane %v3742, 5
      %v3745 = vor.u32 %v3741, %v3744
      %v3746 = vrot.slane %v3745, 4
      %v3748 = vshll.u32 %v3652, 16
      %v3750 = vrot.slane %v3748, 5
      %v3751 = vsel %vm195, %v3746, %v3750
      %v3752 = vshrl.u32 %v3652, 16
      %v3754 = vrot.slane %v3752, 4
      %v3755 = vor.u32 %v3754, %v3750
      %v3756 = vrot.slane %v3755, 4
      %v3758 = vshll.u32 %v3653, 16
      %v3760 = vrot.slane %v3758, 5
      %v3761 = vsel %vm195, %v3756, %v3760
      %v3763 = vshrl.u32 %v3654, 16
      %v3765 = vrot.slane %v3763, 4
      %v3766 = vshll.u32 %v3654, 16
      %v3768 = vrot.slane %v3766, 5
      %v3769 = vor.u32 %v3765, %v3768
      %v3770 = vrot.slane %v3769, 4
      %v3772 = vshll.u32 %v3655, 16
      %v3774 = vrot.slane %v3772, 5
      %v3775 = vsel %vm195, %v3770, %v3774
      %v3776 = vshrl.u32 %v3655, 16
      %v3778 = vrot.slane %v3776, 4
      %v3779 = vor.u32 %v3778, %v3774
      %v3780 = vrot.slane %v3779, 4
      %v3782 = vshll.u32 %v3656, 16
      %v3784 = vrot.slane %v3782, 5
      %v3785 = vsel %vm195, %v3780, %v3784
      %v3787 = vshrl.u32 %v3657, 16
      %v3789 = vrot.slane %v3787, 4
      %v3790 = vshll.u32 %v3657, 16
      %v3792 = vrot.slane %v3790, 5
      %v3793 = vor.u32 %v3789, %v3792
      %v3794 = vrot.slane %v3793, 4
      %v3796 = vshll.u32 %v3658, 16
      %v3798 = vrot.slane %v3796, 5
      %v3799 = vsel %vm195, %v3794, %v3798
      %v3800 = vshrl.u32 %v3658, 16
      %v3802 = vrot.slane %v3800, 4
      %v3803 = vor.u32 %v3802, %v3798
      %v3804 = vrot.slane %v3803, 4
      %v3806 = vshll.u32 %v3659, 16
      %v3808 = vrot.slane %v3806, 5
      %v3809 = vsel %vm195, %v3804, %v3808
      %v3811 = vshrl.u32 %v3660, 16
      %v3813 = vrot.slane %v3811, 4
      %v3814 = vshll.u32 %v3660, 16
      %v3816 = vrot.slane %v3814, 5
      %v3817 = vor.u32 %v3813, %v3816
      %v3818 = vrot.slane %v3817, 4
      %v3820 = vshll.u32 %v3661, 16
      %v3822 = vrot.slane %v3820, 5
      %v3823 = vsel %vm195, %v3818, %v3822
      %v3824 = vshrl.u32 %v3661, 16
      %v3826 = vrot.slane %v3824, 4
      %v3827 = vor.u32 %v3826, %v3822
      %v3828 = vrot.slane %v3827, 4
      %v3830 = vshll.u32 %v3662, 16
      %v3832 = vrot.slane %v3830, 5
      %v3833 = vsel %vm195, %v3828, %v3832
      %v3835 = vshrl.u32 %v3663, 16
      %v3837 = vrot.slane %v3835, 4
      %v3838 = vshll.u32 %v3663, 16
      %v3840 = vrot.slane %v3838, 5
      %v3841 = vor.u32 %v3837, %v3840
      %v3842 = vrot.slane %v3841, 4
      %v3844 = vshll.u32 %v3664, 16
      %v3846 = vrot.slane %v3844, 5
      %v3847 = vsel %vm195, %v3842, %v3846
      %v3848 = vshrl.u32 %v3664, 16
      %v3850 = vrot.slane %v3848, 4
      %v3851 = vor.u32 %v3850, %v3846
      %v3852 = vrot.slane %v3851, 4
      %v3854 = vshll.u32 %v3665, 16
      %v3856 = vrot.slane %v3854, 5
      %v3857 = vsel %vm195, %v3852, %v3856
      %v3858 = vunpack.c.l.b16 %v3679
      %v3859 = vunpack.c.l.b16 %v3689
      %v3860 = vunpack.c.l.b16 %v3703
      %v3861 = vunpack.c.l.b16 %v3713
      %v3862 = vunpack.c.l.b16 %v3727
      %v3863 = vunpack.c.l.b16 %v3737
      %v3864 = vunpack.c.l.b16 %v3751
      %v3865 = vunpack.c.l.b16 %v3761
      %v3866 = vunpack.c.l.b16 %v3775
      %v3867 = vunpack.c.l.b16 %v3785
      %v3868 = vunpack.c.l.b16 %v3799
      %v3869 = vunpack.c.l.b16 %v3809
      %v3870 = vunpack.c.l.b16 %v3823
      %v3871 = vunpack.c.l.b16 %v3833
      %v3872 = vunpack.c.l.b16 %v3847
      %v3873 = vunpack.c.l.b16 %v3857
      %v3874 = vpack.c.b16 %v3859, %v3858
      %v3875 = vpack.c.b16 %v3861, %v3860
      %v3876 = vpack.c.b16 %v3863, %v3862
      %v3877 = vpack.c.b16 %v3865, %v3864
      %v3878 = vpack.c.b16 %v3867, %v3866
      %v3879 = vpack.c.b16 %v3869, %v3868
      %v3880 = vpack.c.b16 %v3871, %v3870
      %v3881 = vpack.c.b16 %v3873, %v3872
      %v3883 = vsel %vm414, %v3874, 0
      %v3886 = vsel %vm414, %v3875, 0
      %v3889 = vsel %vm414, %v3876, 0
      %v3892 = vsel %vm414, %v3877, 0
      %v3895 = vsel %vm414, %v3878, 0
      %v3898 = vsel %vm414, %v3879, 0
      %v3901 = vsel %vm414, %v3880, 0
      %v3904 = vsel %vm414, %v3881, 0
      %3906 = vmatprep.subr.bf16.mxu0 0
      %3907 = vmatpush1.bf16.msra.mxu0 0
      %3908 = vmatprep.subr.bf16.mxu0 0
      %3909 = vmatpush1.bf16.msra.mxu0 0
      %3910 = vmatprep.subr.bf16.mxu0 0
      %3911 = vmatpush1.bf16.msra.mxu0 0
      %3912 = vmatprep.subr.bf16.mxu0 0
      %3913 = vmatpush1.bf16.msra.mxu0 0
      %3914 = vmatprep.subr.bf16.mxu0 0
      %3915 = vmatpush1.bf16.msra.mxu0 0
      %3916 = vmatprep.subr.bf16.mxu0 0
      %3917 = vmatpush1.bf16.msra.mxu0 0
      %3918 = vmatprep.subr.bf16.mxu0 0
      %3919 = vmatpush1.bf16.msra.mxu0 0
      %3920 = vmatprep.subr.bf16.mxu0 0
      %3921 = vmatpush1.bf16.msra.mxu0 %v1419
      %3922 = vmatprep.subr.bf16.mxu0 0
      %3923 = vmatpush2.bf16.msra.mxu0 0
      %3924 = vmatprep.subr.bf16.mxu0 0
      %3925 = vmatpush2.bf16.msra.mxu0 0
      %3926 = vmatprep.subr.bf16.mxu0 0
      %3927 = vmatpush2.bf16.msra.mxu0 0
      %3928 = vmatprep.subr.bf16.mxu0 0
      %3929 = vmatpush2.bf16.msra.mxu0 0
      %3930 = vmatprep.subr.bf16.mxu0 0
      %3931 = vmatpush2.bf16.msra.mxu0 0
      %3932 = vmatprep.subr.bf16.mxu0 0
      %3933 = vmatpush2.bf16.msra.mxu0 0
      %3934 = vmatprep.subr.bf16.mxu0 0
      %3935 = vmatpush2.bf16.msra.mxu0 0
      %3936 = vmatprep.subr.bf16.mxu0 0
      %3937 = vmatpush2.bf16.msra.mxu0 0
      %3938 = vmatprep.mubr.bf16.mxu0 0
      %3939 = vmatmul.mubr.bf16.gmra.mxu0 %v3883
      %v3940 = vpop.f32.mrf.mxu0
      %v3941 = vadd.f32 0.0, %v3940
      %v3942 = vpop.f32.mrf.mxu0
      %v3943 = vpop.f32.mrf.mxu0
      %v3944 = vadd.f32 0.0, %v3943
      %v3945 = vpop.f32.mrf.mxu0
      %3946 = vmatprep.mubr.bf16.mxu0 0
      %3947 = vmatmul.mubr.bf16.gmra.mxu0 %v3886
      %v3948 = vpop.f32.mrf.mxu0
      %v3949 = vadd.f32 0.0, %v3948
      %v3950 = vpop.f32.mrf.mxu0
      %v3951 = vpop.f32.mrf.mxu0
      %v3952 = vadd.f32 0.0, %v3951
      %v3953 = vpop.f32.mrf.mxu0
      %3954 = vmatprep.mubr.bf16.mxu0 0
      %3955 = vmatmul.mubr.bf16.gmra.mxu0 %v3889
      %v3956 = vpop.f32.mrf.mxu0
      %v3957 = vadd.f32 0.0, %v3956
      %v3958 = vpop.f32.mrf.mxu0
      %v3959 = vpop.f32.mrf.mxu0
      %v3960 = vadd.f32 0.0, %v3959
      %v3961 = vpop.f32.mrf.mxu0
      %3962 = vmatprep.mubr.bf16.mxu0 0
      %3963 = vmatmul.mubr.bf16.gmra.mxu0 %v3892
      %v3964 = vpop.f32.mrf.mxu0
      %v3965 = vadd.f32 0.0, %v3964
      %v3966 = vpop.f32.mrf.mxu0
      %v3967 = vpop.f32.mrf.mxu0
      %v3968 = vadd.f32 0.0, %v3967
      %v3969 = vpop.f32.mrf.mxu0
      %3970 = vmatprep.mubr.bf16.mxu0 0
      %3971 = vmatmul.mubr.bf16.gmra.mxu0 %v3895
      %v3972 = vpop.f32.mrf.mxu0
      %v3973 = vadd.f32 0.0, %v3972
      %v3974 = vpop.f32.mrf.mxu0
      %v3975 = vpop.f32.mrf.mxu0
      %v3976 = vadd.f32 0.0, %v3975
      %v3977 = vpop.f32.mrf.mxu0
      %3978 = vmatprep.mubr.bf16.mxu0 0
      %3979 = vmatmul.mubr.bf16.gmra.mxu0 %v3898
      %v3980 = vpop.f32.mrf.mxu0
      %v3981 = vadd.f32 0.0, %v3980
      %v3982 = vpop.f32.mrf.mxu0
      %v3983 = vpop.f32.mrf.mxu0
      %v3984 = vadd.f32 0.0, %v3983
      %v3985 = vpop.f32.mrf.mxu0
      %3986 = vmatprep.mubr.bf16.mxu0 0
      %3987 = vmatmul.mubr.bf16.gmra.mxu0 %v3901
      %v3988 = vpop.f32.mrf.mxu0
      %v3989 = vadd.f32 0.0, %v3988
      %v3990 = vpop.f32.mrf.mxu0
      %v3991 = vpop.f32.mrf.mxu0
      %v3992 = vadd.f32 0.0, %v3991
      %v3993 = vpop.f32.mrf.mxu0
      %3994 = vmatprep.mubr.bf16.mxu0 0
      %3995 = vmatmul.mubr.bf16.gmra.mxu0 %v3904
      %v3996 = vpop.f32.mrf.mxu0
      %v3997 = vadd.f32 0.0, %v3996
      %v3998 = vpop.f32.mrf.mxu0
      %v3999 = vpop.f32.mrf.mxu0
      %v4000 = vadd.f32 0.0, %v3999
      %v4001 = vpop.f32.mrf.mxu0
      %4002 = vdwg.mxu0
      %v4003 = vadd.f32 %v3626, %v3941
      %v4004 = vadd.f32 %v3627, %v3944
      %v4005 = vadd.f32 %v3628, %v3949
      %v4006 = vadd.f32 %v3629, %v3952
      %v4007 = vadd.f32 %v3630, %v3957
      %v4008 = vadd.f32 %v3631, %v3960
      %v4009 = vadd.f32 %v3632, %v3965
      %v4010 = vadd.f32 %v3633, %v3968
      %v4011 = vadd.f32 %v3634, %v3973
      %v4012 = vadd.f32 %v3635, %v3976
      %v4013 = vadd.f32 %v3636, %v3981
      %v4014 = vadd.f32 %v3637, %v3984
      %v4015 = vadd.f32 %v3638, %v3989
      %v4016 = vadd.f32 %v3639, %v3992
      %v4017 = vadd.f32 %v3640, %v3997
      %v4018 = vadd.f32 %v3641, %v4000
      %v4019 = vld [vmem:[%s3448] sm:$0xe]
      %v4020 = vld [vmem:[%s3448 + $0xc] sm:$0xe]
      %v4021 = vld [vmem:[%s3448 + $0x18] sm:$0xe]
      %v4022 = vld [vmem:[%s3448 + $0x24] sm:$0xe]
      %v4023 = vld [vmem:[%s3448 + $0x30] sm:$0xe]
      %v4024 = vld [vmem:[%s3448 + $0x3c] sm:$0xe]
      %v4025 = vld [vmem:[%s3448 + $0x48] sm:$0xe]
      %v4026 = vld [vmem:[%s3448 + $0x54] sm:$0xe]
      %v4051 = vrot.slane %v4019, 5
      %v4052 = vrot.slane %v4051, 4
      %v4053 = vrot.slane %v3643, 5
      %v4054 = vsel %vm730, %v4052, %v4053
      %v4055 = vrot.slane %v4053, 4
      %v4056 = vrot.slane %v3644, 5
      %v4057 = vsel %vm730, %v4055, %v4056
      %v4058 = vrot.slane %v4020, 5
      %v4059 = vrot.slane %v4058, 4
      %v4060 = vrot.slane %v3646, 5
      %v4061 = vsel %vm730, %v4059, %v4060
      %v4062 = vrot.slane %v4060, 4
      %v4063 = vrot.slane %v3647, 5
      %v4064 = vsel %vm730, %v4062, %v4063
      %v4065 = vrot.slane %v4021, 5
      %v4066 = vrot.slane %v4065, 4
      %v4067 = vrot.slane %v3649, 5
      %v4068 = vsel %vm730, %v4066, %v4067
      %v4069 = vrot.slane %v4067, 4
      %v4070 = vrot.slane %v3650, 5
      %v4071 = vsel %vm730, %v4069, %v4070
      %v4072 = vrot.slane %v4022, 5
      %v4073 = vrot.slane %v4072, 4
      %v4074 = vrot.slane %v3652, 5
      %v4075 = vsel %vm730, %v4073, %v4074
      %v4076 = vrot.slane %v4074, 4
      %v4077 = vrot.slane %v3653, 5
      %v4078 = vsel %vm730, %v4076, %v4077
      %v4079 = vrot.slane %v4023, 5
      %v4080 = vrot.slane %v4079, 4
      %v4081 = vrot.slane %v3655, 5
      %v4082 = vsel %vm730, %v4080, %v4081
      %v4083 = vrot.slane %v4081, 4
      %v4084 = vrot.slane %v3656, 5
      %v4085 = vsel %vm730, %v4083, %v4084
      %v4086 = vrot.slane %v4024, 5
      %v4087 = vrot.slane %v4086, 4
      %v4088 = vrot.slane %v3658, 5
      %v4089 = vsel %vm730, %v4087, %v4088
      %v4090 = vrot.slane %v4088, 4
      %v4091 = vrot.slane %v3659, 5
      %v4092 = vsel %vm730, %v4090, %v4091
      %v4093 = vrot.slane %v4025, 5
      %v4094 = vrot.slane %v4093, 4
      %v4095 = vrot.slane %v3661, 5
      %v4096 = vsel %vm730, %v4094, %v4095
      %v4097 = vrot.slane %v4095, 4
      %v4098 = vrot.slane %v3662, 5
      %v4099 = vsel %vm730, %v4097, %v4098
      %v4100 = vrot.slane %v4026, 5
      %v4101 = vrot.slane %v4100, 4
      %v4102 = vrot.slane %v3664, 5
      %v4103 = vsel %vm730, %v4101, %v4102
      %v4104 = vrot.slane %v4102, 4
      %v4105 = vrot.slane %v3665, 5
      %v4106 = vsel %vm730, %v4104, %v4105
      %v4107 = vunpack.c.l.b16 %v4054
      %v4108 = vunpack.c.l.b16 %v4057
      %v4109 = vunpack.c.l.b16 %v4061
      %v4110 = vunpack.c.l.b16 %v4064
      %v4111 = vunpack.c.l.b16 %v4068
      %v4112 = vunpack.c.l.b16 %v4071
      %v4113 = vunpack.c.l.b16 %v4075
      %v4114 = vunpack.c.l.b16 %v4078
      %v4115 = vunpack.c.l.b16 %v4082
      %v4116 = vunpack.c.l.b16 %v4085
      %v4117 = vunpack.c.l.b16 %v4089
      %v4118 = vunpack.c.l.b16 %v4092
      %v4119 = vunpack.c.l.b16 %v4096
      %v4120 = vunpack.c.l.b16 %v4099
      %v4121 = vunpack.c.l.b16 %v4103
      %v4122 = vunpack.c.l.b16 %v4106
      %v4123 = vpack.c.b16 %v4108, %v4107
      %v4124 = vpack.c.b16 %v4110, %v4109
      %v4125 = vpack.c.b16 %v4112, %v4111
      %v4126 = vpack.c.b16 %v4114, %v4113
      %v4127 = vpack.c.b16 %v4116, %v4115
      %v4128 = vpack.c.b16 %v4118, %v4117
      %v4129 = vpack.c.b16 %v4120, %v4119
      %v4130 = vpack.c.b16 %v4122, %v4121
      %v4132 = vsel %vm414, %v4123, 0
      %v4135 = vsel %vm414, %v4124, 0
      %v4138 = vsel %vm414, %v4125, 0
      %v4141 = vsel %vm414, %v4126, 0
      %v4144 = vsel %vm414, %v4127, 0
      %v4147 = vsel %vm414, %v4128, 0
      %v4150 = vsel %vm414, %v4129, 0
      %v4153 = vsel %vm414, %v4130, 0
      %4155 = vmatprep.subr.bf16.mxu0 0
      %4156 = vmatpush1.bf16.msra.mxu0 0
      %4157 = vmatprep.subr.bf16.mxu0 0
      %4158 = vmatpush1.bf16.msra.mxu0 0
      %4159 = vmatprep.subr.bf16.mxu0 0
      %4160 = vmatpush1.bf16.msra.mxu0 0
      %4161 = vmatprep.subr.bf16.mxu0 0
      %4162 = vmatpush1.bf16.msra.mxu0 0
      %4163 = vmatprep.subr.bf16.mxu0 0
      %4164 = vmatpush1.bf16.msra.mxu0 0
      %4165 = vmatprep.subr.bf16.mxu0 0
      %4166 = vmatpush1.bf16.msra.mxu0 0
      %4167 = vmatprep.subr.bf16.mxu0 0
      %4168 = vmatpush1.bf16.msra.mxu0 0
      %4169 = vmatprep.subr.bf16.mxu0 0
      %4170 = vmatpush1.bf16.msra.mxu0 %v1673
      %4171 = vmatprep.subr.bf16.mxu0 0
      %4172 = vmatpush2.bf16.msra.mxu0 0
      %4173 = vmatprep.subr.bf16.mxu0 0
      %4174 = vmatpush2.bf16.msra.mxu0 0
      %4175 = vmatprep.subr.bf16.mxu0 0
      %4176 = vmatpush2.bf16.msra.mxu0 0
      %4177 = vmatprep.subr.bf16.mxu0 0
      %4178 = vmatpush2.bf16.msra.mxu0 0
      %4179 = vmatprep.subr.bf16.mxu0 0
      %4180 = vmatpush2.bf16.msra.mxu0 0
      %4181 = vmatprep.subr.bf16.mxu0 0
      %4182 = vmatpush2.bf16.msra.mxu0 0
      %4183 = vmatprep.subr.bf16.mxu0 0
      %4184 = vmatpush2.bf16.msra.mxu0 0
      %4185 = vmatprep.subr.bf16.mxu0 0
      %4186 = vmatpush2.bf16.msra.mxu0 0
      %4187 = vmatprep.mubr.bf16.mxu0 0
      %4188 = vmatmul.mubr.bf16.gmra.mxu0 %v4132
      %v4189 = vpop.f32.mrf.mxu0
      %v4190 = vadd.f32 0.0, %v4189
      %v4191 = vpop.f32.mrf.mxu0
      %v4192 = vpop.f32.mrf.mxu0
      %v4193 = vadd.f32 0.0, %v4192
      %v4194 = vpop.f32.mrf.mxu0
      %4195 = vmatprep.mubr.bf16.mxu0 0
      %4196 = vmatmul.mubr.bf16.gmra.mxu0 %v4135
      %v4197 = vpop.f32.mrf.mxu0
      %v4198 = vadd.f32 0.0, %v4197
      %v4199 = vpop.f32.mrf.mxu0
      %v4200 = vpop.f32.mrf.mxu0
      %v4201 = vadd.f32 0.0, %v4200
      %v4202 = vpop.f32.mrf.mxu0
      %4203 = vmatprep.mubr.bf16.mxu0 0
      %4204 = vmatmul.mubr.bf16.gmra.mxu0 %v4138
      %v4205 = vpop.f32.mrf.mxu0
      %v4206 = vadd.f32 0.0, %v4205
      %v4207 = vpop.f32.mrf.mxu0
      %v4208 = vpop.f32.mrf.mxu0
      %v4209 = vadd.f32 0.0, %v4208
      %v4210 = vpop.f32.mrf.mxu0
      %4211 = vmatprep.mubr.bf16.mxu0 0
      %4212 = vmatmul.mubr.bf16.gmra.mxu0 %v4141
      %v4213 = vpop.f32.mrf.mxu0
      %v4214 = vadd.f32 0.0, %v4213
      %v4215 = vpop.f32.mrf.mxu0
      %v4216 = vpop.f32.mrf.mxu0
      %v4217 = vadd.f32 0.0, %v4216
      %v4218 = vpop.f32.mrf.mxu0
      %4219 = vmatprep.mubr.bf16.mxu0 0
      %4220 = vmatmul.mubr.bf16.gmra.mxu0 %v4144
      %v4221 = vpop.f32.mrf.mxu0
      %v4222 = vadd.f32 0.0, %v4221
      %v4223 = vpop.f32.mrf.mxu0
      %v4224 = vpop.f32.mrf.mxu0
      %v4225 = vadd.f32 0.0, %v4224
      %v4226 = vpop.f32.mrf.mxu0
      %4227 = vmatprep.mubr.bf16.mxu0 0
      %4228 = vmatmul.mubr.bf16.gmra.mxu0 %v4147
      %v4229 = vpop.f32.mrf.mxu0
      %v4230 = vadd.f32 0.0, %v4229
      %v4231 = vpop.f32.mrf.mxu0
      %v4232 = vpop.f32.mrf.mxu0
      %v4233 = vadd.f32 0.0, %v4232
      %v4234 = vpop.f32.mrf.mxu0
      %4235 = vmatprep.mubr.bf16.mxu0 0
      %4236 = vmatmul.mubr.bf16.gmra.mxu0 %v4150
      %v4237 = vpop.f32.mrf.mxu0
      %v4238 = vadd.f32 0.0, %v4237
      %v4239 = vpop.f32.mrf.mxu0
      %v4240 = vpop.f32.mrf.mxu0
      %v4241 = vadd.f32 0.0, %v4240
      %v4242 = vpop.f32.mrf.mxu0
      %4243 = vmatprep.mubr.bf16.mxu0 0
      %4244 = vmatmul.mubr.bf16.gmra.mxu0 %v4153
      %v4245 = vpop.f32.mrf.mxu0
      %v4246 = vadd.f32 0.0, %v4245
      %v4247 = vpop.f32.mrf.mxu0
      %v4248 = vpop.f32.mrf.mxu0
      %v4249 = vadd.f32 0.0, %v4248
      %v4250 = vpop.f32.mrf.mxu0
      %4251 = vdwg.mxu0
      %v4252 = vadd.f32 %v4003, %v4190
      %v4253 = vadd.f32 %v4004, %v4193
      %v4254 = vadd.f32 %v4005, %v4198
      %v4255 = vadd.f32 %v4006, %v4201
      %v4256 = vadd.f32 %v4007, %v4206
      %v4257 = vadd.f32 %v4008, %v4209
      %v4258 = vadd.f32 %v4009, %v4214
      %v4259 = vadd.f32 %v4010, %v4217
      %v4260 = vadd.f32 %v4011, %v4222
      %v4261 = vadd.f32 %v4012, %v4225
      %v4262 = vadd.f32 %v4013, %v4230
      %v4263 = vadd.f32 %v4014, %v4233
      %v4264 = vadd.f32 %v4015, %v4238
      %v4265 = vadd.f32 %v4016, %v4241
      %v4266 = vadd.f32 %v4017, %v4246
      %v4267 = vadd.f32 %v4018, %v4249
      %s4268 = scalar_lea.vmem %s163, 120
      %v4269 = vld [vmem:[%s4268] sm:$0xf]
      %v4270 = vld [vmem:[%s4268 + $0x4] sm:$0xf]
      %v4271 = vld [vmem:[%s4268 + $0xc] sm:$0xf]
      %v4272 = vld [vmem:[%s4268 + $0x10] sm:$0xf]
      %v4273 = vld [vmem:[%s4268 + $0x18] sm:$0xf]
      %v4274 = vld [vmem:[%s4268 + $0x1c] sm:$0xf]
      %v4275 = vld [vmem:[%s4268 + $0x24] sm:$0xf]
      %v4276 = vld [vmem:[%s4268 + $0x28] sm:$0xf]
      %v4277 = vld [vmem:[%s4268 + $0x30] sm:$0xf]
      %v4278 = vld [vmem:[%s4268 + $0x34] sm:$0xf]
      %v4279 = vld [vmem:[%s4268 + $0x3c] sm:$0xf]
      %v4280 = vld [vmem:[%s4268 + $0x40] sm:$0xf]
      %v4281 = vld [vmem:[%s4268 + $0x48] sm:$0xf]
      %v4282 = vld [vmem:[%s4268 + $0x4c] sm:$0xf]
      %v4283 = vld [vmem:[%s4268 + $0x54] sm:$0xf]
      %v4284 = vld [vmem:[%s4268 + $0x58] sm:$0xf]
      %v4301 = vunpack.c.l.b16 %v4269
      %v4302 = vunpack.c.l.b16 %v4270
      %v4303 = vunpack.c.l.b16 %v4271
      %v4304 = vunpack.c.l.b16 %v4272
      %v4305 = vunpack.c.l.b16 %v4273
      %v4306 = vunpack.c.l.b16 %v4274
      %v4307 = vunpack.c.l.b16 %v4275
      %v4308 = vunpack.c.l.b16 %v4276
      %v4309 = vunpack.c.l.b16 %v4277
      %v4310 = vunpack.c.l.b16 %v4278
      %v4311 = vunpack.c.l.b16 %v4279
      %v4312 = vunpack.c.l.b16 %v4280
      %v4313 = vunpack.c.l.b16 %v4281
      %v4314 = vunpack.c.l.b16 %v4282
      %v4315 = vunpack.c.l.b16 %v4283
      %v4316 = vunpack.c.l.b16 %v4284
      %v4317 = vpack.c.b16 %v4302, %v4301
      %v4318 = vpack.c.b16 %v4304, %v4303
      %v4319 = vpack.c.b16 %v4306, %v4305
      %v4320 = vpack.c.b16 %v4308, %v4307
      %v4321 = vpack.c.b16 %v4310, %v4309
      %v4322 = vpack.c.b16 %v4312, %v4311
      %v4323 = vpack.c.b16 %v4314, %v4313
      %v4324 = vpack.c.b16 %v4316, %v4315
      %v4326 = vsel %vm414, %v4317, 0
      %v4329 = vsel %vm414, %v4318, 0
      %v4332 = vsel %vm414, %v4319, 0
      %v4335 = vsel %vm414, %v4320, 0
      %v4338 = vsel %vm414, %v4321, 0
      %v4341 = vsel %vm414, %v4322, 0
      %v4344 = vsel %vm414, %v4323, 0
      %v4347 = vsel %vm414, %v4324, 0
      %4349 = vmatprep.subr.bf16.mxu0 0
      %4350 = vmatpush1.bf16.msra.mxu0 0
      %4351 = vmatprep.subr.bf16.mxu0 0
      %4352 = vmatpush1.bf16.msra.mxu0 0
      %4353 = vmatprep.subr.bf16.mxu0 0
      %4354 = vmatpush1.bf16.msra.mxu0 0
      %4355 = vmatprep.subr.bf16.mxu0 0
      %4356 = vmatpush1.bf16.msra.mxu0 0
      %4357 = vmatprep.subr.bf16.mxu0 0
      %4358 = vmatpush1.bf16.msra.mxu0 0
      %4359 = vmatprep.subr.bf16.mxu0 0
      %4360 = vmatpush1.bf16.msra.mxu0 0
      %4361 = vmatprep.subr.bf16.mxu0 0
      %4362 = vmatpush1.bf16.msra.mxu0 0
      %4363 = vmatprep.subr.bf16.mxu0 0
      %4364 = vmatpush1.bf16.msra.mxu0 %v1872
      %4365 = vmatprep.subr.bf16.mxu0 0
      %4366 = vmatpush2.bf16.msra.mxu0 0
      %4367 = vmatprep.subr.bf16.mxu0 0
      %4368 = vmatpush2.bf16.msra.mxu0 0
      %4369 = vmatprep.subr.bf16.mxu0 0
      %4370 = vmatpush2.bf16.msra.mxu0 0
      %4371 = vmatprep.subr.bf16.mxu0 0
      %4372 = vmatpush2.bf16.msra.mxu0 0
      %4373 = vmatprep.subr.bf16.mxu0 0
      %4374 = vmatpush2.bf16.msra.mxu0 0
      %4375 = vmatprep.subr.bf16.mxu0 0
      %4376 = vmatpush2.bf16.msra.mxu0 0
      %4377 = vmatprep.subr.bf16.mxu0 0
      %4378 = vmatpush2.bf16.msra.mxu0 0
      %4379 = vmatprep.subr.bf16.mxu0 0
      %4380 = vmatpush2.bf16.msra.mxu0 0
      %4381 = vmatprep.mubr.bf16.mxu0 0
      %4382 = vmatmul.mubr.bf16.gmra.mxu0 %v4326
      %v4383 = vpop.f32.mrf.mxu0
      %v4384 = vadd.f32 0.0, %v4383
      %v4385 = vpop.f32.mrf.mxu0
      %v4386 = vpop.f32.mrf.mxu0
      %v4387 = vadd.f32 0.0, %v4386
      %v4388 = vpop.f32.mrf.mxu0
      %4389 = vmatprep.mubr.bf16.mxu0 0
      %4390 = vmatmul.mubr.bf16.gmra.mxu0 %v4329
      %v4391 = vpop.f32.mrf.mxu0
      %v4392 = vadd.f32 0.0, %v4391
      %v4393 = vpop.f32.mrf.mxu0
      %v4394 = vpop.f32.mrf.mxu0
      %v4395 = vadd.f32 0.0, %v4394
      %v4396 = vpop.f32.mrf.mxu0
      %4397 = vmatprep.mubr.bf16.mxu0 0
      %4398 = vmatmul.mubr.bf16.gmra.mxu0 %v4332
      %v4399 = vpop.f32.mrf.mxu0
      %v4400 = vadd.f32 0.0, %v4399
      %v4401 = vpop.f32.mrf.mxu0
      %v4402 = vpop.f32.mrf.mxu0
      %v4403 = vadd.f32 0.0, %v4402
      %v4404 = vpop.f32.mrf.mxu0
      %4405 = vmatprep.mubr.bf16.mxu0 0
      %4406 = vmatmul.mubr.bf16.gmra.mxu0 %v4335
      %v4407 = vpop.f32.mrf.mxu0
      %v4408 = vadd.f32 0.0, %v4407
      %v4409 = vpop.f32.mrf.mxu0
      %v4410 = vpop.f32.mrf.mxu0
      %v4411 = vadd.f32 0.0, %v4410
      %v4412 = vpop.f32.mrf.mxu0
      %4413 = vmatprep.mubr.bf16.mxu0 0
      %4414 = vmatmul.mubr.bf16.gmra.mxu0 %v4338
      %v4415 = vpop.f32.mrf.mxu0
      %v4416 = vadd.f32 0.0, %v4415
      %v4417 = vpop.f32.mrf.mxu0
      %v4418 = vpop.f32.mrf.mxu0
      %v4419 = vadd.f32 0.0, %v4418
      %v4420 = vpop.f32.mrf.mxu0
      %4421 = vmatprep.mubr.bf16.mxu0 0
      %4422 = vmatmul.mubr.bf16.gmra.mxu0 %v4341
      %v4423 = vpop.f32.mrf.mxu0
      %v4424 = vadd.f32 0.0, %v4423
      %v4425 = vpop.f32.mrf.mxu0
      %v4426 = vpop.f32.mrf.mxu0
      %v4427 = vadd.f32 0.0, %v4426
      %v4428 = vpop.f32.mrf.mxu0
      %4429 = vmatprep.mubr.bf16.mxu0 0
      %4430 = vmatmul.mubr.bf16.gmra.mxu0 %v4344
      %v4431 = vpop.f32.mrf.mxu0
      %v4432 = vadd.f32 0.0, %v4431
      %v4433 = vpop.f32.mrf.mxu0
      %v4434 = vpop.f32.mrf.mxu0
      %v4435 = vadd.f32 0.0, %v4434
      %v4436 = vpop.f32.mrf.mxu0
      %4437 = vmatprep.mubr.bf16.mxu0 0
      %4438 = vmatmul.mubr.bf16.gmra.mxu0 %v4347
      %v4439 = vpop.f32.mrf.mxu0
      %v4440 = vadd.f32 0.0, %v4439
      %v4441 = vpop.f32.mrf.mxu0
      %v4442 = vpop.f32.mrf.mxu0
      %v4443 = vadd.f32 0.0, %v4442
      %v4444 = vpop.f32.mrf.mxu0
      %4445 = vdwg.mxu0
      %v4446 = vadd.f32 %v4252, %v4384
      %v4447 = vadd.f32 %v4253, %v4387
      %v4448 = vadd.f32 %v4254, %v4392
      %v4449 = vadd.f32 %v4255, %v4395
      %v4450 = vadd.f32 %v4256, %v4400
      %v4451 = vadd.f32 %v4257, %v4403
      %v4452 = vadd.f32 %v4258, %v4408
      %v4453 = vadd.f32 %v4259, %v4411
      %v4454 = vadd.f32 %v4260, %v4416
      %v4455 = vadd.f32 %v4261, %v4419
      %v4456 = vadd.f32 %v4262, %v4424
      %v4457 = vadd.f32 %v4263, %v4427
      %v4458 = vadd.f32 %v4264, %v4432
      %v4459 = vadd.f32 %v4265, %v4435
      %v4460 = vadd.f32 %v4266, %v4440
      %v4461 = vadd.f32 %v4267, %v4443
      %v4462 = vld [vmem:[%s4268] sm:$0xf]
      %v4463 = vld [vmem:[%s4268 + $0x4] sm:$0xf]
      %v4464 = vld [vmem:[%s4268 + $0x8] sm:$0x1]
      %v4465 = vld [vmem:[%s4268 + $0xc] sm:$0xf]
      %v4466 = vld [vmem:[%s4268 + $0x10] sm:$0xf]
      %v4467 = vld [vmem:[%s4268 + $0x14] sm:$0x1]
      %v4468 = vld [vmem:[%s4268 + $0x18] sm:$0xf]
      %v4469 = vld [vmem:[%s4268 + $0x1c] sm:$0xf]
      %v4470 = vld [vmem:[%s4268 + $0x20] sm:$0x1]
      %v4471 = vld [vmem:[%s4268 + $0x24] sm:$0xf]
      %v4472 = vld [vmem:[%s4268 + $0x28] sm:$0xf]
      %v4473 = vld [vmem:[%s4268 + $0x2c] sm:$0x1]
      %v4474 = vld [vmem:[%s4268 + $0x30] sm:$0xf]
      %v4475 = vld [vmem:[%s4268 + $0x34] sm:$0xf]
      %v4476 = vld [vmem:[%s4268 + $0x38] sm:$0x1]
      %v4477 = vld [vmem:[%s4268 + $0x3c] sm:$0xf]
      %v4478 = vld [vmem:[%s4268 + $0x40] sm:$0xf]
      %v4479 = vld [vmem:[%s4268 + $0x44] sm:$0x1]
      %v4480 = vld [vmem:[%s4268 + $0x48] sm:$0xf]
      %v4481 = vld [vmem:[%s4268 + $0x4c] sm:$0xf]
      %v4482 = vld [vmem:[%s4268 + $0x50] sm:$0x1]
      %v4483 = vld [vmem:[%s4268 + $0x54] sm:$0xf]
      %v4484 = vld [vmem:[%s4268 + $0x58] sm:$0xf]
      %v4485 = vld [vmem:[%s4268 + $0x5c] sm:$0x1]
      %v4487 = vshrl.u32 %v4462, 16
      %v4489 = vrot.slane %v4487, 4
      %v4490 = vshll.u32 %v4462, 16
      %v4492 = vrot.slane %v4490, 5
      %v4493 = vor.u32 %v4489, %v4492
      %v4494 = vrot.slane %v4493, 4
      %v4496 = vshll.u32 %v4463, 16
      %v4498 = vrot.slane %v4496, 5
      %v4499 = vsel %vm195, %v4494, %v4498
      %v4500 = vshrl.u32 %v4463, 16
      %v4502 = vrot.slane %v4500, 4
      %v4503 = vor.u32 %v4502, %v4498
      %v4504 = vrot.slane %v4503, 4
      %v4506 = vshll.u32 %v4464, 16
      %v4508 = vrot.slane %v4506, 5
      %v4509 = vsel %vm195, %v4504, %v4508
      %v4511 = vshrl.u32 %v4465, 16
      %v4513 = vrot.slane %v4511, 4
      %v4514 = vshll.u32 %v4465, 16
      %v4516 = vrot.slane %v4514, 5
      %v4517 = vor.u32 %v4513, %v4516
      %v4518 = vrot.slane %v4517, 4
      %v4520 = vshll.u32 %v4466, 16
      %v4522 = vrot.slane %v4520, 5
      %v4523 = vsel %vm195, %v4518, %v4522
      %v4524 = vshrl.u32 %v4466, 16
      %v4526 = vrot.slane %v4524, 4
      %v4527 = vor.u32 %v4526, %v4522
      %v4528 = vrot.slane %v4527, 4
      %v4530 = vshll.u32 %v4467, 16
      %v4532 = vrot.slane %v4530, 5
      %v4533 = vsel %vm195, %v4528, %v4532
      %v4535 = vshrl.u32 %v4468, 16
      %v4537 = vrot.slane %v4535, 4
      %v4538 = vshll.u32 %v4468, 16
      %v4540 = vrot.slane %v4538, 5
      %v4541 = vor.u32 %v4537, %v4540
      %v4542 = vrot.slane %v4541, 4
      %v4544 = vshll.u32 %v4469, 16
      %v4546 = vrot.slane %v4544, 5
      %v4547 = vsel %vm195, %v4542, %v4546
      %v4548 = vshrl.u32 %v4469, 16
      %v4550 = vrot.slane %v4548, 4
      %v4551 = vor.u32 %v4550, %v4546
      %v4552 = vrot.slane %v4551, 4
      %v4554 = vshll.u32 %v4470, 16
      %v4556 = vrot.slane %v4554, 5
      %v4557 = vsel %vm195, %v4552, %v4556
      %v4559 = vshrl.u32 %v4471, 16
      %v4561 = vrot.slane %v4559, 4
      %v4562 = vshll.u32 %v4471, 16
      %v4564 = vrot.slane %v4562, 5
      %v4565 = vor.u32 %v4561, %v4564
      %v4566 = vrot.slane %v4565, 4
      %v4568 = vshll.u32 %v4472, 16
      %v4570 = vrot.slane %v4568, 5
      %v4571 = vsel %vm195, %v4566, %v4570
      %v4572 = vshrl.u32 %v4472, 16
      %v4574 = vrot.slane %v4572, 4
      %v4575 = vor.u32 %v4574, %v4570
      %v4576 = vrot.slane %v4575, 4
      %v4578 = vshll.u32 %v4473, 16
      %v4580 = vrot.slane %v4578, 5
      %v4581 = vsel %vm195, %v4576, %v4580
      %v4583 = vshrl.u32 %v4474, 16
      %v4585 = vrot.slane %v4583, 4
      %v4586 = vshll.u32 %v4474, 16
      %v4588 = vrot.slane %v4586, 5
      %v4589 = vor.u32 %v4585, %v4588
      %v4590 = vrot.slane %v4589, 4
      %v4592 = vshll.u32 %v4475, 16
      %v4594 = vrot.slane %v4592, 5
      %v4595 = vsel %vm195, %v4590, %v4594
      %v4596 = vshrl.u32 %v4475, 16
      %v4598 = vrot.slane %v4596, 4
      %v4599 = vor.u32 %v4598, %v4594
      %v4600 = vrot.slane %v4599, 4
      %v4602 = vshll.u32 %v4476, 16
      %v4604 = vrot.slane %v4602, 5
      %v4605 = vsel %vm195, %v4600, %v4604
      %v4607 = vshrl.u32 %v4477, 16
      %v4609 = vrot.slane %v4607, 4
      %v4610 = vshll.u32 %v4477, 16
      %v4612 = vrot.slane %v4610, 5
      %v4613 = vor.u32 %v4609, %v4612
      %v4614 = vrot.slane %v4613, 4
      %v4616 = vshll.u32 %v4478, 16
      %v4618 = vrot.slane %v4616, 5
      %v4619 = vsel %vm195, %v4614, %v4618
      %v4620 = vshrl.u32 %v4478, 16
      %v4622 = vrot.slane %v4620, 4
      %v4623 = vor.u32 %v4622, %v4618
      %v4624 = vrot.slane %v4623, 4
      %v4626 = vshll.u32 %v4479, 16
      %v4628 = vrot.slane %v4626, 5
      %v4629 = vsel %vm195, %v4624, %v4628
      %v4631 = vshrl.u32 %v4480, 16
      %v4633 = vrot.slane %v4631, 4
      %v4634 = vshll.u32 %v4480, 16
      %v4636 = vrot.slane %v4634, 5
      %v4637 = vor.u32 %v4633, %v4636
      %v4638 = vrot.slane %v4637, 4
      %v4640 = vshll.u32 %v4481, 16
      %v4642 = vrot.slane %v4640, 5
      %v4643 = vsel %vm195, %v4638, %v4642
      %v4644 = vshrl.u32 %v4481, 16
      %v4646 = vrot.slane %v4644, 4
      %v4647 = vor.u32 %v4646, %v4642
      %v4648 = vrot.slane %v4647, 4
      %v4650 = vshll.u32 %v4482, 16
      %v4652 = vrot.slane %v4650, 5
      %v4653 = vsel %vm195, %v4648, %v4652
      %v4655 = vshrl.u32 %v4483, 16
      %v4657 = vrot.slane %v4655, 4
      %v4658 = vshll.u32 %v4483, 16
      %v4660 = vrot.slane %v4658, 5
      %v4661 = vor.u32 %v4657, %v4660
      %v4662 = vrot.slane %v4661, 4
      %v4664 = vshll.u32 %v4484, 16
      %v4666 = vrot.slane %v4664, 5
      %v4667 = vsel %vm195, %v4662, %v4666
      %v4668 = vshrl.u32 %v4484, 16
      %v4670 = vrot.slane %v4668, 4
      %v4671 = vor.u32 %v4670, %v4666
      %v4672 = vrot.slane %v4671, 4
      %v4674 = vshll.u32 %v4485, 16
      %v4676 = vrot.slane %v4674, 5
      %v4677 = vsel %vm195, %v4672, %v4676
      %v4678 = vunpack.c.l.b16 %v4499
      %v4679 = vunpack.c.l.b16 %v4509
      %v4680 = vunpack.c.l.b16 %v4523
      %v4681 = vunpack.c.l.b16 %v4533
      %v4682 = vunpack.c.l.b16 %v4547
      %v4683 = vunpack.c.l.b16 %v4557
      %v4684 = vunpack.c.l.b16 %v4571
      %v4685 = vunpack.c.l.b16 %v4581
      %v4686 = vunpack.c.l.b16 %v4595
      %v4687 = vunpack.c.l.b16 %v4605
      %v4688 = vunpack.c.l.b16 %v4619
      %v4689 = vunpack.c.l.b16 %v4629
      %v4690 = vunpack.c.l.b16 %v4643
      %v4691 = vunpack.c.l.b16 %v4653
      %v4692 = vunpack.c.l.b16 %v4667
      %v4693 = vunpack.c.l.b16 %v4677
      %v4694 = vpack.c.b16 %v4679, %v4678
      %v4695 = vpack.c.b16 %v4681, %v4680
      %v4696 = vpack.c.b16 %v4683, %v4682
      %v4697 = vpack.c.b16 %v4685, %v4684
      %v4698 = vpack.c.b16 %v4687, %v4686
      %v4699 = vpack.c.b16 %v4689, %v4688
      %v4700 = vpack.c.b16 %v4691, %v4690
      %v4701 = vpack.c.b16 %v4693, %v4692
      %v4703 = vsel %vm414, %v4694, 0
      %v4706 = vsel %vm414, %v4695, 0
      %v4709 = vsel %vm414, %v4696, 0
      %v4712 = vsel %vm414, %v4697, 0
      %v4715 = vsel %vm414, %v4698, 0
      %v4718 = vsel %vm414, %v4699, 0
      %v4721 = vsel %vm414, %v4700, 0
      %v4724 = vsel %vm414, %v4701, 0
      %4726 = vmatprep.subr.bf16.mxu0 0
      %4727 = vmatpush1.bf16.msra.mxu0 0
      %4728 = vmatprep.subr.bf16.mxu0 0
      %4729 = vmatpush1.bf16.msra.mxu0 0
      %4730 = vmatprep.subr.bf16.mxu0 0
      %4731 = vmatpush1.bf16.msra.mxu0 0
      %4732 = vmatprep.subr.bf16.mxu0 0
      %4733 = vmatpush1.bf16.msra.mxu0 0
      %4734 = vmatprep.subr.bf16.mxu0 0
      %4735 = vmatpush1.bf16.msra.mxu0 0
      %4736 = vmatprep.subr.bf16.mxu0 0
      %4737 = vmatpush1.bf16.msra.mxu0 0
      %4738 = vmatprep.subr.bf16.mxu0 0
      %4739 = vmatpush1.bf16.msra.mxu0 0
      %4740 = vmatprep.subr.bf16.mxu0 0
      %4741 = vmatpush1.bf16.msra.mxu0 %v2254
      %4742 = vmatprep.subr.bf16.mxu0 0
      %4743 = vmatpush2.bf16.msra.mxu0 0
      %4744 = vmatprep.subr.bf16.mxu0 0
      %4745 = vmatpush2.bf16.msra.mxu0 0
      %4746 = vmatprep.subr.bf16.mxu0 0
      %4747 = vmatpush2.bf16.msra.mxu0 0
      %4748 = vmatprep.subr.bf16.mxu0 0
      %4749 = vmatpush2.bf16.msra.mxu0 0
      %4750 = vmatprep.subr.bf16.mxu0 0
      %4751 = vmatpush2.bf16.msra.mxu0 0
      %4752 = vmatprep.subr.bf16.mxu0 0
      %4753 = vmatpush2.bf16.msra.mxu0 0
      %4754 = vmatprep.subr.bf16.mxu0 0
      %4755 = vmatpush2.bf16.msra.mxu0 0
      %4756 = vmatprep.subr.bf16.mxu0 0
      %4757 = vmatpush2.bf16.msra.mxu0 0
      %4758 = vmatprep.mubr.bf16.mxu0 0
      %4759 = vmatmul.mubr.bf16.gmra.mxu0 %v4703
      %v4760 = vpop.f32.mrf.mxu0
      %v4761 = vadd.f32 0.0, %v4760
      %v4762 = vpop.f32.mrf.mxu0
      %v4763 = vpop.f32.mrf.mxu0
      %v4764 = vadd.f32 0.0, %v4763
      %v4765 = vpop.f32.mrf.mxu0
      %4766 = vmatprep.mubr.bf16.mxu0 0
      %4767 = vmatmul.mubr.bf16.gmra.mxu0 %v4706
      %v4768 = vpop.f32.mrf.mxu0
      %v4769 = vadd.f32 0.0, %v4768
      %v4770 = vpop.f32.mrf.mxu0
      %v4771 = vpop.f32.mrf.mxu0
      %v4772 = vadd.f32 0.0, %v4771
      %v4773 = vpop.f32.mrf.mxu0
      %4774 = vmatprep.mubr.bf16.mxu0 0
      %4775 = vmatmul.mubr.bf16.gmra.mxu0 %v4709
      %v4776 = vpop.f32.mrf.mxu0
      %v4777 = vadd.f32 0.0, %v4776
      %v4778 = vpop.f32.mrf.mxu0
      %v4779 = vpop.f32.mrf.mxu0
      %v4780 = vadd.f32 0.0, %v4779
      %v4781 = vpop.f32.mrf.mxu0
      %4782 = vmatprep.mubr.bf16.mxu0 0
      %4783 = vmatmul.mubr.bf16.gmra.mxu0 %v4712
      %v4784 = vpop.f32.mrf.mxu0
      %v4785 = vadd.f32 0.0, %v4784
      %v4786 = vpop.f32.mrf.mxu0
      %v4787 = vpop.f32.mrf.mxu0
      %v4788 = vadd.f32 0.0, %v4787
      %v4789 = vpop.f32.mrf.mxu0
      %4790 = vmatprep.mubr.bf16.mxu0 0
      %4791 = vmatmul.mubr.bf16.gmra.mxu0 %v4715
      %v4792 = vpop.f32.mrf.mxu0
      %v4793 = vadd.f32 0.0, %v4792
      %v4794 = vpop.f32.mrf.mxu0
      %v4795 = vpop.f32.mrf.mxu0
      %v4796 = vadd.f32 0.0, %v4795
      %v4797 = vpop.f32.mrf.mxu0
      %4798 = vmatprep.mubr.bf16.mxu0 0
      %4799 = vmatmul.mubr.bf16.gmra.mxu0 %v4718
      %v4800 = vpop.f32.mrf.mxu0
      %v4801 = vadd.f32 0.0, %v4800
      %v4802 = vpop.f32.mrf.mxu0
      %v4803 = vpop.f32.mrf.mxu0
      %v4804 = vadd.f32 0.0, %v4803
      %v4805 = vpop.f32.mrf.mxu0
      %4806 = vmatprep.mubr.bf16.mxu0 0
      %4807 = vmatmul.mubr.bf16.gmra.mxu0 %v4721
      %v4808 = vpop.f32.mrf.mxu0
      %v4809 = vadd.f32 0.0, %v4808
      %v4810 = vpop.f32.mrf.mxu0
      %v4811 = vpop.f32.mrf.mxu0
      %v4812 = vadd.f32 0.0, %v4811
      %v4813 = vpop.f32.mrf.mxu0
      %4814 = vmatprep.mubr.bf16.mxu0 0
      %4815 = vmatmul.mubr.bf16.gmra.mxu0 %v4724
      %v4816 = vpop.f32.mrf.mxu0
      %v4817 = vadd.f32 0.0, %v4816
      %v4818 = vpop.f32.mrf.mxu0
      %v4819 = vpop.f32.mrf.mxu0
      %v4820 = vadd.f32 0.0, %v4819
      %v4821 = vpop.f32.mrf.mxu0
      %4822 = vdwg.mxu0
      %v4823 = vadd.f32 %v4446, %v4761
      %v4824 = vadd.f32 %v4447, %v4764
      %v4825 = vadd.f32 %v4448, %v4769
      %v4826 = vadd.f32 %v4449, %v4772
      %v4827 = vadd.f32 %v4450, %v4777
      %v4828 = vadd.f32 %v4451, %v4780
      %v4829 = vadd.f32 %v4452, %v4785
      %v4830 = vadd.f32 %v4453, %v4788
      %v4831 = vadd.f32 %v4454, %v4793
      %v4832 = vadd.f32 %v4455, %v4796
      %v4833 = vadd.f32 %v4456, %v4801
      %v4834 = vadd.f32 %v4457, %v4804
      %v4835 = vadd.f32 %v4458, %v4809
      %v4836 = vadd.f32 %v4459, %v4812
      %v4837 = vadd.f32 %v4460, %v4817
      %v4838 = vadd.f32 %v4461, %v4820
      %v4839 = vld [vmem:[%s4268] sm:$0xe]
      %v4840 = vld [vmem:[%s4268 + $0xc] sm:$0xe]
      %v4841 = vld [vmem:[%s4268 + $0x18] sm:$0xe]
      %v4842 = vld [vmem:[%s4268 + $0x24] sm:$0xe]
      %v4843 = vld [vmem:[%s4268 + $0x30] sm:$0xe]
      %v4844 = vld [vmem:[%s4268 + $0x3c] sm:$0xe]
      %v4845 = vld [vmem:[%s4268 + $0x48] sm:$0xe]
      %v4846 = vld [vmem:[%s4268 + $0x54] sm:$0xe]
      %v4871 = vrot.slane %v4839, 5
      %v4872 = vrot.slane %v4871, 4
      %v4873 = vrot.slane %v4463, 5
      %v4874 = vsel %vm730, %v4872, %v4873
      %v4875 = vrot.slane %v4873, 4
      %v4876 = vrot.slane %v4464, 5
      %v4877 = vsel %vm730, %v4875, %v4876
      %v4878 = vrot.slane %v4840, 5
      %v4879 = vrot.slane %v4878, 4
      %v4880 = vrot.slane %v4466, 5
      %v4881 = vsel %vm730, %v4879, %v4880
      %v4882 = vrot.slane %v4880, 4
      %v4883 = vrot.slane %v4467, 5
      %v4884 = vsel %vm730, %v4882, %v4883
      %v4885 = vrot.slane %v4841, 5
      %v4886 = vrot.slane %v4885, 4
      %v4887 = vrot.slane %v4469, 5
      %v4888 = vsel %vm730, %v4886, %v4887
      %v4889 = vrot.slane %v4887, 4
      %v4890 = vrot.slane %v4470, 5
      %v4891 = vsel %vm730, %v4889, %v4890
      %v4892 = vrot.slane %v4842, 5
      %v4893 = vrot.slane %v4892, 4
      %v4894 = vrot.slane %v4472, 5
      %v4895 = vsel %vm730, %v4893, %v4894
      %v4896 = vrot.slane %v4894, 4
      %v4897 = vrot.slane %v4473, 5
      %v4898 = vsel %vm730, %v4896, %v4897
      %v4899 = vrot.slane %v4843, 5
      %v4900 = vrot.slane %v4899, 4
      %v4901 = vrot.slane %v4475, 5
      %v4902 = vsel %vm730, %v4900, %v4901
      %v4903 = vrot.slane %v4901, 4
      %v4904 = vrot.slane %v4476, 5
      %v4905 = vsel %vm730, %v4903, %v4904
      %v4906 = vrot.slane %v4844, 5
      %v4907 = vrot.slane %v4906, 4
      %v4908 = vrot.slane %v4478, 5
      %v4909 = vsel %vm730, %v4907, %v4908
      %v4910 = vrot.slane %v4908, 4
      %v4911 = vrot.slane %v4479, 5
      %v4912 = vsel %vm730, %v4910, %v4911
      %v4913 = vrot.slane %v4845, 5
      %v4914 = vrot.slane %v4913, 4
      %v4915 = vrot.slane %v4481, 5
      %v4916 = vsel %vm730, %v4914, %v4915
      %v4917 = vrot.slane %v4915, 4
      %v4918 = vrot.slane %v4482, 5
      %v4919 = vsel %vm730, %v4917, %v4918
      %v4920 = vrot.slane %v4846, 5
      %v4921 = vrot.slane %v4920, 4
      %v4922 = vrot.slane %v4484, 5
      %v4923 = vsel %vm730, %v4921, %v4922
      %v4924 = vrot.slane %v4922, 4
      %v4925 = vrot.slane %v4485, 5
      %v4926 = vsel %vm730, %v4924, %v4925
      %v4927 = vunpack.c.l.b16 %v4874
      %v4928 = vunpack.c.l.b16 %v4877
      %v4929 = vunpack.c.l.b16 %v4881
      %v4930 = vunpack.c.l.b16 %v4884
      %v4931 = vunpack.c.l.b16 %v4888
      %v4932 = vunpack.c.l.b16 %v4891
      %v4933 = vunpack.c.l.b16 %v4895
      %v4934 = vunpack.c.l.b16 %v4898
      %v4935 = vunpack.c.l.b16 %v4902
      %v4936 = vunpack.c.l.b16 %v4905
      %v4937 = vunpack.c.l.b16 %v4909
      %v4938 = vunpack.c.l.b16 %v4912
      %v4939 = vunpack.c.l.b16 %v4916
      %v4940 = vunpack.c.l.b16 %v4919
      %v4941 = vunpack.c.l.b16 %v4923
      %v4942 = vunpack.c.l.b16 %v4926
      %v4943 = vpack.c.b16 %v4928, %v4927
      %v4944 = vpack.c.b16 %v4930, %v4929
      %v4945 = vpack.c.b16 %v4932, %v4931
      %v4946 = vpack.c.b16 %v4934, %v4933
      %v4947 = vpack.c.b16 %v4936, %v4935
      %v4948 = vpack.c.b16 %v4938, %v4937
      %v4949 = vpack.c.b16 %v4940, %v4939
      %v4950 = vpack.c.b16 %v4942, %v4941
      %v4952 = vsel %vm414, %v4943, 0
      %v4955 = vsel %vm414, %v4944, 0
      %v4958 = vsel %vm414, %v4945, 0
      %v4961 = vsel %vm414, %v4946, 0
      %v4964 = vsel %vm414, %v4947, 0
      %v4967 = vsel %vm414, %v4948, 0
      %v4970 = vsel %vm414, %v4949, 0
      %v4973 = vsel %vm414, %v4950, 0
      %4975 = vmatprep.subr.bf16.mxu0 0
      %4976 = vmatpush1.bf16.msra.mxu0 0
      %4977 = vmatprep.subr.bf16.mxu0 0
      %4978 = vmatpush1.bf16.msra.mxu0 0
      %4979 = vmatprep.subr.bf16.mxu0 0
      %4980 = vmatpush1.bf16.msra.mxu0 0
      %4981 = vmatprep.subr.bf16.mxu0 0
      %4982 = vmatpush1.bf16.msra.mxu0 0
      %4983 = vmatprep.subr.bf16.mxu0 0
      %4984 = vmatpush1.bf16.msra.mxu0 0
      %4985 = vmatprep.subr.bf16.mxu0 0
      %4986 = vmatpush1.bf16.msra.mxu0 0
      %4987 = vmatprep.subr.bf16.mxu0 0
      %4988 = vmatpush1.bf16.msra.mxu0 0
      %4989 = vmatprep.subr.bf16.mxu0 0
      %4990 = vmatpush1.bf16.msra.mxu0 %v2508
      %4991 = vmatprep.subr.bf16.mxu0 0
      %4992 = vmatpush2.bf16.msra.mxu0 0
      %4993 = vmatprep.subr.bf16.mxu0 0
      %4994 = vmatpush2.bf16.msra.mxu0 0
      %4995 = vmatprep.subr.bf16.mxu0 0
      %4996 = vmatpush2.bf16.msra.mxu0 0
      %4997 = vmatprep.subr.bf16.mxu0 0
      %4998 = vmatpush2.bf16.msra.mxu0 0
      %4999 = vmatprep.subr.bf16.mxu0 0
      %5000 = vmatpush2.bf16.msra.mxu0 0
      %5001 = vmatprep.subr.bf16.mxu0 0
      %5002 = vmatpush2.bf16.msra.mxu0 0
      %5003 = vmatprep.subr.bf16.mxu0 0
      %5004 = vmatpush2.bf16.msra.mxu0 0
      %5005 = vmatprep.subr.bf16.mxu0 0
      %5006 = vmatpush2.bf16.msra.mxu0 0
      %5007 = vmatprep.mubr.bf16.mxu0 0
      %5008 = vmatmul.mubr.bf16.gmra.mxu0 %v4952
      %v5009 = vpop.f32.mrf.mxu0
      %v5010 = vadd.f32 0.0, %v5009
      %v5011 = vpop.f32.mrf.mxu0
      %v5012 = vpop.f32.mrf.mxu0
      %v5013 = vadd.f32 0.0, %v5012
      %v5014 = vpop.f32.mrf.mxu0
      %5015 = vmatprep.mubr.bf16.mxu0 0
      %5016 = vmatmul.mubr.bf16.gmra.mxu0 %v4955
      %v5017 = vpop.f32.mrf.mxu0
      %v5018 = vadd.f32 0.0, %v5017
      %v5019 = vpop.f32.mrf.mxu0
      %v5020 = vpop.f32.mrf.mxu0
      %v5021 = vadd.f32 0.0, %v5020
      %v5022 = vpop.f32.mrf.mxu0
      %5023 = vmatprep.mubr.bf16.mxu0 0
      %5024 = vmatmul.mubr.bf16.gmra.mxu0 %v4958
      %v5025 = vpop.f32.mrf.mxu0
      %v5026 = vadd.f32 0.0, %v5025
      %v5027 = vpop.f32.mrf.mxu0
      %v5028 = vpop.f32.mrf.mxu0
      %v5029 = vadd.f32 0.0, %v5028
      %v5030 = vpop.f32.mrf.mxu0
      %5031 = vmatprep.mubr.bf16.mxu0 0
      %5032 = vmatmul.mubr.bf16.gmra.mxu0 %v4961
      %v5033 = vpop.f32.mrf.mxu0
      %v5034 = vadd.f32 0.0, %v5033
      %v5035 = vpop.f32.mrf.mxu0
      %v5036 = vpop.f32.mrf.mxu0
      %v5037 = vadd.f32 0.0, %v5036
      %v5038 = vpop.f32.mrf.mxu0
      %5039 = vmatprep.mubr.bf16.mxu0 0
      %5040 = vmatmul.mubr.bf16.gmra.mxu0 %v4964
      %v5041 = vpop.f32.mrf.mxu0
      %v5042 = vadd.f32 0.0, %v5041
      %v5043 = vpop.f32.mrf.mxu0
      %v5044 = vpop.f32.mrf.mxu0
      %v5045 = vadd.f32 0.0, %v5044
      %v5046 = vpop.f32.mrf.mxu0
      %5047 = vmatprep.mubr.bf16.mxu0 0
      %5048 = vmatmul.mubr.bf16.gmra.mxu0 %v4967
      %v5049 = vpop.f32.mrf.mxu0
      %v5050 = vadd.f32 0.0, %v5049
      %v5051 = vpop.f32.mrf.mxu0
      %v5052 = vpop.f32.mrf.mxu0
      %v5053 = vadd.f32 0.0, %v5052
      %v5054 = vpop.f32.mrf.mxu0
      %5055 = vmatprep.mubr.bf16.mxu0 0
      %5056 = vmatmul.mubr.bf16.gmra.mxu0 %v4970
      %v5057 = vpop.f32.mrf.mxu0
      %v5058 = vadd.f32 0.0, %v5057
      %v5059 = vpop.f32.mrf.mxu0
      %v5060 = vpop.f32.mrf.mxu0
      %v5061 = vadd.f32 0.0, %v5060
      %v5062 = vpop.f32.mrf.mxu0
      %5063 = vmatprep.mubr.bf16.mxu0 0
      %5064 = vmatmul.mubr.bf16.gmra.mxu0 %v4973
      %v5065 = vpop.f32.mrf.mxu0
      %v5066 = vadd.f32 0.0, %v5065
      %v5067 = vpop.f32.mrf.mxu0
      %v5068 = vpop.f32.mrf.mxu0
      %v5069 = vadd.f32 0.0, %v5068
      %v5070 = vpop.f32.mrf.mxu0
      %5071 = vdwg.mxu0
      %v5072 = vadd.f32 %v4823, %v5010
      %v5073 = vadd.f32 %v4824, %v5013
      %v5074 = vadd.f32 %v4825, %v5018
      %v5075 = vadd.f32 %v4826, %v5021
      %v5076 = vadd.f32 %v4827, %v5026
      %v5077 = vadd.f32 %v4828, %v5029
      %v5078 = vadd.f32 %v4829, %v5034
      %v5079 = vadd.f32 %v4830, %v5037
      %v5080 = vadd.f32 %v4831, %v5042
      %v5081 = vadd.f32 %v4832, %v5045
      %v5082 = vadd.f32 %v4833, %v5050
      %v5083 = vadd.f32 %v4834, %v5053
      %v5084 = vadd.f32 %v4835, %v5058
      %v5085 = vadd.f32 %v4836, %v5061
      %v5086 = vadd.f32 %v4837, %v5066
      %v5087 = vadd.f32 %v4838, %v5069
      %v5088 = vadd.f32 %v5072, %v2628
      %v5089 = vadd.f32 %v5073, %v2628
      %v5090 = vadd.f32 %v5074, %v2628
      %v5091 = vadd.f32 %v5075, %v2628
      %v5092 = vadd.f32 %v5076, %v2628
      %v5093 = vadd.f32 %v5077, %v2628
      %v5094 = vadd.f32 %v5078, %v2628
      %v5095 = vadd.f32 %v5079, %v2628
      %v5096 = vadd.f32 %v5080, %v2628
      %v5097 = vadd.f32 %v5081, %v2628
      %v5098 = vadd.f32 %v5082, %v2628
      %v5099 = vadd.f32 %v5083, %v2628
      %v5100 = vadd.f32 %v5084, %v2628
      %v5101 = vadd.f32 %v5085, %v2628
      %v5102 = vadd.f32 %v5086, %v2628
      %v5103 = vadd.f32 %v5087, %v2628
      %v5104 = vmax.f32 %v5088, 0.0
      %v5105 = vmax.f32 %v5089, 0.0
      %v5106 = vmax.f32 %v5090, 0.0
      %v5107 = vmax.f32 %v5091, 0.0
      %v5108 = vmax.f32 %v5092, 0.0
      %v5109 = vmax.f32 %v5093, 0.0
      %v5110 = vmax.f32 %v5094, 0.0
      %v5111 = vmax.f32 %v5095, 0.0
      %v5112 = vmax.f32 %v5096, 0.0
      %v5113 = vmax.f32 %v5097, 0.0
      %v5114 = vmax.f32 %v5098, 0.0
      %v5115 = vmax.f32 %v5099, 0.0
      %v5116 = vmax.f32 %v5100, 0.0
      %v5117 = vmax.f32 %v5101, 0.0
      %v5118 = vmax.f32 %v5102, 0.0
      %v5119 = vmax.f32 %v5103, 0.0
      %v5120 = vadd.f32 %v5104, %v5105
      %v5121 = vadd.f32 %v5120, %v5106
      %v5122 = vadd.f32 %v5121, %v5107
      %v5123 = vadd.f32 %v5122, %v5108
      %v5124 = vadd.f32 %v5123, %v5109
      %v5125 = vadd.f32 %v5124, %v5110
      %v5126 = vadd.f32 %v5125, %v5111
      %v5127 = vadd.f32 %v5126, %v5112
      %v5128 = vadd.f32 %v5127, %v5113
      %v5129 = vadd.f32 %v5128, %v5114
      %v5130 = vadd.f32 %v5129, %v5115
      %v5131 = vadd.f32 %v5130, %v5116
      %v5132 = vadd.f32 %v5131, %v5117
      %v5133 = vadd.f32 %v5132, %v5118
      %v5134 = vadd.f32 %v5133, %v5119
      %v5135 = vrot.slane %v5134, 4
      %v5136 = vadd.f32 %v5134, %v5135
      %v5137 = vrot.slane %v5136, 2
      %v5138 = vadd.f32 %v5136, %v5137
      %v5139 = vrot.slane %v5138, 1
      %v5140 = vadd.f32 %v5138, %v5139
      %v5141 = vadd.f32 %v2683, %v5140
      %v5142 = vmul.f32 %v5141, 0.00390625
      %5143 = vst [vmem:[%s166] sm:$0x1] %v5142
      %p5144 = scmp.lt.s32.totalorder %s14, 1
      %s5145 = scalar_select %p5144, %s14, 1
      %s5146 = scalar_lea.vmem %s3, %s5145
      // Predicated region
      $region33: #{cnn_forward.2} parent=31 // pred_check
        %p5147 = pneg %p100
      $region34: #{cnn_forward.2} parent=31 // pred_check_branch
        %5149 = sbr.rel (%p5147) target = $region36
      $region35: #{cnn_forward.2} parent=31 // pred_region
        _
      $region36: #{cnn_forward.2} parent=31 // pred_fallthru
        _
    $region32: #{cnn_forward.2} parent=5 // pred_fallthru
      _
    %p5150 = scmp.le.s32.totalorder 2, %s9
    // Predicated region
    $region37: #{cnn_forward.2} parent=5 // pred_check
      %p5151 = pneg %p5150
    $region38: #{cnn_forward.2} parent=5 // pred_check_branch
      %5153 = sbr.rel (%p5151) target = $region40
    $region39: #{cnn_forward.2} parent=5 // pred_region
      %s5154 = ssub.s32 %s9, 2
      // Predicated region
      $region41: #{cnn_forward.2} parent=39 // pred_check
        %p5155 = pneg %p106
      $region42: #{cnn_forward.2} parent=39 // pred_check_branch
        %5157 = sbr.rel (%p5155) target = $region44
      $region43: #{cnn_forward.2} parent=39 // pred_region
        %p5158 = scmp.lt.s32.totalorder %s15, 1
        %s5159 = scalar_select %p5158, %s15, 1
        %s5160 = scalar_lea.vmem %s3, %s5159
      $region44: #{cnn_forward.2} parent=39 // pred_fallthru
        _
    $region40: #{cnn_forward.2} parent=5 // pred_fallthru
      _
  $region6: #{cnn_forward.2} parent=0 // loop_footer
    %s13 = sadd.s32 1, %s9
  $region7: #{cnn_forward.2} parent=0 // loop_footer_branch
    %8 = sbr.rel target = $region3
  $region8: #{cnn_forward.2} parent=0 // loop_exit
    _

</llo_original>
